<compile_context>
chip_gen: v7x
topology: tpu7x:2x2x1
jax: 0.10.0
libtpu: 0.0.40
codegen_flags: <defaults>
</compile_context>

<pallas_src>
import numpy as np
import jax
import jax.numpy as jnp
from jax.experimental import pallas as pl
from jax.experimental.pallas import tpu as pltpu

K = 3          # conv kernel size (spec: kernel_size=3)
S = 2          # conv stride      (spec: stride=2, padding=0)
EPS = 1e-5     # BatchNorm eps (PyTorch default)
OUT_P = 128    # lane-padded output width (single unmasked store)


def _conv_out(size):
    return (size - K) // S + 1


# ----------------------------------------------------------------------------
# Host / wrapper-side (trace-time) helpers.
# ----------------------------------------------------------------------------
def _im2col_conv1(x):
    """x [n, cin, ih, iw] -> patches [n*oh*ow, K*K*cin], feature order (kh, kw, ci).
    Runtime data, done in the XLA wrapper (cheap, tiny); avoids any in-kernel gather
    and the old 1.8 MiB one-hot constant."""
    n, cin, ih, iw = x.shape
    oh, ow = _conv_out(ih), _conv_out(iw)
    cols = []
    for kh in range(K):
        for kw in range(K):
            sl = x[:, :, kh:kh + S * (oh - 1) + 1:S, kw:kw + S * (ow - 1) + 1:S]
            cols.append(jnp.transpose(sl, (0, 2, 3, 1)))          # [n, oh, ow, cin]
    pat = jnp.stack(cols, axis=3)                                  # [n, oh, ow, 9, cin]
    return pat.reshape(n * oh * ow, K * K * cin)


def _gather_cat(n, ih, iw):
    """bf16 [K*K*Mout, n*ih*iw] concatenated one-hot gather (exact in bf16).
    Row t*Mout + (b*oh+oy)*ow+ox selects input row (b*ih + S*oy+kh)*iw + S*ox+kw."""
    oh, ow = _conv_out(ih), _conv_out(iw)
    m = n * oh * ow
    g = np.zeros((K * K * m, n * ih * iw), np.float32)
    for kh in range(K):
        for kw in range(K):
            t = kh * K + kw
            for b in range(n):
                for oy in range(oh):
                    for ox in range(ow):
                        r_out = t * m + (b * oh + oy) * ow + ox
                        r_in = (b * ih + (S * oy + kh)) * iw + (S * ox + kw)
                        g[r_out, r_in] = 1.0
    return jnp.asarray(g, dtype=jnp.bfloat16)


def _im2col_weight(w):
    """Torch conv weight [Cout, Cin, K, K] -> [K*K*Cin, Cout], row order (kh, kw, ci)."""
    cout = w.shape[0]
    return jnp.transpose(w, (2, 3, 1, 0)).reshape(K * K * w.shape[1], cout)


# ----------------------------------------------------------------------------
# Fused kernel: conv1/2/3 + training-mode BN + ReLU + fc1/fc2/fc3, all in VMEM.
# ----------------------------------------------------------------------------
def _critic_kernel(px_ref, a_ref, w1_ref, g2_ref, w2_ref, g3_ref, w3_ref,
                   bn_ref, w1x_ref, w1a_ref, fw2_ref, fw3_ref, fb_ref, out_ref):
    f32 = jnp.float32
    bn = bn_ref[...]          # [6, C]   rows 0..2 = gamma1..3, rows 3..5 = beta1..3
    fb = fb_ref[...]          # [3, 256] fc1_b, fc2_b, fc3_b (padded)

    def bn_relu(y, layer):
        # training-mode BatchNorm over the full batch, biased variance, one pass.
        inv_m = 1.0 / y.shape[0]
        mean = jnp.sum(y, axis=0, keepdims=True) * inv_m
        var = jnp.sum(y * y, axis=0, keepdims=True) * inv_m - mean * mean
        scale = bn[layer:layer + 1, :] * jax.lax.rsqrt(var + EPS)      # EUP rsqrt
        shift = bn[layer + 3:layer + 4, :] - mean * scale
        return jnp.maximum(y * scale + shift, 0.0)                     # fused FMA+ReLU

    def conv_taps(h, g_ref, w_ref):
        # one concatenated one-hot gather matmul, then 9 per-tap weight matmuls
        w = w_ref[...]                                                 # [K*K*Cin, Cout]
        cin = w.shape[0] // (K * K)
        m = g_ref.shape[0] // (K * K)
        p = jnp.dot(g_ref[...], h, preferred_element_type=f32)        # [K*K*m, Cin]
        acc = None
        for t in range(K * K):
            term = jnp.dot(p[t * m:(t + 1) * m, :],
                           w[t * cin:(t + 1) * cin, :],
                           preferred_element_type=f32)                 # [m, Cout]
            acc = term if acc is None else acc + term
        return acc

    # conv1: wrapper-side im2col -> a single matmul (no conv bias: cancelled by BN)
    h = bn_relu(jnp.dot(px_ref[...], w1_ref[...], preferred_element_type=f32), 0)
    h = bn_relu(conv_taps(h, g2_ref, w2_ref), 1)
    h = bn_relu(conv_taps(h, g3_ref, w3_ref), 2)                       # [N, C] (1x1 spatial)

    # fc1(cat(conv_feat, action)) split into two matmuls (avoids in-kernel concat)
    z = (jnp.dot(h, w1x_ref[...], preferred_element_type=f32)
         + jnp.dot(a_ref[...], w1a_ref[...], preferred_element_type=f32)
         + fb[0:1, :])
    z = jnp.maximum(z, 0.0)
    z = jnp.maximum(
        jnp.dot(z, fw2_ref[...], preferred_element_type=f32) + fb[1:2, :], 0.0)
    # fc3: output padded to 128 lanes -> one unmasked store; wrapper slices it back
    width = out_ref.shape[1]
    out_ref[...] = (jnp.dot(z, fw3_ref[...], preferred_element_type=f32)
                    + fb[2:3, :width])


# ----------------------------------------------------------------------------
# Wrapper: cheap layout plumbing + one pallas_call.
# ----------------------------------------------------------------------------
def critic_cnn_forward(params, x, a):
    f32, bf16 = jnp.float32, jnp.bfloat16
    x = x.astype(f32)
    a = a.astype(f32)
    n, cin, h, w = x.shape
    na = a.shape[1]
    assert na <= OUT_P

    h1, w1 = _conv_out(h), _conv_out(w)
    h2, w2 = _conv_out(h1), _conv_out(w1)
    h3, w3 = _conv_out(h2), _conv_out(w2)
    # TODO(synk): general (h3*w3 > 1) flatten ordering not implemented; the module's
    # h = w = 16 config yields a 1x1 final feature map.
    assert h3 == 1 and w3 == 1, "fc1 split assumes a 1x1 final conv feature map"

    # runtime input: im2col for conv1 (tiny), unpadded
    patches = _im2col_conv1(x)                                   # [n*h1*w1, K*K*cin]

    # conv weights (f32, unpadded, im2col row order), bias intentionally dropped
    w1f = _im2col_weight(params["conv1_w"])                      # [K*K*cin, 16]
    w2f = _im2col_weight(params["conv2_w"])                      # [K*K*16, 16]
    w3f = _im2col_weight(params["conv3_w"])                      # [K*K*16, 16]

    # concatenated one-hot gathers for conv2/conv3 (bf16, exact)
    g2 = _gather_cat(n, h1, w1)                                  # [9*n*h2*w2, n*h1*w1]
    g3 = _gather_cat(n, h2, w2)                                  # [9*n,       n*h2*w2]

    # packed BN params: rows 0..2 gamma, 3..5 beta
    bn = jnp.stack([params["bn1_gamma"], params["bn2_gamma"], params["bn3_gamma"],
                    params["bn1_beta"], params["bn2_beta"], params["bn3_beta"]],
                   axis=0).astype(f32)                           # [6, 16]

    feat = params["conv3_w"].shape[0]                            # 16 conv features
    fc1_w = params["fc1_w"]                                      # [256, feat + na]
    w1x = fc1_w[:, :feat].T.astype(bf16)                         # [feat, 256]
    w1a = fc1_w[:, feat:].T.astype(bf16)                         # [na,   256]
    fw2 = params["fc2_w"].T.astype(bf16)                         # [256, 256]
    fw3 = jnp.pad(params["fc3_w"].T, ((0, 0), (0, OUT_P - na))).astype(bf16)  # [256,128]
    fb = jnp.stack([params["fc1_b"], params["fc2_b"],
                    jnp.pad(params["fc3_b"], (0, 256 - na))], axis=0).astype(f32)  # [3,256]

    vmem = pl.BlockSpec(memory_space=pltpu.MemorySpace.VMEM)
    out = pl.pallas_call(
        _critic_kernel,
        out_shape=jax.ShapeDtypeStruct((n, OUT_P), f32),
        in_specs=[vmem] * 13,
        out_specs=vmem,
        compiler_params=pltpu.CompilerParams(vmem_limit_bytes=8 * 1024 * 1024),
    )(patches, a, w1f, g2, w2f, g3, w3f, bn, w1x, w1a, fw2, fw3, fb)
    return out[:, :na]


# ----------------------------------------------------------------------------
# Pure-JAX reference (mirrors the PyTorch forward: conv bias + training-mode BN).
# ----------------------------------------------------------------------------
def reference_forward(params, x, a):
    def conv_bn_relu(y, wk, bk, gk, betak):
        y = jax.lax.conv_general_dilated(
            y, params[wk], window_strides=(S, S), padding="VALID",
            dimension_numbers=("NCHW", "OIHW", "NCHW"))
        y = y + params[bk][None, :, None, None]
        mean = jnp.mean(y, axis=(0, 2, 3), keepdims=True)
        var = jnp.mean(jnp.square(y - mean), axis=(0, 2, 3), keepdims=True)
        y = (y - mean) * jax.lax.rsqrt(var + EPS)
        y = y * params[gk][None, :, None, None] + params[betak][None, :, None, None]
        return jnp.maximum(y, 0.0)

    y = conv_bn_relu(x, "conv1_w", "conv1_b", "bn1_gamma", "bn1_beta")
    y = conv_bn_relu(y, "conv2_w", "conv2_b", "bn2_gamma", "bn2_beta")
    y = conv_bn_relu(y, "conv3_w", "conv3_b", "bn3_gamma", "bn3_beta")
    z = jnp.concatenate([y.reshape(y.shape[0], -1), a], axis=1)
    z = jnp.maximum(z @ params["fc1_w"].T + params["fc1_b"], 0.0)
    z = jnp.maximum(z @ params["fc2_w"].T + params["fc2_b"], 0.0)
    return z @ params["fc3_w"].T + params["fc3_b"]


def init_params(key, cin, num_actions):
    ks = jax.random.split(key, 16)

    def u(k, shape, fan_in):
        return (jax.random.uniform(k, shape, jnp.float32, -1.0, 1.0)
                / np.sqrt(float(fan_in)))

    p = {
        "conv1_w": u(ks[0], (16, cin, K, K), cin * K * K),
        "conv1_b": u(ks[1], (16,), cin * K * K),
        "conv2_w": u(ks[2], (16, 16, K, K), 16 * K * K),
        "conv2_b": u(ks[3], (16,), 16 * K * K),
        "conv3_w": u(ks[4], (16, 16, K, K), 16 * K * K),
        "conv3_b": u(ks[5], (16,), 16 * K * K),
        "fc1_w": u(ks[6], (256, 16 + num_actions), 16 + num_actions),
        "fc1_b": jnp.zeros((256,), jnp.float32),
        "fc2_w": u(ks[7], (256, 256), 256),
        "fc2_b": jnp.zeros((256,), jnp.float32),
        "fc3_w": u(ks[8], (num_actions, 256), 256),
        "fc3_b": jnp.zeros((num_actions,), jnp.float32),
    }
    for i, kk in zip((1, 2, 3), (ks[9], ks[10], ks[11])):
        kg, kb = jax.random.split(kk)
        p[f"bn{i}_gamma"] = 1.0 + 0.1 * jax.random.normal(kg, (16,), jnp.float32)
        p[f"bn{i}_beta"] = 0.1 * jax.random.normal(kb, (16,), jnp.float32)
    return p


if __name__ == "__main__":
    key = jax.random.PRNGKey(0)
    kx, ka, kp = jax.random.split(key, 3)

    # num_channel * num_stack = 4, h = w = 16, num_actions = 4, batch = 2
    N, CIN, H, W, A = 2, 4, 16, 16, 4
    x = jax.random.normal(kx, (N, CIN, H, W), jnp.float32)
    a = jax.random.normal(ka, (N, A), jnp.float32)
    params = init_params(kp, CIN, A)

    q = jax.block_until_ready(jax.jit(critic_cnn_forward)(params, x, a))
    q_ref = jax.block_until_ready(jax.jit(reference_forward)(params, x, a))
    np.testing.assert_allclose(np.asarray(q), np.asarray(q_ref), rtol=1e-2, atol=1e-2)

    print("KERNEL_OK")
</pallas_src>

<mosaic_0001>
module attributes {stable_mosaic.version = 11 : i64} {
  func.func @_critic_kernel(%arg0: memref<98x36xf32, #tpu.memory_space<vmem>>, %arg1: memref<2x4xf32, #tpu.memory_space<vmem>>, %arg2: memref<36x16xf32, #tpu.memory_space<vmem>>, %arg3: memref<162x98xbf16, #tpu.memory_space<vmem>>, %arg4: memref<144x16xf32, #tpu.memory_space<vmem>>, %arg5: memref<18x18xbf16, #tpu.memory_space<vmem>>, %arg6: memref<144x16xf32, #tpu.memory_space<vmem>>, %arg7: memref<6x16xf32, #tpu.memory_space<vmem>>, %arg8: memref<16x256xbf16, #tpu.memory_space<vmem>>, %arg9: memref<4x256xbf16, #tpu.memory_space<vmem>>, %arg10: memref<256x256xbf16, #tpu.memory_space<vmem>>, %arg11: memref<256x128xbf16, #tpu.memory_space<vmem>>, %arg12: memref<3x256xf32, #tpu.memory_space<vmem>>, %arg13: memref<2x128xf32, #tpu.memory_space<vmem>>) attributes {dimension_semantics = [], scalar_prefetch = 0 : i64, scratch_operands = 0 : i64, tpu.core_type = #tpu.core_type<tc>} {
    %c0 = arith.constant 0 : index
    %c0_0 = arith.constant 0 : index
    %0 = vector.load %arg7[%c0, %c0_0] : memref<6x16xf32, #tpu.memory_space<vmem>>, vector<6x16xf32>
    %c0_1 = arith.constant 0 : index
    %c0_2 = arith.constant 0 : index
    %1 = vector.load %arg12[%c0_1, %c0_2] : memref<3x256xf32, #tpu.memory_space<vmem>>, vector<3x256xf32>
    %c0_3 = arith.constant 0 : index
    %c0_4 = arith.constant 0 : index
    %2 = vector.load %arg0[%c0_3, %c0_4] : memref<98x36xf32, #tpu.memory_space<vmem>>, vector<98x36xf32>
    %c0_5 = arith.constant 0 : index
    %c0_6 = arith.constant 0 : index
    %3 = vector.load %arg2[%c0_5, %c0_6] : memref<36x16xf32, #tpu.memory_space<vmem>>, vector<36x16xf32>
    %cst = arith.constant dense<0.000000e+00> : vector<98x16xf32>
    %4 = tpu.matmul %2, %3, %cst {dimension_numbers = #tpu.dot_dimension_numbers<[1], [0], [0], [1], [0, 0, 1, 1], [], []>} : vector<98x36xf32>, vector<36x16xf32>, vector<98x16xf32> -> vector<98x16xf32>
    %cst_7 = arith.constant dense<0.000000e+00> : vector<16xf32>
    %5 = vector.multi_reduction <add>, %4, %cst_7 [0] : vector<98x16xf32> to vector<16xf32>
    %6 = vector.shape_cast %5 : vector<16xf32> to vector<1x16xf32>
    %cst_8 = arith.constant 0.0102040814 : f32
    %7 = vector.broadcast %cst_8 : f32 to vector<1x16xf32>
    %8 = arith.mulf %6, %7 : vector<1x16xf32>
    %9 = arith.mulf %4, %4 : vector<98x16xf32>
    %cst_9 = arith.constant dense<0.000000e+00> : vector<16xf32>
    %10 = vector.multi_reduction <add>, %9, %cst_9 [0] : vector<98x16xf32> to vector<16xf32>
    %11 = vector.shape_cast %10 : vector<16xf32> to vector<1x16xf32>
    %cst_10 = arith.constant 0.0102040814 : f32
    %12 = vector.broadcast %cst_10 : f32 to vector<1x16xf32>
    %13 = arith.mulf %11, %12 : vector<1x16xf32>
    %14 = arith.mulf %8, %8 : vector<1x16xf32>
    %15 = arith.subf %13, %14 : vector<1x16xf32>
    %16 = vector.extract_strided_slice %0 {offsets = [0, 0], sizes = [1, 16], strides = [1, 1]} : vector<6x16xf32> to vector<1x16xf32>
    %cst_11 = arith.constant 9.99999974E-6 : f32
    %17 = vector.broadcast %cst_11 : f32 to vector<1x16xf32>
    %18 = arith.addf %15, %17 : vector<1x16xf32>
    %19 = math.rsqrt %18 : vector<1x16xf32>
    %20 = arith.mulf %16, %19 : vector<1x16xf32>
    %21 = vector.extract_strided_slice %0 {offsets = [3, 0], sizes = [1, 16], strides = [1, 1]} : vector<6x16xf32> to vector<1x16xf32>
    %22 = arith.mulf %8, %20 : vector<1x16xf32>
    %23 = arith.subf %21, %22 : vector<1x16xf32>
    %24 = vector.broadcast %20 : vector<1x16xf32> to vector<98x16xf32>
    %25 = arith.mulf %4, %24 : vector<98x16xf32>
    %26 = vector.broadcast %23 : vector<1x16xf32> to vector<98x16xf32>
    %27 = arith.addf %25, %26 : vector<98x16xf32>
    %cst_12 = arith.constant 0.000000e+00 : f32
    %28 = vector.broadcast %cst_12 : f32 to vector<98x16xf32>
    %29 = arith.maximumf %27, %28 : vector<98x16xf32>
    %c0_13 = arith.constant 0 : index
    %c0_14 = arith.constant 0 : index
    %30 = vector.load %arg4[%c0_13, %c0_14] : memref<144x16xf32, #tpu.memory_space<vmem>>, vector<144x16xf32>
    %c0_15 = arith.constant 0 : index
    %c0_16 = arith.constant 0 : index
    %31 = vector.load %arg3[%c0_15, %c0_16] : memref<162x98xbf16, #tpu.memory_space<vmem>>, vector<162x98xbf16>
    %cst_17 = arith.constant dense<0.000000e+00> : vector<162x16xf32>
    %32 = tpu.matmul %31, %29, %cst_17 {dimension_numbers = #tpu.dot_dimension_numbers<[1], [0], [0], [1], [0, 0, 1, 1], [], []>} : vector<162x98xbf16>, vector<98x16xf32>, vector<162x16xf32> -> vector<162x16xf32>
    %33 = vector.extract_strided_slice %32 {offsets = [0, 0], sizes = [18, 16], strides = [1, 1]} : vector<162x16xf32> to vector<18x16xf32>
    %34 = vector.extract_strided_slice %30 {offsets = [0, 0], sizes = [16, 16], strides = [1, 1]} : vector<144x16xf32> to vector<16x16xf32>
    %cst_18 = arith.constant dense<0.000000e+00> : vector<18x16xf32>
    %35 = tpu.matmul %33, %34, %cst_18 {dimension_numbers = #tpu.dot_dimension_numbers<[1], [0], [0], [1], [0, 0, 1, 1], [], []>} : vector<18x16xf32>, vector<16x16xf32>, vector<18x16xf32> -> vector<18x16xf32>
    %36 = vector.extract_strided_slice %32 {offsets = [18, 0], sizes = [18, 16], strides = [1, 1]} : vector<162x16xf32> to vector<18x16xf32>
    %37 = vector.extract_strided_slice %30 {offsets = [16, 0], sizes = [16, 16], strides = [1, 1]} : vector<144x16xf32> to vector<16x16xf32>
    %cst_19 = arith.constant dense<0.000000e+00> : vector<18x16xf32>
    %38 = tpu.matmul %36, %37, %cst_19 {dimension_numbers = #tpu.dot_dimension_numbers<[1], [0], [0], [1], [0, 0, 1, 1], [], []>} : vector<18x16xf32>, vector<16x16xf32>, vector<18x16xf32> -> vector<18x16xf32>
    %39 = arith.addf %35, %38 : vector<18x16xf32>
    %40 = vector.extract_strided_slice %32 {offsets = [36, 0], sizes = [18, 16], strides = [1, 1]} : vector<162x16xf32> to vector<18x16xf32>
    %41 = vector.extract_strided_slice %30 {offsets = [32, 0], sizes = [16, 16], strides = [1, 1]} : vector<144x16xf32> to vector<16x16xf32>
    %cst_20 = arith.constant dense<0.000000e+00> : vector<18x16xf32>
    %42 = tpu.matmul %40, %41, %cst_20 {dimension_numbers = #tpu.dot_dimension_numbers<[1], [0], [0], [1], [0, 0, 1, 1], [], []>} : vector<18x16xf32>, vector<16x16xf32>, vector<18x16xf32> -> vector<18x16xf32>
    %43 = arith.addf %39, %42 : vector<18x16xf32>
    %44 = vector.extract_strided_slice %32 {offsets = [54, 0], sizes = [18, 16], strides = [1, 1]} : vector<162x16xf32> to vector<18x16xf32>
    %45 = vector.extract_strided_slice %30 {offsets = [48, 0], sizes = [16, 16], strides = [1, 1]} : vector<144x16xf32> to vector<16x16xf32>
    %cst_21 = arith.constant dense<0.000000e+00> : vector<18x16xf32>
    %46 = tpu.matmul %44, %45, %cst_21 {dimension_numbers = #tpu.dot_dimension_numbers<[1], [0], [0], [1], [0, 0, 1, 1], [], []>} : vector<18x16xf32>, vector<16x16xf32>, vector<18x16xf32> -> vector<18x16xf32>
    %47 = arith.addf %43, %46 : vector<18x16xf32>
    %48 = vector.extract_strided_slice %32 {offsets = [72, 0], sizes = [18, 16], strides = [1, 1]} : vector<162x16xf32> to vector<18x16xf32>
    %49 = vector.extract_strided_slice %30 {offsets = [64, 0], sizes = [16, 16], strides = [1, 1]} : vector<144x16xf32> to vector<16x16xf32>
    %cst_22 = arith.constant dense<0.000000e+00> : vector<18x16xf32>
    %50 = tpu.matmul %48, %49, %cst_22 {dimension_numbers = #tpu.dot_dimension_numbers<[1], [0], [0], [1], [0, 0, 1, 1], [], []>} : vector<18x16xf32>, vector<16x16xf32>, vector<18x16xf32> -> vector<18x16xf32>
    %51 = arith.addf %47, %50 : vector<18x16xf32>
    %52 = vector.extract_strided_slice %32 {offsets = [90, 0], sizes = [18, 16], strides = [1, 1]} : vector<162x16xf32> to vector<18x16xf32>
    %53 = vector.extract_strided_slice %30 {offsets = [80, 0], sizes = [16, 16], strides = [1, 1]} : vector<144x16xf32> to vector<16x16xf32>
    %cst_23 = arith.constant dense<0.000000e+00> : vector<18x16xf32>
    %54 = tpu.matmul %52, %53, %cst_23 {dimension_numbers = #tpu.dot_dimension_numbers<[1], [0], [0], [1], [0, 0, 1, 1], [], []>} : vector<18x16xf32>, vector<16x16xf32>, vector<18x16xf32> -> vector<18x16xf32>
    %55 = arith.addf %51, %54 : vector<18x16xf32>
    %56 = vector.extract_strided_slice %32 {offsets = [108, 0], sizes = [18, 16], strides = [1, 1]} : vector<162x16xf32> to vector<18x16xf32>
    %57 = vector.extract_strided_slice %30 {offsets = [96, 0], sizes = [16, 16], strides = [1, 1]} : vector<144x16xf32> to vector<16x16xf32>
    %cst_24 = arith.constant dense<0.000000e+00> : vector<18x16xf32>
    %58 = tpu.matmul %56, %57, %cst_24 {dimension_numbers = #tpu.dot_dimension_numbers<[1], [0], [0], [1], [0, 0, 1, 1], [], []>} : vector<18x16xf32>, vector<16x16xf32>, vector<18x16xf32> -> vector<18x16xf32>
    %59 = arith.addf %55, %58 : vector<18x16xf32>
    %60 = vector.extract_strided_slice %32 {offsets = [126, 0], sizes = [18, 16], strides = [1, 1]} : vector<162x16xf32> to vector<18x16xf32>
    %61 = vector.extract_strided_slice %30 {offsets = [112, 0], sizes = [16, 16], strides = [1, 1]} : vector<144x16xf32> to vector<16x16xf32>
    %cst_25 = arith.constant dense<0.000000e+00> : vector<18x16xf32>
    %62 = tpu.matmul %60, %61, %cst_25 {dimension_numbers = #tpu.dot_dimension_numbers<[1], [0], [0], [1], [0, 0, 1, 1], [], []>} : vector<18x16xf32>, vector<16x16xf32>, vector<18x16xf32> -> vector<18x16xf32>
    %63 = arith.addf %59, %62 : vector<18x16xf32>
    %64 = vector.extract_strided_slice %32 {offsets = [144, 0], sizes = [18, 16], strides = [1, 1]} : vector<162x16xf32> to vector<18x16xf32>
    %65 = vector.extract_strided_slice %30 {offsets = [128, 0], sizes = [16, 16], strides = [1, 1]} : vector<144x16xf32> to vector<16x16xf32>
    %cst_26 = arith.constant dense<0.000000e+00> : vector<18x16xf32>
    %66 = tpu.matmul %64, %65, %cst_26 {dimension_numbers = #tpu.dot_dimension_numbers<[1], [0], [0], [1], [0, 0, 1, 1], [], []>} : vector<18x16xf32>, vector<16x16xf32>, vector<18x16xf32> -> vector<18x16xf32>
    %67 = arith.addf %63, %66 : vector<18x16xf32>
    %cst_27 = arith.constant dense<0.000000e+00> : vector<16xf32>
    %68 = vector.multi_reduction <add>, %67, %cst_27 [0] : vector<18x16xf32> to vector<16xf32>
    %69 = vector.shape_cast %68 : vector<16xf32> to vector<1x16xf32>
    %cst_28 = arith.constant 0.055555556 : f32
    %70 = vector.broadcast %cst_28 : f32 to vector<1x16xf32>
    %71 = arith.mulf %69, %70 : vector<1x16xf32>
    %72 = arith.mulf %67, %67 : vector<18x16xf32>
    %cst_29 = arith.constant dense<0.000000e+00> : vector<16xf32>
    %73 = vector.multi_reduction <add>, %72, %cst_29 [0] : vector<18x16xf32> to vector<16xf32>
    %74 = vector.shape_cast %73 : vector<16xf32> to vector<1x16xf32>
    %cst_30 = arith.constant 0.055555556 : f32
    %75 = vector.broadcast %cst_30 : f32 to vector<1x16xf32>
    %76 = arith.mulf %74, %75 : vector<1x16xf32>
    %77 = arith.mulf %71, %71 : vector<1x16xf32>
    %78 = arith.subf %76, %77 : vector<1x16xf32>
    %79 = vector.extract_strided_slice %0 {offsets = [1, 0], sizes = [1, 16], strides = [1, 1]} : vector<6x16xf32> to vector<1x16xf32>
    %cst_31 = arith.constant 9.99999974E-6 : f32
    %80 = vector.broadcast %cst_31 : f32 to vector<1x16xf32>
    %81 = arith.addf %78, %80 : vector<1x16xf32>
    %82 = math.rsqrt %81 : vector<1x16xf32>
    %83 = arith.mulf %79, %82 : vector<1x16xf32>
    %84 = vector.extract_strided_slice %0 {offsets = [4, 0], sizes = [1, 16], strides = [1, 1]} : vector<6x16xf32> to vector<1x16xf32>
    %85 = arith.mulf %71, %83 : vector<1x16xf32>
    %86 = arith.subf %84, %85 : vector<1x16xf32>
    %87 = vector.broadcast %83 : vector<1x16xf32> to vector<18x16xf32>
    %88 = arith.mulf %67, %87 : vector<18x16xf32>
    %89 = vector.broadcast %86 : vector<1x16xf32> to vector<18x16xf32>
    %90 = arith.addf %88, %89 : vector<18x16xf32>
    %cst_32 = arith.constant 0.000000e+00 : f32
    %91 = vector.broadcast %cst_32 : f32 to vector<18x16xf32>
    %92 = arith.maximumf %90, %91 : vector<18x16xf32>
    %c0_33 = arith.constant 0 : index
    %c0_34 = arith.constant 0 : index
    %93 = vector.load %arg6[%c0_33, %c0_34] : memref<144x16xf32, #tpu.memory_space<vmem>>, vector<144x16xf32>
    %c0_35 = arith.constant 0 : index
    %c0_36 = arith.constant 0 : index
    %94 = vector.load %arg5[%c0_35, %c0_36] : memref<18x18xbf16, #tpu.memory_space<vmem>>, vector<18x18xbf16>
    %cst_37 = arith.constant dense<0.000000e+00> : vector<18x16xf32>
    %95 = tpu.matmul %94, %92, %cst_37 {dimension_numbers = #tpu.dot_dimension_numbers<[1], [0], [0], [1], [0, 0, 1, 1], [], []>} : vector<18x18xbf16>, vector<18x16xf32>, vector<18x16xf32> -> vector<18x16xf32>
    %96 = vector.extract_strided_slice %95 {offsets = [0, 0], sizes = [2, 16], strides = [1, 1]} : vector<18x16xf32> to vector<2x16xf32>
    %97 = vector.extract_strided_slice %93 {offsets = [0, 0], sizes = [16, 16], strides = [1, 1]} : vector<144x16xf32> to vector<16x16xf32>
    %cst_38 = arith.constant dense<0.000000e+00> : vector<2x16xf32>
    %98 = tpu.matmul %96, %97, %cst_38 {dimension_numbers = #tpu.dot_dimension_numbers<[1], [0], [0], [1], [0, 0, 1, 1], [], []>} : vector<2x16xf32>, vector<16x16xf32>, vector<2x16xf32> -> vector<2x16xf32>
    %99 = vector.extract_strided_slice %95 {offsets = [2, 0], sizes = [2, 16], strides = [1, 1]} : vector<18x16xf32> to vector<2x16xf32>
    %100 = vector.extract_strided_slice %93 {offsets = [16, 0], sizes = [16, 16], strides = [1, 1]} : vector<144x16xf32> to vector<16x16xf32>
    %cst_39 = arith.constant dense<0.000000e+00> : vector<2x16xf32>
    %101 = tpu.matmul %99, %100, %cst_39 {dimension_numbers = #tpu.dot_dimension_numbers<[1], [0], [0], [1], [0, 0, 1, 1], [], []>} : vector<2x16xf32>, vector<16x16xf32>, vector<2x16xf32> -> vector<2x16xf32>
    %102 = arith.addf %98, %101 : vector<2x16xf32>
    %103 = vector.extract_strided_slice %95 {offsets = [4, 0], sizes = [2, 16], strides = [1, 1]} : vector<18x16xf32> to vector<2x16xf32>
    %104 = vector.extract_strided_slice %93 {offsets = [32, 0], sizes = [16, 16], strides = [1, 1]} : vector<144x16xf32> to vector<16x16xf32>
    %cst_40 = arith.constant dense<0.000000e+00> : vector<2x16xf32>
    %105 = tpu.matmul %103, %104, %cst_40 {dimension_numbers = #tpu.dot_dimension_numbers<[1], [0], [0], [1], [0, 0, 1, 1], [], []>} : vector<2x16xf32>, vector<16x16xf32>, vector<2x16xf32> -> vector<2x16xf32>
    %106 = arith.addf %102, %105 : vector<2x16xf32>
    %107 = vector.extract_strided_slice %95 {offsets = [6, 0], sizes = [2, 16], strides = [1, 1]} : vector<18x16xf32> to vector<2x16xf32>
    %108 = vector.extract_strided_slice %93 {offsets = [48, 0], sizes = [16, 16], strides = [1, 1]} : vector<144x16xf32> to vector<16x16xf32>
    %cst_41 = arith.constant dense<0.000000e+00> : vector<2x16xf32>
    %109 = tpu.matmul %107, %108, %cst_41 {dimension_numbers = #tpu.dot_dimension_numbers<[1], [0], [0], [1], [0, 0, 1, 1], [], []>} : vector<2x16xf32>, vector<16x16xf32>, vector<2x16xf32> -> vector<2x16xf32>
    %110 = arith.addf %106, %109 : vector<2x16xf32>
    %111 = vector.extract_strided_slice %95 {offsets = [8, 0], sizes = [2, 16], strides = [1, 1]} : vector<18x16xf32> to vector<2x16xf32>
    %112 = vector.extract_strided_slice %93 {offsets = [64, 0], sizes = [16, 16], strides = [1, 1]} : vector<144x16xf32> to vector<16x16xf32>
    %cst_42 = arith.constant dense<0.000000e+00> : vector<2x16xf32>
    %113 = tpu.matmul %111, %112, %cst_42 {dimension_numbers = #tpu.dot_dimension_numbers<[1], [0], [0], [1], [0, 0, 1, 1], [], []>} : vector<2x16xf32>, vector<16x16xf32>, vector<2x16xf32> -> vector<2x16xf32>
    %114 = arith.addf %110, %113 : vector<2x16xf32>
    %115 = vector.extract_strided_slice %95 {offsets = [10, 0], sizes = [2, 16], strides = [1, 1]} : vector<18x16xf32> to vector<2x16xf32>
    %116 = vector.extract_strided_slice %93 {offsets = [80, 0], sizes = [16, 16], strides = [1, 1]} : vector<144x16xf32> to vector<16x16xf32>
    %cst_43 = arith.constant dense<0.000000e+00> : vector<2x16xf32>
    %117 = tpu.matmul %115, %116, %cst_43 {dimension_numbers = #tpu.dot_dimension_numbers<[1], [0], [0], [1], [0, 0, 1, 1], [], []>} : vector<2x16xf32>, vector<16x16xf32>, vector<2x16xf32> -> vector<2x16xf32>
    %118 = arith.addf %114, %117 : vector<2x16xf32>
    %119 = vector.extract_strided_slice %95 {offsets = [12, 0], sizes = [2, 16], strides = [1, 1]} : vector<18x16xf32> to vector<2x16xf32>
    %120 = vector.extract_strided_slice %93 {offsets = [96, 0], sizes = [16, 16], strides = [1, 1]} : vector<144x16xf32> to vector<16x16xf32>
    %cst_44 = arith.constant dense<0.000000e+00> : vector<2x16xf32>
    %121 = tpu.matmul %119, %120, %cst_44 {dimension_numbers = #tpu.dot_dimension_numbers<[1], [0], [0], [1], [0, 0, 1, 1], [], []>} : vector<2x16xf32>, vector<16x16xf32>, vector<2x16xf32> -> vector<2x16xf32>
    %122 = arith.addf %118, %121 : vector<2x16xf32>
    %123 = vector.extract_strided_slice %95 {offsets = [14, 0], sizes = [2, 16], strides = [1, 1]} : vector<18x16xf32> to vector<2x16xf32>
    %124 = vector.extract_strided_slice %93 {offsets = [112, 0], sizes = [16, 16], strides = [1, 1]} : vector<144x16xf32> to vector<16x16xf32>
    %cst_45 = arith.constant dense<0.000000e+00> : vector<2x16xf32>
    %125 = tpu.matmul %123, %124, %cst_45 {dimension_numbers = #tpu.dot_dimension_numbers<[1], [0], [0], [1], [0, 0, 1, 1], [], []>} : vector<2x16xf32>, vector<16x16xf32>, vector<2x16xf32> -> vector<2x16xf32>
    %126 = arith.addf %122, %125 : vector<2x16xf32>
    %127 = vector.extract_strided_slice %95 {offsets = [16, 0], sizes = [2, 16], strides = [1, 1]} : vector<18x16xf32> to vector<2x16xf32>
    %128 = vector.extract_strided_slice %93 {offsets = [128, 0], sizes = [16, 16], strides = [1, 1]} : vector<144x16xf32> to vector<16x16xf32>
    %cst_46 = arith.constant dense<0.000000e+00> : vector<2x16xf32>
    %129 = tpu.matmul %127, %128, %cst_46 {dimension_numbers = #tpu.dot_dimension_numbers<[1], [0], [0], [1], [0, 0, 1, 1], [], []>} : vector<2x16xf32>, vector<16x16xf32>, vector<2x16xf32> -> vector<2x16xf32>
    %130 = arith.addf %126, %129 : vector<2x16xf32>
    %cst_47 = arith.constant dense<0.000000e+00> : vector<16xf32>
    %131 = vector.multi_reduction <add>, %130, %cst_47 [0] : vector<2x16xf32> to vector<16xf32>
    %132 = vector.shape_cast %131 : vector<16xf32> to vector<1x16xf32>
    %cst_48 = arith.constant 5.000000e-01 : f32
    %133 = vector.broadcast %cst_48 : f32 to vector<1x16xf32>
    %134 = arith.mulf %132, %133 : vector<1x16xf32>
    %135 = arith.mulf %130, %130 : vector<2x16xf32>
    %cst_49 = arith.constant dense<0.000000e+00> : vector<16xf32>
    %136 = vector.multi_reduction <add>, %135, %cst_49 [0] : vector<2x16xf32> to vector<16xf32>
    %137 = vector.shape_cast %136 : vector<16xf32> to vector<1x16xf32>
    %cst_50 = arith.constant 5.000000e-01 : f32
    %138 = vector.broadcast %cst_50 : f32 to vector<1x16xf32>
    %139 = arith.mulf %137, %138 : vector<1x16xf32>
    %140 = arith.mulf %134, %134 : vector<1x16xf32>
    %141 = arith.subf %139, %140 : vector<1x16xf32>
    %142 = vector.extract_strided_slice %0 {offsets = [2, 0], sizes = [1, 16], strides = [1, 1]} : vector<6x16xf32> to vector<1x16xf32>
    %cst_51 = arith.constant 9.99999974E-6 : f32
    %143 = vector.broadcast %cst_51 : f32 to vector<1x16xf32>
    %144 = arith.addf %141, %143 : vector<1x16xf32>
    %145 = math.rsqrt %144 : vector<1x16xf32>
    %146 = arith.mulf %142, %145 : vector<1x16xf32>
    %147 = vector.extract_strided_slice %0 {offsets = [5, 0], sizes = [1, 16], strides = [1, 1]} : vector<6x16xf32> to vector<1x16xf32>
    %148 = arith.mulf %134, %146 : vector<1x16xf32>
    %149 = arith.subf %147, %148 : vector<1x16xf32>
    %150 = vector.broadcast %146 : vector<1x16xf32> to vector<2x16xf32>
    %151 = arith.mulf %130, %150 : vector<2x16xf32>
    %152 = vector.broadcast %149 : vector<1x16xf32> to vector<2x16xf32>
    %153 = arith.addf %151, %152 : vector<2x16xf32>
    %cst_52 = arith.constant 0.000000e+00 : f32
    %154 = vector.broadcast %cst_52 : f32 to vector<2x16xf32>
    %155 = arith.maximumf %153, %154 : vector<2x16xf32>
    %c0_53 = arith.constant 0 : index
    %c0_54 = arith.constant 0 : index
    %156 = vector.load %arg8[%c0_53, %c0_54] : memref<16x256xbf16, #tpu.memory_space<vmem>>, vector<16x256xbf16>
    %cst_55 = arith.constant dense<0.000000e+00> : vector<2x256xf32>
    %157 = tpu.matmul %155, %156, %cst_55 {dimension_numbers = #tpu.dot_dimension_numbers<[1], [0], [0], [1], [0, 0, 1, 1], [], []>} : vector<2x16xf32>, vector<16x256xbf16>, vector<2x256xf32> -> vector<2x256xf32>
    %c0_56 = arith.constant 0 : index
    %c0_57 = arith.constant 0 : index
    %158 = vector.load %arg1[%c0_56, %c0_57] : memref<2x4xf32, #tpu.memory_space<vmem>>, vector<2x4xf32>
    %c0_58 = arith.constant 0 : index
    %c0_59 = arith.constant 0 : index
    %159 = vector.load %arg9[%c0_58, %c0_59] : memref<4x256xbf16, #tpu.memory_space<vmem>>, vector<4x256xbf16>
    %cst_60 = arith.constant dense<0.000000e+00> : vector<2x256xf32>
    %160 = tpu.matmul %158, %159, %cst_60 {dimension_numbers = #tpu.dot_dimension_numbers<[1], [0], [0], [1], [0, 0, 1, 1], [], []>} : vector<2x4xf32>, vector<4x256xbf16>, vector<2x256xf32> -> vector<2x256xf32>
    %161 = arith.addf %157, %160 : vector<2x256xf32>
    %162 = vector.extract_strided_slice %1 {offsets = [0, 0], sizes = [1, 256], strides = [1, 1]} : vector<3x256xf32> to vector<1x256xf32>
    %163 = vector.broadcast %162 : vector<1x256xf32> to vector<2x256xf32>
    %164 = arith.addf %161, %163 : vector<2x256xf32>
    %cst_61 = arith.constant 0.000000e+00 : f32
    %165 = vector.broadcast %cst_61 : f32 to vector<2x256xf32>
    %166 = arith.maximumf %164, %165 : vector<2x256xf32>
    %c0_62 = arith.constant 0 : index
    %c0_63 = arith.constant 0 : index
    %167 = vector.load %arg10[%c0_62, %c0_63] : memref<256x256xbf16, #tpu.memory_space<vmem>>, vector<256x256xbf16>
    %cst_64 = arith.constant dense<0.000000e+00> : vector<2x256xf32>
    %168 = tpu.matmul %166, %167, %cst_64 {dimension_numbers = #tpu.dot_dimension_numbers<[1], [0], [0], [1], [0, 0, 1, 1], [], []>} : vector<2x256xf32>, vector<256x256xbf16>, vector<2x256xf32> -> vector<2x256xf32>
    %169 = vector.extract_strided_slice %1 {offsets = [1, 0], sizes = [1, 256], strides = [1, 1]} : vector<3x256xf32> to vector<1x256xf32>
    %170 = vector.broadcast %169 : vector<1x256xf32> to vector<2x256xf32>
    %171 = arith.addf %168, %170 : vector<2x256xf32>
    %cst_65 = arith.constant 0.000000e+00 : f32
    %172 = vector.broadcast %cst_65 : f32 to vector<2x256xf32>
    %173 = arith.maximumf %171, %172 : vector<2x256xf32>
    %c0_66 = arith.constant 0 : index
    %c0_67 = arith.constant 0 : index
    %174 = vector.load %arg11[%c0_66, %c0_67] : memref<256x128xbf16, #tpu.memory_space<vmem>>, vector<256x128xbf16>
    %cst_68 = arith.constant dense<0.000000e+00> : vector<2x128xf32>
    %175 = tpu.matmul %173, %174, %cst_68 {dimension_numbers = #tpu.dot_dimension_numbers<[1], [0], [0], [1], [0, 0, 1, 1], [], []>} : vector<2x256xf32>, vector<256x128xbf16>, vector<2x128xf32> -> vector<2x128xf32>
    %176 = vector.extract_strided_slice %1 {offsets = [2, 0], sizes = [1, 128], strides = [1, 1]} : vector<3x256xf32> to vector<1x128xf32>
    %177 = vector.broadcast %176 : vector<1x128xf32> to vector<2x128xf32>
    %178 = arith.addf %175, %177 : vector<2x128xf32>
    %c0_69 = arith.constant 0 : index
    %c0_70 = arith.constant 0 : index
    %179 = vector.load %arg13[%c0_69, %c0_70] : memref<2x128xf32, #tpu.memory_space<vmem>>, vector<2x128xf32>
    tpu.vector_store %arg13[%c0_69, %c0_70], %178 {strides = array<i32>} : memref<2x128xf32, #tpu.memory_space<vmem>>, vector<2x128xf32>,
    return
  }
}

</mosaic_0001>

<llo_original>
// kernel: critic_cnn_forward.1
$region0: #{critic_cnn_forward.1}
  #allocation0 [shape = 'u32[]', space=smem, size = 0x4, offset = 0x4, fixed_abs, tag = 'smem constant byte address 0x4 - core index']
  #allocation1 [shape = 'u32[144,128]{1,0:T(1,128)}', space=vmem, size = 0x12000, scoped, tag = 'internal scratch']
  %s0 = inlined_call_operand.vmem [shape: f32[98,36], index: 0, kind: input, shape index: {}]
  %s1 = inlined_call_operand.vmem [shape: f32[2,4], index: 1, kind: input, shape index: {}]
  %s2 = inlined_call_operand.vmem [shape: f32[36,16], index: 2, kind: input, shape index: {}]
  %s3 = inlined_call_operand.vmem [shape: bf16[162,98], index: 3, kind: input, shape index: {}]
  %s4 = inlined_call_operand.vmem [shape: f32[144,16], index: 4, kind: input, shape index: {}]
  %s5 = inlined_call_operand.vmem [shape: bf16[18,18], index: 5, kind: input, shape index: {}]
  %s6 = inlined_call_operand.vmem [shape: f32[144,16], index: 6, kind: input, shape index: {}]
  %s7 = inlined_call_operand.vmem [shape: f32[6,16], index: 7, kind: input, shape index: {}]
  %s8 = inlined_call_operand.vmem [shape: bf16[16,256], index: 8, kind: input, shape index: {}]
  %s9 = inlined_call_operand.vmem [shape: bf16[4,256], index: 9, kind: input, shape index: {}]
  %s10 = inlined_call_operand.vmem [shape: bf16[256,256], index: 10, kind: input, shape index: {}]
  %s11 = inlined_call_operand.vmem [shape: bf16[256,128], index: 11, kind: input, shape index: {}]
  %s12 = inlined_call_operand.vmem [shape: f32[3,256], index: 12, kind: input, shape index: {}]
  %s13 = inlined_call_operand.hbm [shape: f32[2,128], index: 13, kind: output, shape index: {}]
  %s14 = sld [smem:[#allocation0]]
  $region62: #{critic_cnn_forward.1} parent=0
    _
  %s16 = ssub.s32 1, %s14
  %s17 = scalar_select 0, %s16, %s14
  $region1: #{critic_cnn_forward.1} parent=0
    #allocation2 [shape = 'u8[1024]{0}', space=vmem, size = 0x400, scoped, tag = 'output window, operand 0, single buffered']
    #allocation3 [shape = 's32[1]{0}', space=sflag, size = 0x4, scoped, tag = 'scoped memory for critic_cnn_forward.1']
    %18 = vsyncpa [#allocation3], 0
    // Predicated region
    $region2: #{critic_cnn_forward.1} parent=1 // pred_check
      _
    $region3: #{critic_cnn_forward.1} parent=1 // pred_check_branch
      %20 = sbr.rel (0) target = $region5
    $region4: #{critic_cnn_forward.1} parent=1 // pred_region
      _
    $region5: #{critic_cnn_forward.1} parent=1 // pred_fallthru
      _
    // Predicated region
    $region6: #{critic_cnn_forward.1} parent=1 // pred_check
      _
    $region7: #{critic_cnn_forward.1} parent=1 // pred_check_branch
      %22 = sbr.rel (0) target = $region9
    $region8: #{critic_cnn_forward.1} parent=1 // pred_region
      _
    $region9: #{critic_cnn_forward.1} parent=1 // pred_fallthru
      _
    // Predicated region
    $region10: #{critic_cnn_forward.1} parent=1 // pred_check
      _
    $region11: #{critic_cnn_forward.1} parent=1 // pred_check_branch
      %24 = sbr.rel (0) target = $region13
    $region12: #{critic_cnn_forward.1} parent=1 // pred_region
      _
    $region13: #{critic_cnn_forward.1} parent=1 // pred_fallthru
      _
    // Predicated region
    $region14: #{critic_cnn_forward.1} parent=1 // pred_check
      _
    $region15: #{critic_cnn_forward.1} parent=1 // pred_check_branch
      %26 = sbr.rel (0) target = $region17
    $region16: #{critic_cnn_forward.1} parent=1 // pred_region
      _
    $region17: #{critic_cnn_forward.1} parent=1 // pred_fallthru
      _
    // Predicated region
    $region18: #{critic_cnn_forward.1} parent=1 // pred_check
      _
    $region19: #{critic_cnn_forward.1} parent=1 // pred_check_branch
      %28 = sbr.rel (0) target = $region21
    $region20: #{critic_cnn_forward.1} parent=1 // pred_region
      _
    $region21: #{critic_cnn_forward.1} parent=1 // pred_fallthru
      _
    // Predicated region
    $region22: #{critic_cnn_forward.1} parent=1 // pred_check
      _
    $region23: #{critic_cnn_forward.1} parent=1 // pred_check_branch
      %30 = sbr.rel (0) target = $region25
    $region24: #{critic_cnn_forward.1} parent=1 // pred_region
      _
    $region25: #{critic_cnn_forward.1} parent=1 // pred_fallthru
      _
    // Predicated region
    $region26: #{critic_cnn_forward.1} parent=1 // pred_check
      _
    $region27: #{critic_cnn_forward.1} parent=1 // pred_check_branch
      %32 = sbr.rel (0) target = $region29
    $region28: #{critic_cnn_forward.1} parent=1 // pred_region
      _
    $region29: #{critic_cnn_forward.1} parent=1 // pred_fallthru
      _
    // Predicated region
    $region30: #{critic_cnn_forward.1} parent=1 // pred_check
      _
    $region31: #{critic_cnn_forward.1} parent=1 // pred_check_branch
      %34 = sbr.rel (0) target = $region33
    $region32: #{critic_cnn_forward.1} parent=1 // pred_region
      _
    $region33: #{critic_cnn_forward.1} parent=1 // pred_fallthru
      _
    // Predicated region
    $region34: #{critic_cnn_forward.1} parent=1 // pred_check
      _
    $region35: #{critic_cnn_forward.1} parent=1 // pred_check_branch
      %36 = sbr.rel (0) target = $region37
    $region36: #{critic_cnn_forward.1} parent=1 // pred_region
      _
    $region37: #{critic_cnn_forward.1} parent=1 // pred_fallthru
      _
    // Predicated region
    $region38: #{critic_cnn_forward.1} parent=1 // pred_check
      _
    $region39: #{critic_cnn_forward.1} parent=1 // pred_check_branch
      %38 = sbr.rel (0) target = $region41
    $region40: #{critic_cnn_forward.1} parent=1 // pred_region
      _
    $region41: #{critic_cnn_forward.1} parent=1 // pred_fallthru
      _
    // Predicated region
    $region42: #{critic_cnn_forward.1} parent=1 // pred_check
      _
    $region43: #{critic_cnn_forward.1} parent=1 // pred_check_branch
      %40 = sbr.rel (0) target = $region45
    $region44: #{critic_cnn_forward.1} parent=1 // pred_region
      _
    $region45: #{critic_cnn_forward.1} parent=1 // pred_fallthru
      _
    // Predicated region
    $region46: #{critic_cnn_forward.1} parent=1 // pred_check
      _
    $region47: #{critic_cnn_forward.1} parent=1 // pred_check_branch
      %42 = sbr.rel (0) target = $region49
    $region48: #{critic_cnn_forward.1} parent=1 // pred_region
      _
    $region49: #{critic_cnn_forward.1} parent=1 // pred_fallthru
      _
    // Predicated region
    $region50: #{critic_cnn_forward.1} parent=1 // pred_check
      _
    $region51: #{critic_cnn_forward.1} parent=1 // pred_check_branch
      %44 = sbr.rel (0) target = $region53
    $region52: #{critic_cnn_forward.1} parent=1 // pred_region
      _
    $region53: #{critic_cnn_forward.1} parent=1 // pred_fallthru
      _
    %v46 = vld [vmem:[%s7] sm:$0x3f]
    %v47 = vld [vmem:[%s12] sm:$0x77]
    %v48 = vld [vmem:[%s0] sm:$0xff]
    %v49 = vld [vmem:[%s0 + $0x8] sm:$0xff]
    %v50 = vld [vmem:[%s0 + $0x10] sm:$0xff]
    %v51 = vld [vmem:[%s0 + $0x18] sm:$0xff]
    %v52 = vld [vmem:[%s0 + $0x20] sm:$0xff]
    %v53 = vld [vmem:[%s0 + $0x28] sm:$0xff]
    %v54 = vld [vmem:[%s0 + $0x30] sm:$0xff]
    %v55 = vld [vmem:[%s0 + $0x38] sm:$0xff]
    %v56 = vld [vmem:[%s0 + $0x40] sm:$0xff]
    %v57 = vld [vmem:[%s0 + $0x48] sm:$0xff]
    %v58 = vld [vmem:[%s0 + $0x50] sm:$0xff]
    %v59 = vld [vmem:[%s0 + $0x58] sm:$0xff]
    %v60 = vld [vmem:[%s0 + $0x60] sm:$0x3]
    %v61 = vld [vmem:[%s2] sm:$0xff]
    %v62 = vld [vmem:[%s2 + $0x8] sm:$0xff]
    %v63 = vld [vmem:[%s2 + $0x10] sm:$0xff]
    %v64 = vld [vmem:[%s2 + $0x18] sm:$0xff]
    %v65 = vld [vmem:[%s2 + $0x20] sm:$0xf]
    %vm66 = vcmask 293888
    %v68 = vsel %vm66, %v48, 0
    %v71 = vsel %vm66, %v49, 0
    %v74 = vsel %vm66, %v50, 0
    %v77 = vsel %vm66, %v51, 0
    %v80 = vsel %vm66, %v52, 0
    %v83 = vsel %vm66, %v53, 0
    %v86 = vsel %vm66, %v54, 0
    %v89 = vsel %vm66, %v55, 0
    %v92 = vsel %vm66, %v56, 0
    %v95 = vsel %vm66, %v57, 0
    %v98 = vsel %vm66, %v58, 0
    %v101 = vsel %vm66, %v59, 0
    %v104 = vsel %vm66, %v60, 0
    %vm106 = vcmask 1043456
    %v108 = vsel %vm106, %v65, 0
    %110 = vmatprep.subr.mxu0 0.0
    %111 = vmatpush1.msra.mxu0 %v61
    %112 = vmatprep.subr.mxu0 0.0
    %113 = vmatpush1.msra.mxu0 %v62
    %114 = vmatprep.subr.mxu0 0.0
    %115 = vmatpush1.msra.mxu0 %v63
    %116 = vmatprep.subr.mxu0 0.0
    %117 = vmatpush1.msra.mxu0 %v64
    %118 = vmatprep.subr.mxu0 0.0
    %119 = vmatpush1.msra.mxu0 %v108
    %120 = vmatprep.subr.mxu0 0.0
    %121 = vmatpush1.msra.mxu0 0.0
    %122 = vmatprep.subr.mxu0 0.0
    %123 = vmatpush1.msra.mxu0 0.0
    %124 = vmatprep.subr.mxu0 0.0
    %125 = vmatpush1.msra.mxu0 0.0
    %126 = vmatprep.subr.mxu0 0.0
    %127 = vmatpush1.msra.mxu0 0.0
    %128 = vmatprep.subr.mxu0 0.0
    %129 = vmatpush1.msra.mxu0 0.0
    %130 = vmatprep.subr.mxu0 0.0
    %131 = vmatpush1.msra.mxu0 0.0
    %132 = vmatprep.subr.mxu0 0.0
    %133 = vmatpush1.msra.mxu0 0.0
    %134 = vmatprep.subr.mxu0 0.0
    %135 = vmatpush1.msra.mxu0 0.0
    %136 = vmatprep.subr.mxu0 0.0
    %137 = vmatpush1.msra.mxu0 0.0
    %138 = vmatprep.subr.mxu0 0.0
    %139 = vmatpush1.msra.mxu0 0.0
    %140 = vmatprep.subr.mxu0 0.0
    %141 = vmatpush1.msra.mxu0 0.0
    %142 = vmatprep.subr.mxu0 0.0
    %143 = vmatpush1.msra.mxu0 0.0
    %144 = vmatprep.subr.mxu0 0.0
    %145 = vmatpush1.msra.mxu0 0.0
    %146 = vmatprep.subr.mxu0 0.0
    %147 = vmatpush1.msra.mxu0 0.0
    %148 = vmatprep.subr.mxu0 0.0
    %149 = vmatpush1.msra.mxu0 0.0
    %150 = vmatprep.subr.mxu0 0.0
    %151 = vmatpush1.msra.mxu0 0.0
    %152 = vmatprep.subr.mxu0 0.0
    %153 = vmatpush1.msra.mxu0 0.0
    %154 = vmatprep.subr.mxu0 0.0
    %155 = vmatpush1.msra.mxu0 0.0
    %156 = vmatprep.subr.mxu0 0.0
    %157 = vmatpush1.msra.mxu0 0.0
    %158 = vmatprep.subr.mxu0 0.0
    %159 = vmatpush1.msra.mxu0 0.0
    %160 = vmatprep.subr.mxu0 0.0
    %161 = vmatpush1.msra.mxu0 0.0
    %162 = vmatprep.subr.mxu0 0.0
    %163 = vmatpush1.msra.mxu0 0.0
    %164 = vmatprep.subr.mxu0 0.0
    %165 = vmatpush1.msra.mxu0 0.0
    %166 = vmatprep.subr.mxu0 0.0
    %167 = vmatpush1.msra.mxu0 0.0
    %168 = vmatprep.subr.mxu0 0.0
    %169 = vmatpush1.msra.mxu0 0.0
    %170 = vmatprep.subr.mxu0 0.0
    %171 = vmatpush1.msra.mxu0 0.0
    %172 = vmatprep.subr.mxu0 0.0
    %173 = vmatpush1.msra.mxu0 0.0
    %174 = vmatprep.mubr.f32.mxu0 0.0
    %175 = vmatmul.mubr.f32.gmra.mrb[0].mxu0 %v68
    %v176 = vpop.f32.mrb[0].mxu0
    %v177 = vadd.f32 0.0, %v176
    %v178 = vpop.f32.mrb[0].mxu0
    %179 = vmatprep.mubr.f32.mxu0 0.0
    %180 = vmatmul.mubr.f32.gmra.mrb[0].mxu0 %v71
    %v181 = vpop.f32.mrb[0].mxu0
    %v182 = vadd.f32 0.0, %v181
    %v183 = vpop.f32.mrb[0].mxu0
    %184 = vmatprep.mubr.f32.mxu0 0.0
    %185 = vmatmul.mubr.f32.gmra.mrb[0].mxu0 %v74
    %v186 = vpop.f32.mrb[0].mxu0
    %v187 = vadd.f32 0.0, %v186
    %v188 = vpop.f32.mrb[0].mxu0
    %189 = vmatprep.mubr.f32.mxu0 0.0
    %190 = vmatmul.mubr.f32.gmra.mrb[0].mxu0 %v77
    %v191 = vpop.f32.mrb[0].mxu0
    %v192 = vadd.f32 0.0, %v191
    %v193 = vpop.f32.mrb[0].mxu0
    %194 = vmatprep.mubr.f32.mxu0 0.0
    %195 = vmatmul.mubr.f32.gmra.mrb[0].mxu0 %v80
    %v196 = vpop.f32.mrb[0].mxu0
    %v197 = vadd.f32 0.0, %v196
    %v198 = vpop.f32.mrb[0].mxu0
    %199 = vmatprep.mubr.f32.mxu0 0.0
    %200 = vmatmul.mubr.f32.gmra.mrb[0].mxu0 %v83
    %v201 = vpop.f32.mrb[0].mxu0
    %v202 = vadd.f32 0.0, %v201
    %v203 = vpop.f32.mrb[0].mxu0
    %204 = vmatprep.mubr.f32.mxu0 0.0
    %205 = vmatmul.mubr.f32.gmra.mrb[0].mxu0 %v86
    %v206 = vpop.f32.mrb[0].mxu0
    %v207 = vadd.f32 0.0, %v206
    %v208 = vpop.f32.mrb[0].mxu0
    %209 = vmatprep.mubr.f32.mxu0 0.0
    %210 = vmatmul.mubr.f32.gmra.mrb[0].mxu0 %v89
    %v211 = vpop.f32.mrb[0].mxu0
    %v212 = vadd.f32 0.0, %v211
    %v213 = vpop.f32.mrb[0].mxu0
    %214 = vmatprep.mubr.f32.mxu0 0.0
    %215 = vmatmul.mubr.f32.gmra.mrb[0].mxu0 %v92
    %v216 = vpop.f32.mrb[0].mxu0
    %v217 = vadd.f32 0.0, %v216
    %v218 = vpop.f32.mrb[0].mxu0
    %219 = vmatprep.mubr.f32.mxu0 0.0
    %220 = vmatmul.mubr.f32.gmra.mrb[0].mxu0 %v95
    %v221 = vpop.f32.mrb[0].mxu0
    %v222 = vadd.f32 0.0, %v221
    %v223 = vpop.f32.mrb[0].mxu0
    %224 = vmatprep.mubr.f32.mxu0 0.0
    %225 = vmatmul.mubr.f32.gmra.mrb[0].mxu0 %v98
    %v226 = vpop.f32.mrb[0].mxu0
    %v227 = vadd.f32 0.0, %v226
    %v228 = vpop.f32.mrb[0].mxu0
    %229 = vmatprep.mubr.f32.mxu0 0.0
    %230 = vmatmul.mubr.f32.gmra.mrb[0].mxu0 %v101
    %v231 = vpop.f32.mrb[0].mxu0
    %v232 = vadd.f32 0.0, %v231
    %v233 = vpop.f32.mrb[0].mxu0
    %234 = vmatprep.mubr.f32.mxu0 0.0
    %235 = vmatmul.mubr.f32.gmra.mrb[0].mxu0 %v104
    %v236 = vpop.f32.mrb[0].mxu0
    %v237 = vadd.f32 0.0, %v236
    %v238 = vpop.f32.mrb[0].mxu0
    %239 = vdwg.mxu0
    %vm240 = vcmask 130048
    %v241 = vsel %vm240, %v177, 0.0
    %v242 = vsel %vm240, %v182, 0.0
    %v243 = vadd.f32 %v241, %v242
    %v244 = vsel %vm240, %v187, 0.0
    %v245 = vadd.f32 %v243, %v244
    %v246 = vsel %vm240, %v192, 0.0
    %v247 = vadd.f32 %v245, %v246
    %v248 = vsel %vm240, %v197, 0.0
    %v249 = vadd.f32 %v247, %v248
    %v250 = vsel %vm240, %v202, 0.0
    %v251 = vadd.f32 %v249, %v250
    %v252 = vsel %vm240, %v207, 0.0
    %v253 = vadd.f32 %v251, %v252
    %v254 = vsel %vm240, %v212, 0.0
    %v255 = vadd.f32 %v253, %v254
    %v256 = vsel %vm240, %v217, 0.0
    %v257 = vadd.f32 %v255, %v256
    %v258 = vsel %vm240, %v222, 0.0
    %v259 = vadd.f32 %v257, %v258
    %v260 = vsel %vm240, %v227, 0.0
    %v261 = vadd.f32 %v259, %v260
    %v262 = vsel %vm240, %v232, 0.0
    %v263 = vadd.f32 %v261, %v262
    %vm264 = vcmask 123904
    %v265 = vsel %vm264, %v237, 0.0
    %v266 = vadd.f32 %v263, %v265
    %v267 = vrot.slane %v266, 4
    %v268 = vadd.f32 %v266, %v267
    %v269 = vrot.slane %v268, 2
    %v270 = vadd.f32 %v268, %v269
    %v271 = vrot.slane %v270, 1
    %v272 = vadd.f32 %v270, %v271
    %v273 = vmul.f32 %v272, 0.010204081
    %v274 = vmul.f32 %v177, %v177
    %v275 = vmul.f32 %v182, %v182
    %v276 = vmul.f32 %v187, %v187
    %v277 = vmul.f32 %v192, %v192
    %v278 = vmul.f32 %v197, %v197
    %v279 = vmul.f32 %v202, %v202
    %v280 = vmul.f32 %v207, %v207
    %v281 = vmul.f32 %v212, %v212
    %v282 = vmul.f32 %v217, %v217
    %v283 = vmul.f32 %v222, %v222
    %v284 = vmul.f32 %v227, %v227
    %v285 = vmul.f32 %v232, %v232
    %v286 = vmul.f32 %v237, %v237
    %v287 = vsel %vm240, %v274, 0.0
    %v288 = vsel %vm240, %v275, 0.0
    %v289 = vadd.f32 %v287, %v288
    %v290 = vsel %vm240, %v276, 0.0
    %v291 = vadd.f32 %v289, %v290
    %v292 = vsel %vm240, %v277, 0.0
    %v293 = vadd.f32 %v291, %v292
    %v294 = vsel %vm240, %v278, 0.0
    %v295 = vadd.f32 %v293, %v294
    %v296 = vsel %vm240, %v279, 0.0
    %v297 = vadd.f32 %v295, %v296
    %v298 = vsel %vm240, %v280, 0.0
    %v299 = vadd.f32 %v297, %v298
    %v300 = vsel %vm240, %v281, 0.0
    %v301 = vadd.f32 %v299, %v300
    %v302 = vsel %vm240, %v282, 0.0
    %v303 = vadd.f32 %v301, %v302
    %v304 = vsel %vm240, %v283, 0.0
    %v305 = vadd.f32 %v303, %v304
    %v306 = vsel %vm240, %v284, 0.0
    %v307 = vadd.f32 %v305, %v306
    %v308 = vsel %vm240, %v285, 0.0
    %v309 = vadd.f32 %v307, %v308
    %v310 = vsel %vm264, %v286, 0.0
    %v311 = vadd.f32 %v309, %v310
    %v312 = vrot.slane %v311, 4
    %v313 = vadd.f32 %v311, %v312
    %v314 = vrot.slane %v313, 2
    %v315 = vadd.f32 %v313, %v314
    %v316 = vrot.slane %v315, 1
    %v317 = vadd.f32 %v315, %v316
    %v318 = vmul.f32 %v317, 0.010204081
    %v319 = vmul.f32 %v273, %v273
    %v320 = vsub.f32 %v318, %v319
    %v321 = vadd.f32 %v320, 1e-05
    %v322 = vrsqrt.pop %v321
    %v323 = vmul.f32 %v46, %v322
    %v324 = vmul.f32 %v273, %v323
    %v326 = vrot.slane %v324, 5
    %v328 = vsub.f32 %v46, %v326
    %v329 = vlaneseq
    %v330 = vshrl.u32 %v329, 7
    %v331 = vsub.s32 0, %v330
    %v332 = vrot.slane %v323, %v331
    %v333 = vmul.f32 %v177, %v332
    %v334 = vmul.f32 %v182, %v332
    %v335 = vmul.f32 %v187, %v332
    %v336 = vmul.f32 %v192, %v332
    %v337 = vmul.f32 %v197, %v332
    %v338 = vmul.f32 %v202, %v332
    %v339 = vmul.f32 %v207, %v332
    %v340 = vmul.f32 %v212, %v332
    %v341 = vmul.f32 %v217, %v332
    %v342 = vmul.f32 %v222, %v332
    %v343 = vmul.f32 %v227, %v332
    %v344 = vmul.f32 %v232, %v332
    %v345 = vmul.f32 %v237, %v332
    %v346 = vlaneseq
    %v347 = vshrl.u32 %v346, 7
    %v348 = vsub.s32 3, %v347
    %v349 = vrot.slane %v328, %v348
    %v350 = vadd.f32 %v333, %v349
    %v351 = vadd.f32 %v334, %v349
    %v352 = vadd.f32 %v335, %v349
    %v353 = vadd.f32 %v336, %v349
    %v354 = vadd.f32 %v337, %v349
    %v355 = vadd.f32 %v338, %v349
    %v356 = vadd.f32 %v339, %v349
    %v357 = vadd.f32 %v340, %v349
    %v358 = vadd.f32 %v341, %v349
    %v359 = vadd.f32 %v342, %v349
    %v360 = vadd.f32 %v343, %v349
    %v361 = vadd.f32 %v344, %v349
    %v362 = vadd.f32 %v345, %v349
    %v363 = vmax.f32 %v350, 0.0
    %v364 = vmax.f32 %v351, 0.0
    %v365 = vmax.f32 %v352, 0.0
    %v366 = vmax.f32 %v353, 0.0
    %v367 = vmax.f32 %v354, 0.0
    %v368 = vmax.f32 %v355, 0.0
    %v369 = vmax.f32 %v356, 0.0
    %v370 = vmax.f32 %v357, 0.0
    %v371 = vmax.f32 %v358, 0.0
    %v372 = vmax.f32 %v359, 0.0
    %v373 = vmax.f32 %v360, 0.0
    %v374 = vmax.f32 %v361, 0.0
    %v375 = vmax.f32 %v362, 0.0
    %v376 = vld [vmem:[%s4] sm:$0xff]
    %v377 = vld [vmem:[%s4 + $0x8] sm:$0xff]
    %v378 = vld [vmem:[%s4 + $0x10] sm:$0xff]
    %v379 = vld [vmem:[%s4 + $0x18] sm:$0xff]
    %v380 = vld [vmem:[%s4 + $0x20] sm:$0xff]
    %v381 = vld [vmem:[%s4 + $0x28] sm:$0xff]
    %v382 = vld [vmem:[%s4 + $0x30] sm:$0xff]
    %v383 = vld [vmem:[%s4 + $0x38] sm:$0xff]
    %v384 = vld [vmem:[%s4 + $0x40] sm:$0xff]
    %v385 = vld [vmem:[%s4 + $0x48] sm:$0xff]
    %v386 = vld [vmem:[%s4 + $0x50] sm:$0xff]
    %v387 = vld [vmem:[%s4 + $0x58] sm:$0xff]
    %v388 = vld [vmem:[%s4 + $0x60] sm:$0xff]
    %v389 = vld [vmem:[%s4 + $0x68] sm:$0xff]
    %v390 = vld [vmem:[%s4 + $0x70] sm:$0xff]
    %v391 = vld [vmem:[%s4 + $0x78] sm:$0xff]
    %v392 = vld [vmem:[%s4 + $0x80] sm:$0xff]
    %v393 = vld [vmem:[%s4 + $0x88] sm:$0xff]
    %v394 = vld [vmem:[%s3] sm:$0xf]
    %v395 = vld [vmem:[%s3 + $0x4] sm:$0xf]
    %v396 = vld [vmem:[%s3 + $0x8] sm:$0xf]
    %v397 = vld [vmem:[%s3 + $0xc] sm:$0xf]
    %v398 = vld [vmem:[%s3 + $0x10] sm:$0xf]
    %v399 = vld [vmem:[%s3 + $0x14] sm:$0xf]
    %v400 = vld [vmem:[%s3 + $0x18] sm:$0xf]
    %v401 = vld [vmem:[%s3 + $0x1c] sm:$0xf]
    %v402 = vld [vmem:[%s3 + $0x20] sm:$0xf]
    %v403 = vld [vmem:[%s3 + $0x24] sm:$0xf]
    %v404 = vld [vmem:[%s3 + $0x28] sm:$0xf]
    %v405 = vld [vmem:[%s3 + $0x2c] sm:$0xf]
    %v406 = vld [vmem:[%s3 + $0x30] sm:$0xf]
    %v407 = vld [vmem:[%s3 + $0x34] sm:$0xf]
    %v408 = vld [vmem:[%s3 + $0x38] sm:$0xf]
    %v409 = vld [vmem:[%s3 + $0x3c] sm:$0xf]
    %v410 = vld [vmem:[%s3 + $0x40] sm:$0xf]
    %v411 = vld [vmem:[%s3 + $0x44] sm:$0xf]
    %v412 = vld [vmem:[%s3 + $0x48] sm:$0xf]
    %v413 = vld [vmem:[%s3 + $0x4c] sm:$0xf]
    %v414 = vld [vmem:[%s3 + $0x50] sm:$0x1]
    %v436 = vunpack.c.l.b16 %v394
    %v437 = vunpack.c.l.b16 %v395
    %v438 = vunpack.c.l.b16 %v396
    %v439 = vunpack.c.l.b16 %v397
    %v440 = vunpack.c.l.b16 %v398
    %v441 = vunpack.c.l.b16 %v399
    %v442 = vunpack.c.l.b16 %v400
    %v443 = vunpack.c.l.b16 %v401
    %v444 = vunpack.c.l.b16 %v402
    %v445 = vunpack.c.l.b16 %v403
    %v446 = vunpack.c.l.b16 %v404
    %v447 = vunpack.c.l.b16 %v405
    %v448 = vunpack.c.l.b16 %v406
    %v449 = vunpack.c.l.b16 %v407
    %v450 = vunpack.c.l.b16 %v408
    %v451 = vunpack.c.l.b16 %v409
    %v452 = vunpack.c.l.b16 %v410
    %v453 = vunpack.c.l.b16 %v411
    %v454 = vunpack.c.l.b16 %v412
    %v455 = vunpack.c.l.b16 %v413
    %v456 = vunpack.c.l.b16 %v414
    %v457 = vpack.c.b16 %v437, %v436
    %v458 = vpack.c.b16 %v439, %v438
    %v459 = vpack.c.b16 %v441, %v440
    %v460 = vpack.c.b16 %v443, %v442
    %v461 = vpack.c.b16 %v445, %v444
    %v462 = vpack.c.b16 %v447, %v446
    %v463 = vpack.c.b16 %v449, %v448
    %v464 = vpack.c.b16 %v451, %v450
    %v465 = vpack.c.b16 %v453, %v452
    %v466 = vpack.c.b16 %v455, %v454
    %v467 = vpack.c.b16 %v456, %v456
    %vm468 = vcmask 801792
    %v470 = vsel %vm468, %v457, 0
    %v473 = vsel %vm468, %v458, 0
    %v476 = vsel %vm468, %v459, 0
    %v479 = vsel %vm468, %v460, 0
    %v482 = vsel %vm468, %v461, 0
    %v485 = vsel %vm468, %v462, 0
    %v488 = vsel %vm468, %v463, 0
    %v491 = vsel %vm468, %v464, 0
    %v494 = vsel %vm468, %v465, 0
    %v497 = vsel %vm468, %v466, 0
    %v500 = vsel %vm468, %v467, 0
    %vm502 = vcmask 1041408
    %v504 = vsel %vm502, %v375, 0
    %506 = vmatprep.subr.mxu0 0.0
    %507 = vmatpush1.msra.mxu0 %v363
    %508 = vmatprep.subr.mxu0 0.0
    %509 = vmatpush1.msra.mxu0 %v364
    %510 = vmatprep.subr.mxu0 0.0
    %511 = vmatpush1.msra.mxu0 %v365
    %512 = vmatprep.subr.mxu0 0.0
    %513 = vmatpush1.msra.mxu0 %v366
    %514 = vmatprep.subr.mxu0 0.0
    %515 = vmatpush1.msra.mxu0 %v367
    %516 = vmatprep.subr.mxu0 0.0
    %517 = vmatpush1.msra.mxu0 %v368
    %518 = vmatprep.subr.mxu0 0.0
    %519 = vmatpush1.msra.mxu0 %v369
    %520 = vmatprep.subr.mxu0 0.0
    %521 = vmatpush1.msra.mxu0 %v370
    %522 = vmatprep.subr.mxu0 0.0
    %523 = vmatpush1.msra.mxu0 %v371
    %524 = vmatprep.subr.mxu0 0.0
    %525 = vmatpush1.msra.mxu0 %v372
    %526 = vmatprep.subr.mxu0 0.0
    %527 = vmatpush1.msra.mxu0 %v373
    %528 = vmatprep.subr.mxu0 0.0
    %529 = vmatpush1.msra.mxu0 %v374
    %530 = vmatprep.subr.mxu0 0.0
    %531 = vmatpush1.msra.mxu0 %v504
    %532 = vmatprep.subr.mxu0 0.0
    %533 = vmatpush1.msra.mxu0 0.0
    %534 = vmatprep.subr.mxu0 0.0
    %535 = vmatpush1.msra.mxu0 0.0
    %536 = vmatprep.subr.mxu0 0.0
    %537 = vmatpush1.msra.mxu0 0.0
    %538 = vmatprep.subr.mxu0 0.0
    %539 = vmatpush1.msra.mxu0 0.0
    %540 = vmatprep.subr.mxu0 0.0
    %541 = vmatpush1.msra.mxu0 0.0
    %542 = vmatprep.subr.mxu0 0.0
    %543 = vmatpush1.msra.mxu0 0.0
    %544 = vmatprep.subr.mxu0 0.0
    %545 = vmatpush1.msra.mxu0 0.0
    %546 = vmatprep.subr.mxu0 0.0
    %547 = vmatpush1.msra.mxu0 0.0
    %548 = vmatprep.subr.mxu0 0.0
    %549 = vmatpush1.msra.mxu0 0.0
    %550 = vmatprep.subr.mxu0 0.0
    %551 = vmatpush1.msra.mxu0 0.0
    %552 = vmatprep.subr.mxu0 0.0
    %553 = vmatpush1.msra.mxu0 0.0
    %554 = vmatprep.subr.mxu0 0.0
    %555 = vmatpush1.msra.mxu0 0.0
    %556 = vmatprep.subr.mxu0 0.0
    %557 = vmatpush1.msra.mxu0 0.0
    %558 = vmatprep.subr.mxu0 0.0
    %559 = vmatpush1.msra.mxu0 0.0
    %560 = vmatprep.subr.mxu0 0.0
    %561 = vmatpush1.msra.mxu0 0.0
    %562 = vmatprep.subr.mxu0 0.0
    %563 = vmatpush1.msra.mxu0 0.0
    %564 = vmatprep.subr.mxu0 0.0
    %565 = vmatpush1.msra.mxu0 0.0
    %566 = vmatprep.subr.mxu0 0.0
    %567 = vmatpush1.msra.mxu0 0.0
    %568 = vmatprep.subr.mxu0 0.0
    %569 = vmatpush1.msra.mxu0 0.0
    %570 = vmatprep.mubr.bf16.mxu0 0
    %571 = vmatmul.mubr.bf16.gmra.mrb[0].mxu0 %v470
    %v572 = vpop.f32.mrb[0].mxu0
    %v573 = vadd.f32 0.0, %v572
    %v574 = vpop.f32.mrb[0].mxu0
    %v575 = vpop.f32.mrb[0].mxu0
    %v576 = vadd.f32 0.0, %v575
    %v577 = vpop.f32.mrb[0].mxu0
    %578 = vmatprep.mubr.bf16.mxu0 0
    %579 = vmatmul.mubr.bf16.gmra.mrb[0].mxu0 %v473
    %v580 = vpop.f32.mrb[0].mxu0
    %v581 = vadd.f32 0.0, %v580
    %v582 = vpop.f32.mrb[0].mxu0
    %v583 = vpop.f32.mrb[0].mxu0
    %v584 = vadd.f32 0.0, %v583
    %v585 = vpop.f32.mrb[0].mxu0
    %586 = vmatprep.mubr.bf16.mxu0 0
    %587 = vmatmul.mubr.bf16.gmra.mrb[0].mxu0 %v476
    %v588 = vpop.f32.mrb[0].mxu0
    %v589 = vadd.f32 0.0, %v588
    %v590 = vpop.f32.mrb[0].mxu0
    %v591 = vpop.f32.mrb[0].mxu0
    %v592 = vadd.f32 0.0, %v591
    %v593 = vpop.f32.mrb[0].mxu0
    %594 = vmatprep.mubr.bf16.mxu0 0
    %595 = vmatmul.mubr.bf16.gmra.mrb[0].mxu0 %v479
    %v596 = vpop.f32.mrb[0].mxu0
    %v597 = vadd.f32 0.0, %v596
    %v598 = vpop.f32.mrb[0].mxu0
    %v599 = vpop.f32.mrb[0].mxu0
    %v600 = vadd.f32 0.0, %v599
    %v601 = vpop.f32.mrb[0].mxu0
    %602 = vmatprep.mubr.bf16.mxu0 0
    %603 = vmatmul.mubr.bf16.gmra.mrb[0].mxu0 %v482
    %v604 = vpop.f32.mrb[0].mxu0
    %v605 = vadd.f32 0.0, %v604
    %v606 = vpop.f32.mrb[0].mxu0
    %v607 = vpop.f32.mrb[0].mxu0
    %v608 = vadd.f32 0.0, %v607
    %v609 = vpop.f32.mrb[0].mxu0
    %610 = vmatprep.mubr.bf16.mxu0 0
    %611 = vmatmul.mubr.bf16.gmra.mrb[0].mxu0 %v485
    %v612 = vpop.f32.mrb[0].mxu0
    %v613 = vadd.f32 0.0, %v612
    %v614 = vpop.f32.mrb[0].mxu0
    %v615 = vpop.f32.mrb[0].mxu0
    %v616 = vadd.f32 0.0, %v615
    %v617 = vpop.f32.mrb[0].mxu0
    %618 = vmatprep.mubr.bf16.mxu0 0
    %619 = vmatmul.mubr.bf16.gmra.mrb[0].mxu0 %v488
    %v620 = vpop.f32.mrb[0].mxu0
    %v621 = vadd.f32 0.0, %v620
    %v622 = vpop.f32.mrb[0].mxu0
    %v623 = vpop.f32.mrb[0].mxu0
    %v624 = vadd.f32 0.0, %v623
    %v625 = vpop.f32.mrb[0].mxu0
    %626 = vmatprep.mubr.bf16.mxu0 0
    %627 = vmatmul.mubr.bf16.gmra.mrb[0].mxu0 %v491
    %v628 = vpop.f32.mrb[0].mxu0
    %v629 = vadd.f32 0.0, %v628
    %v630 = vpop.f32.mrb[0].mxu0
    %v631 = vpop.f32.mrb[0].mxu0
    %v632 = vadd.f32 0.0, %v631
    %v633 = vpop.f32.mrb[0].mxu0
    %634 = vmatprep.mubr.bf16.mxu0 0
    %635 = vmatmul.mubr.bf16.gmra.mrb[0].mxu0 %v494
    %v636 = vpop.f32.mrb[0].mxu0
    %v637 = vadd.f32 0.0, %v636
    %v638 = vpop.f32.mrb[0].mxu0
    %v639 = vpop.f32.mrb[0].mxu0
    %v640 = vadd.f32 0.0, %v639
    %v641 = vpop.f32.mrb[0].mxu0
    %642 = vmatprep.mubr.bf16.mxu0 0
    %643 = vmatmul.mubr.bf16.gmra.mrb[0].mxu0 %v497
    %v644 = vpop.f32.mrb[0].mxu0
    %v645 = vadd.f32 0.0, %v644
    %v646 = vpop.f32.mrb[0].mxu0
    %v647 = vpop.f32.mrb[0].mxu0
    %v648 = vadd.f32 0.0, %v647
    %v649 = vpop.f32.mrb[0].mxu0
    %650 = vmatprep.mubr.bf16.mxu0 0
    %651 = vmatmul.mubr.bf16.gmra.mrb[0].mxu0 %v500
    %v652 = vpop.f32.mrb[0].mxu0
    %v653 = vadd.f32 0.0, %v652
    %v654 = vpop.f32.mrb[0].mxu0
    %v655 = vpop.f32.mrb[0].mxu0
    %v656 = vpop.f32.mrb[0].mxu0
    %657 = vdwg.mxu0
    %vm661 = vcmask 1045504
    %v662 = vrot.slane %v581, 2
    %v663 = vrot.slane %v584, 2
    %v664 = vsel %vm661, %v662, %v663
    %v665 = vrot.slane %v589, 2
    %v666 = vsel %vm661, %v663, %v665
    %v667 = vsel %vm240, %v664, 0
    %v669 = vsel %vm240, %v666, 0
    %v671 = vsel %vm240, %v665, 0
    %673 = vmatprep.subr.mxu0 0.0
    %674 = vmatpush1.msra.mxu0 %v378
    %675 = vmatprep.subr.mxu0 0.0
    %676 = vmatpush1.msra.mxu0 %v379
    %677 = vmatprep.subr.mxu0 0.0
    %678 = vmatpush1.msra.mxu0 0.0
    %679 = vmatprep.subr.mxu0 0.0
    %680 = vmatpush1.msra.mxu0 0.0
    %681 = vmatprep.subr.mxu0 0.0
    %682 = vmatpush1.msra.mxu0 0.0
    %683 = vmatprep.subr.mxu0 0.0
    %684 = vmatpush1.msra.mxu0 0.0
    %685 = vmatprep.subr.mxu0 0.0
    %686 = vmatpush1.msra.mxu0 0.0
    %687 = vmatprep.subr.mxu0 0.0
    %688 = vmatpush1.msra.mxu0 0.0
    %689 = vmatprep.subr.mxu0 0.0
    %690 = vmatpush1.msra.mxu0 0.0
    %691 = vmatprep.subr.mxu0 0.0
    %692 = vmatpush1.msra.mxu0 0.0
    %693 = vmatprep.subr.mxu0 0.0
    %694 = vmatpush1.msra.mxu0 0.0
    %695 = vmatprep.subr.mxu0 0.0
    %696 = vmatpush1.msra.mxu0 0.0
    %697 = vmatprep.subr.mxu0 0.0
    %698 = vmatpush1.msra.mxu0 0.0
    %699 = vmatprep.subr.mxu0 0.0
    %700 = vmatpush1.msra.mxu0 0.0
    %701 = vmatprep.subr.mxu0 0.0
    %702 = vmatpush1.msra.mxu0 0.0
    %703 = vmatprep.subr.mxu0 0.0
    %704 = vmatpush1.msra.mxu0 0.0
    %705 = vmatprep.subr.mxu0 0.0
    %706 = vmatpush1.msra.mxu0 0.0
    %707 = vmatprep.subr.mxu0 0.0
    %708 = vmatpush1.msra.mxu0 0.0
    %709 = vmatprep.subr.mxu0 0.0
    %710 = vmatpush1.msra.mxu0 0.0
    %711 = vmatprep.subr.mxu0 0.0
    %712 = vmatpush1.msra.mxu0 0.0
    %713 = vmatprep.subr.mxu0 0.0
    %714 = vmatpush1.msra.mxu0 0.0
    %715 = vmatprep.subr.mxu0 0.0
    %716 = vmatpush1.msra.mxu0 0.0
    %717 = vmatprep.subr.mxu0 0.0
    %718 = vmatpush1.msra.mxu0 0.0
    %719 = vmatprep.subr.mxu0 0.0
    %720 = vmatpush1.msra.mxu0 0.0
    %721 = vmatprep.subr.mxu0 0.0
    %722 = vmatpush1.msra.mxu0 0.0
    %723 = vmatprep.subr.mxu0 0.0
    %724 = vmatpush1.msra.mxu0 0.0
    %725 = vmatprep.subr.mxu0 0.0
    %726 = vmatpush1.msra.mxu0 0.0
    %727 = vmatprep.subr.mxu0 0.0
    %728 = vmatpush1.msra.mxu0 0.0
    %729 = vmatprep.subr.mxu0 0.0
    %730 = vmatpush1.msra.mxu0 0.0
    %731 = vmatprep.subr.mxu0 0.0
    %732 = vmatpush1.msra.mxu0 0.0
    %733 = vmatprep.subr.mxu0 0.0
    %734 = vmatpush1.msra.mxu0 0.0
    %735 = vmatprep.subr.mxu0 0.0
    %736 = vmatpush1.msra.mxu0 0.0
    %737 = vmatprep.mubr.f32.mxu0 0.0
    %738 = vmatmul.mubr.f32.gmra.mrb[0].mxu0 %v667
    %v739 = vpop.f32.mrb[0].mxu0
    %v740 = vadd.f32 0.0, %v739
    %v741 = vpop.f32.mrb[0].mxu0
    %742 = vmatprep.mubr.f32.mxu0 0.0
    %743 = vmatmul.mubr.f32.gmra.mrb[0].mxu0 %v669
    %v744 = vpop.f32.mrb[0].mxu0
    %v745 = vadd.f32 0.0, %v744
    %v746 = vpop.f32.mrb[0].mxu0
    %747 = vmatprep.mubr.f32.mxu0 0.0
    %748 = vmatmul.mubr.f32.gmra.mrb[0].mxu0 %v671
    %v749 = vpop.f32.mrb[0].mxu0
    %v750 = vadd.f32 0.0, %v749
    %v751 = vpop.f32.mrb[0].mxu0
    %752 = vdwg.mxu0
    %v754 = vsel %vm240, %v573, 0
    %v757 = vsel %vm240, %v576, 0
    %v759 = vsel %vm240, %v581, 0
    %761 = vmatprep.subr.mxu0 0.0
    %762 = vmatpush1.msra.mxu0 %v376
    %763 = vmatprep.subr.mxu0 0.0
    %764 = vmatpush1.msra.mxu0 %v377
    %765 = vmatprep.subr.mxu0 0.0
    %766 = vmatpush1.msra.mxu0 0.0
    %767 = vmatprep.subr.mxu0 0.0
    %768 = vmatpush1.msra.mxu0 0.0
    %769 = vmatprep.subr.mxu0 0.0
    %770 = vmatpush1.msra.mxu0 0.0
    %771 = vmatprep.subr.mxu0 0.0
    %772 = vmatpush1.msra.mxu0 0.0
    %773 = vmatprep.subr.mxu0 0.0
    %774 = vmatpush1.msra.mxu0 0.0
    %775 = vmatprep.subr.mxu0 0.0
    %776 = vmatpush1.msra.mxu0 0.0
    %777 = vmatprep.subr.mxu0 0.0
    %778 = vmatpush1.msra.mxu0 0.0
    %779 = vmatprep.subr.mxu0 0.0
    %780 = vmatpush1.msra.mxu0 0.0
    %781 = vmatprep.subr.mxu0 0.0
    %782 = vmatpush1.msra.mxu0 0.0
    %783 = vmatprep.subr.mxu0 0.0
    %784 = vmatpush1.msra.mxu0 0.0
    %785 = vmatprep.subr.mxu0 0.0
    %786 = vmatpush1.msra.mxu0 0.0
    %787 = vmatprep.subr.mxu0 0.0
    %788 = vmatpush1.msra.mxu0 0.0
    %789 = vmatprep.subr.mxu0 0.0
    %790 = vmatpush1.msra.mxu0 0.0
    %791 = vmatprep.subr.mxu0 0.0
    %792 = vmatpush1.msra.mxu0 0.0
    %793 = vmatprep.subr.mxu0 0.0
    %794 = vmatpush1.msra.mxu0 0.0
    %795 = vmatprep.subr.mxu0 0.0
    %796 = vmatpush1.msra.mxu0 0.0
    %797 = vmatprep.subr.mxu0 0.0
    %798 = vmatpush1.msra.mxu0 0.0
    %799 = vmatprep.subr.mxu0 0.0
    %800 = vmatpush1.msra.mxu0 0.0
    %801 = vmatprep.subr.mxu0 0.0
    %802 = vmatpush1.msra.mxu0 0.0
    %803 = vmatprep.subr.mxu0 0.0
    %804 = vmatpush1.msra.mxu0 0.0
    %805 = vmatprep.subr.mxu0 0.0
    %806 = vmatpush1.msra.mxu0 0.0
    %807 = vmatprep.subr.mxu0 0.0
    %808 = vmatpush1.msra.mxu0 0.0
    %809 = vmatprep.subr.mxu0 0.0
    %810 = vmatpush1.msra.mxu0 0.0
    %811 = vmatprep.subr.mxu0 0.0
    %812 = vmatpush1.msra.mxu0 0.0
    %813 = vmatprep.subr.mxu0 0.0
    %814 = vmatpush1.msra.mxu0 0.0
    %815 = vmatprep.subr.mxu0 0.0
    %816 = vmatpush1.msra.mxu0 0.0
    %817 = vmatprep.subr.mxu0 0.0
    %818 = vmatpush1.msra.mxu0 0.0
    %819 = vmatprep.subr.mxu0 0.0
    %820 = vmatpush1.msra.mxu0 0.0
    %821 = vmatprep.subr.mxu0 0.0
    %822 = vmatpush1.msra.mxu0 0.0
    %823 = vmatprep.subr.mxu0 0.0
    %824 = vmatpush1.msra.mxu0 0.0
    %825 = vmatprep.mubr.f32.mxu0 0.0
    %826 = vmatmul.mubr.f32.gmra.mrb[0].mxu0 %v754
    %v827 = vpop.f32.mrb[0].mxu0
    %v828 = vadd.f32 %v740, %v827
    %v829 = vpop.f32.mrb[0].mxu0
    %830 = vmatprep.mubr.f32.mxu0 0.0
    %831 = vmatmul.mubr.f32.gmra.mrb[0].mxu0 %v757
    %v832 = vpop.f32.mrb[0].mxu0
    %v833 = vadd.f32 %v745, %v832
    %v834 = vpop.f32.mrb[0].mxu0
    %835 = vmatprep.mubr.f32.mxu0 0.0
    %836 = vmatmul.mubr.f32.gmra.mrb[0].mxu0 %v759
    %v837 = vpop.f32.mrb[0].mxu0
    %v838 = vadd.f32 %v750, %v837
    %v839 = vpop.f32.mrb[0].mxu0
    %840 = vdwg.mxu0
    %v843 = vrot.slane %v589, 4
    %v844 = vrot.slane %v592, 4
    %v845 = vsel %vm106, %v843, %v844
    %v846 = vrot.slane %v597, 4
    %v847 = vsel %vm106, %v844, %v846
    %v848 = vsel %vm240, %v845, 0
    %v850 = vsel %vm240, %v847, 0
    %v852 = vsel %vm240, %v846, 0
    %854 = vmatprep.subr.mxu0 0.0
    %855 = vmatpush1.msra.mxu0 %v380
    %856 = vmatprep.subr.mxu0 0.0
    %857 = vmatpush1.msra.mxu0 %v381
    %858 = vmatprep.subr.mxu0 0.0
    %859 = vmatpush1.msra.mxu0 0.0
    %860 = vmatprep.subr.mxu0 0.0
    %861 = vmatpush1.msra.mxu0 0.0
    %862 = vmatprep.subr.mxu0 0.0
    %863 = vmatpush1.msra.mxu0 0.0
    %864 = vmatprep.subr.mxu0 0.0
    %865 = vmatpush1.msra.mxu0 0.0
    %866 = vmatprep.subr.mxu0 0.0
    %867 = vmatpush1.msra.mxu0 0.0
    %868 = vmatprep.subr.mxu0 0.0
    %869 = vmatpush1.msra.mxu0 0.0
    %870 = vmatprep.subr.mxu0 0.0
    %871 = vmatpush1.msra.mxu0 0.0
    %872 = vmatprep.subr.mxu0 0.0
    %873 = vmatpush1.msra.mxu0 0.0
    %874 = vmatprep.subr.mxu0 0.0
    %875 = vmatpush1.msra.mxu0 0.0
    %876 = vmatprep.subr.mxu0 0.0
    %877 = vmatpush1.msra.mxu0 0.0
    %878 = vmatprep.subr.mxu0 0.0
    %879 = vmatpush1.msra.mxu0 0.0
    %880 = vmatprep.subr.mxu0 0.0
    %881 = vmatpush1.msra.mxu0 0.0
    %882 = vmatprep.subr.mxu0 0.0
    %883 = vmatpush1.msra.mxu0 0.0
    %884 = vmatprep.subr.mxu0 0.0
    %885 = vmatpush1.msra.mxu0 0.0
    %886 = vmatprep.subr.mxu0 0.0
    %887 = vmatpush1.msra.mxu0 0.0
    %888 = vmatprep.subr.mxu0 0.0
    %889 = vmatpush1.msra.mxu0 0.0
    %890 = vmatprep.subr.mxu0 0.0
    %891 = vmatpush1.msra.mxu0 0.0
    %892 = vmatprep.subr.mxu0 0.0
    %893 = vmatpush1.msra.mxu0 0.0
    %894 = vmatprep.subr.mxu0 0.0
    %895 = vmatpush1.msra.mxu0 0.0
    %896 = vmatprep.subr.mxu0 0.0
    %897 = vmatpush1.msra.mxu0 0.0
    %898 = vmatprep.subr.mxu0 0.0
    %899 = vmatpush1.msra.mxu0 0.0
    %900 = vmatprep.subr.mxu0 0.0
    %901 = vmatpush1.msra.mxu0 0.0
    %902 = vmatprep.subr.mxu0 0.0
    %903 = vmatpush1.msra.mxu0 0.0
    %904 = vmatprep.subr.mxu0 0.0
    %905 = vmatpush1.msra.mxu0 0.0
    %906 = vmatprep.subr.mxu0 0.0
    %907 = vmatpush1.msra.mxu0 0.0
    %908 = vmatprep.subr.mxu0 0.0
    %909 = vmatpush1.msra.mxu0 0.0
    %910 = vmatprep.subr.mxu0 0.0
    %911 = vmatpush1.msra.mxu0 0.0
    %912 = vmatprep.subr.mxu0 0.0
    %913 = vmatpush1.msra.mxu0 0.0
    %914 = vmatprep.subr.mxu0 0.0
    %915 = vmatpush1.msra.mxu0 0.0
    %916 = vmatprep.subr.mxu0 0.0
    %917 = vmatpush1.msra.mxu0 0.0
    %918 = vmatprep.mubr.f32.mxu0 0.0
    %919 = vmatmul.mubr.f32.gmra.mrb[0].mxu0 %v848
    %v920 = vpop.f32.mrb[0].mxu0
    %v921 = vadd.f32 0.0, %v920
    %v922 = vpop.f32.mrb[0].mxu0
    %923 = vmatprep.mubr.f32.mxu0 0.0
    %924 = vmatmul.mubr.f32.gmra.mrb[0].mxu0 %v850
    %v925 = vpop.f32.mrb[0].mxu0
    %v926 = vadd.f32 0.0, %v925
    %v927 = vpop.f32.mrb[0].mxu0
    %928 = vmatprep.mubr.f32.mxu0 0.0
    %929 = vmatmul.mubr.f32.gmra.mrb[0].mxu0 %v852
    %v930 = vpop.f32.mrb[0].mxu0
    %v931 = vadd.f32 0.0, %v930
    %v932 = vpop.f32.mrb[0].mxu0
    %933 = vdwg.mxu0
    %v934 = vadd.f32 %v828, %v921
    %v935 = vadd.f32 %v833, %v926
    %v936 = vadd.f32 %v838, %v931
    %v939 = vrot.slane %v597, 6
    %v940 = vrot.slane %v600, 6
    %v941 = vsel %vm502, %v939, %v940
    %v942 = vrot.slane %v605, 6
    %v943 = vsel %vm502, %v940, %v942
    %v944 = vsel %vm240, %v941, 0
    %v946 = vsel %vm240, %v943, 0
    %v948 = vsel %vm240, %v942, 0
    %950 = vmatprep.subr.mxu0 0.0
    %951 = vmatpush1.msra.mxu0 %v382
    %952 = vmatprep.subr.mxu0 0.0
    %953 = vmatpush1.msra.mxu0 %v383
    %954 = vmatprep.subr.mxu0 0.0
    %955 = vmatpush1.msra.mxu0 0.0
    %956 = vmatprep.subr.mxu0 0.0
    %957 = vmatpush1.msra.mxu0 0.0
    %958 = vmatprep.subr.mxu0 0.0
    %959 = vmatpush1.msra.mxu0 0.0
    %960 = vmatprep.subr.mxu0 0.0
    %961 = vmatpush1.msra.mxu0 0.0
    %962 = vmatprep.subr.mxu0 0.0
    %963 = vmatpush1.msra.mxu0 0.0
    %964 = vmatprep.subr.mxu0 0.0
    %965 = vmatpush1.msra.mxu0 0.0
    %966 = vmatprep.subr.mxu0 0.0
    %967 = vmatpush1.msra.mxu0 0.0
    %968 = vmatprep.subr.mxu0 0.0
    %969 = vmatpush1.msra.mxu0 0.0
    %970 = vmatprep.subr.mxu0 0.0
    %971 = vmatpush1.msra.mxu0 0.0
    %972 = vmatprep.subr.mxu0 0.0
    %973 = vmatpush1.msra.mxu0 0.0
    %974 = vmatprep.subr.mxu0 0.0
    %975 = vmatpush1.msra.mxu0 0.0
    %976 = vmatprep.subr.mxu0 0.0
    %977 = vmatpush1.msra.mxu0 0.0
    %978 = vmatprep.subr.mxu0 0.0
    %979 = vmatpush1.msra.mxu0 0.0
    %980 = vmatprep.subr.mxu0 0.0
    %981 = vmatpush1.msra.mxu0 0.0
    %982 = vmatprep.subr.mxu0 0.0
    %983 = vmatpush1.msra.mxu0 0.0
    %984 = vmatprep.subr.mxu0 0.0
    %985 = vmatpush1.msra.mxu0 0.0
    %986 = vmatprep.subr.mxu0 0.0
    %987 = vmatpush1.msra.mxu0 0.0
    %988 = vmatprep.subr.mxu0 0.0
    %989 = vmatpush1.msra.mxu0 0.0
    %990 = vmatprep.subr.mxu0 0.0
    %991 = vmatpush1.msra.mxu0 0.0
    %992 = vmatprep.subr.mxu0 0.0
    %993 = vmatpush1.msra.mxu0 0.0
    %994 = vmatprep.subr.mxu0 0.0
    %995 = vmatpush1.msra.mxu0 0.0
    %996 = vmatprep.subr.mxu0 0.0
    %997 = vmatpush1.msra.mxu0 0.0
    %998 = vmatprep.subr.mxu0 0.0
    %999 = vmatpush1.msra.mxu0 0.0
    %1000 = vmatprep.subr.mxu0 0.0
    %1001 = vmatpush1.msra.mxu0 0.0
    %1002 = vmatprep.subr.mxu0 0.0
    %1003 = vmatpush1.msra.mxu0 0.0
    %1004 = vmatprep.subr.mxu0 0.0
    %1005 = vmatpush1.msra.mxu0 0.0
    %1006 = vmatprep.subr.mxu0 0.0
    %1007 = vmatpush1.msra.mxu0 0.0
    %1008 = vmatprep.subr.mxu0 0.0
    %1009 = vmatpush1.msra.mxu0 0.0
    %1010 = vmatprep.subr.mxu0 0.0
    %1011 = vmatpush1.msra.mxu0 0.0
    %1012 = vmatprep.subr.mxu0 0.0
    %1013 = vmatpush1.msra.mxu0 0.0
    %1014 = vmatprep.mubr.f32.mxu0 0.0
    %1015 = vmatmul.mubr.f32.gmra.mrb[0].mxu0 %v944
    %v1016 = vpop.f32.mrb[0].mxu0
    %v1017 = vadd.f32 0.0, %v1016
    %v1018 = vpop.f32.mrb[0].mxu0
    %1019 = vmatprep.mubr.f32.mxu0 0.0
    %1020 = vmatmul.mubr.f32.gmra.mrb[0].mxu0 %v946
    %v1021 = vpop.f32.mrb[0].mxu0
    %v1022 = vadd.f32 0.0, %v1021
    %v1023 = vpop.f32.mrb[0].mxu0
    %1024 = vmatprep.mubr.f32.mxu0 0.0
    %1025 = vmatmul.mubr.f32.gmra.mrb[0].mxu0 %v948
    %v1026 = vpop.f32.mrb[0].mxu0
    %v1027 = vadd.f32 0.0, %v1026
    %v1028 = vpop.f32.mrb[0].mxu0
    %1029 = vdwg.mxu0
    %v1030 = vadd.f32 %v934, %v1017
    %v1031 = vadd.f32 %v935, %v1022
    %v1032 = vadd.f32 %v936, %v1027
    %v1034 = vsel %vm240, %v608, 0
    %v1037 = vsel %vm240, %v613, 0
    %v1040 = vsel %vm240, %v616, 0
    %1042 = vmatprep.subr.mxu0 0.0
    %1043 = vmatpush1.msra.mxu0 %v384
    %1044 = vmatprep.subr.mxu0 0.0
    %1045 = vmatpush1.msra.mxu0 %v385
    %1046 = vmatprep.subr.mxu0 0.0
    %1047 = vmatpush1.msra.mxu0 0.0
    %1048 = vmatprep.subr.mxu0 0.0
    %1049 = vmatpush1.msra.mxu0 0.0
    %1050 = vmatprep.subr.mxu0 0.0
    %1051 = vmatpush1.msra.mxu0 0.0
    %1052 = vmatprep.subr.mxu0 0.0
    %1053 = vmatpush1.msra.mxu0 0.0
    %1054 = vmatprep.subr.mxu0 0.0
    %1055 = vmatpush1.msra.mxu0 0.0
    %1056 = vmatprep.subr.mxu0 0.0
    %1057 = vmatpush1.msra.mxu0 0.0
    %1058 = vmatprep.subr.mxu0 0.0
    %1059 = vmatpush1.msra.mxu0 0.0
    %1060 = vmatprep.subr.mxu0 0.0
    %1061 = vmatpush1.msra.mxu0 0.0
    %1062 = vmatprep.subr.mxu0 0.0
    %1063 = vmatpush1.msra.mxu0 0.0
    %1064 = vmatprep.subr.mxu0 0.0
    %1065 = vmatpush1.msra.mxu0 0.0
    %1066 = vmatprep.subr.mxu0 0.0
    %1067 = vmatpush1.msra.mxu0 0.0
    %1068 = vmatprep.subr.mxu0 0.0
    %1069 = vmatpush1.msra.mxu0 0.0
    %1070 = vmatprep.subr.mxu0 0.0
    %1071 = vmatpush1.msra.mxu0 0.0
    %1072 = vmatprep.subr.mxu0 0.0
    %1073 = vmatpush1.msra.mxu0 0.0
    %1074 = vmatprep.subr.mxu0 0.0
    %1075 = vmatpush1.msra.mxu0 0.0
    %1076 = vmatprep.subr.mxu0 0.0
    %1077 = vmatpush1.msra.mxu0 0.0
    %1078 = vmatprep.subr.mxu0 0.0
    %1079 = vmatpush1.msra.mxu0 0.0
    %1080 = vmatprep.subr.mxu0 0.0
    %1081 = vmatpush1.msra.mxu0 0.0
    %1082 = vmatprep.subr.mxu0 0.0
    %1083 = vmatpush1.msra.mxu0 0.0
    %1084 = vmatprep.subr.mxu0 0.0
    %1085 = vmatpush1.msra.mxu0 0.0
    %1086 = vmatprep.subr.mxu0 0.0
    %1087 = vmatpush1.msra.mxu0 0.0
    %1088 = vmatprep.subr.mxu0 0.0
    %1089 = vmatpush1.msra.mxu0 0.0
    %1090 = vmatprep.subr.mxu0 0.0
    %1091 = vmatpush1.msra.mxu0 0.0
    %1092 = vmatprep.subr.mxu0 0.0
    %1093 = vmatpush1.msra.mxu0 0.0
    %1094 = vmatprep.subr.mxu0 0.0
    %1095 = vmatpush1.msra.mxu0 0.0
    %1096 = vmatprep.subr.mxu0 0.0
    %1097 = vmatpush1.msra.mxu0 0.0
    %1098 = vmatprep.subr.mxu0 0.0
    %1099 = vmatpush1.msra.mxu0 0.0
    %1100 = vmatprep.subr.mxu0 0.0
    %1101 = vmatpush1.msra.mxu0 0.0
    %1102 = vmatprep.subr.mxu0 0.0
    %1103 = vmatpush1.msra.mxu0 0.0
    %1104 = vmatprep.subr.mxu0 0.0
    %1105 = vmatpush1.msra.mxu0 0.0
    %1106 = vmatprep.mubr.f32.mxu0 0.0
    %1107 = vmatmul.mubr.f32.gmra.mrb[0].mxu0 %v1034
    %v1108 = vpop.f32.mrb[0].mxu0
    %v1109 = vadd.f32 0.0, %v1108
    %v1110 = vpop.f32.mrb[0].mxu0
    %1111 = vmatprep.mubr.f32.mxu0 0.0
    %1112 = vmatmul.mubr.f32.gmra.mrb[0].mxu0 %v1037
    %v1113 = vpop.f32.mrb[0].mxu0
    %v1114 = vadd.f32 0.0, %v1113
    %v1115 = vpop.f32.mrb[0].mxu0
    %1116 = vmatprep.mubr.f32.mxu0 0.0
    %1117 = vmatmul.mubr.f32.gmra.mrb[0].mxu0 %v1040
    %v1118 = vpop.f32.mrb[0].mxu0
    %v1119 = vadd.f32 0.0, %v1118
    %v1120 = vpop.f32.mrb[0].mxu0
    %1121 = vdwg.mxu0
    %v1122 = vadd.f32 %v1030, %v1109
    %v1123 = vadd.f32 %v1031, %v1114
    %v1124 = vadd.f32 %v1032, %v1119
    %v1127 = vrot.slane %v616, 2
    %v1128 = vrot.slane %v621, 2
    %v1129 = vsel %vm661, %v1127, %v1128
    %v1130 = vrot.slane %v624, 2
    %v1131 = vsel %vm661, %v1128, %v1130
    %v1132 = vsel %vm240, %v1129, 0
    %v1134 = vsel %vm240, %v1131, 0
    %v1136 = vsel %vm240, %v1130, 0
    %1138 = vmatprep.subr.mxu0 0.0
    %1139 = vmatpush1.msra.mxu0 %v386
    %1140 = vmatprep.subr.mxu0 0.0
    %1141 = vmatpush1.msra.mxu0 %v387
    %1142 = vmatprep.subr.mxu0 0.0
    %1143 = vmatpush1.msra.mxu0 0.0
    %1144 = vmatprep.subr.mxu0 0.0
    %1145 = vmatpush1.msra.mxu0 0.0
    %1146 = vmatprep.subr.mxu0 0.0
    %1147 = vmatpush1.msra.mxu0 0.0
    %1148 = vmatprep.subr.mxu0 0.0
    %1149 = vmatpush1.msra.mxu0 0.0
    %1150 = vmatprep.subr.mxu0 0.0
    %1151 = vmatpush1.msra.mxu0 0.0
    %1152 = vmatprep.subr.mxu0 0.0
    %1153 = vmatpush1.msra.mxu0 0.0
    %1154 = vmatprep.subr.mxu0 0.0
    %1155 = vmatpush1.msra.mxu0 0.0
    %1156 = vmatprep.subr.mxu0 0.0
    %1157 = vmatpush1.msra.mxu0 0.0
    %1158 = vmatprep.subr.mxu0 0.0
    %1159 = vmatpush1.msra.mxu0 0.0
    %1160 = vmatprep.subr.mxu0 0.0
    %1161 = vmatpush1.msra.mxu0 0.0
    %1162 = vmatprep.subr.mxu0 0.0
    %1163 = vmatpush1.msra.mxu0 0.0
    %1164 = vmatprep.subr.mxu0 0.0
    %1165 = vmatpush1.msra.mxu0 0.0
    %1166 = vmatprep.subr.mxu0 0.0
    %1167 = vmatpush1.msra.mxu0 0.0
    %1168 = vmatprep.subr.mxu0 0.0
    %1169 = vmatpush1.msra.mxu0 0.0
    %1170 = vmatprep.subr.mxu0 0.0
    %1171 = vmatpush1.msra.mxu0 0.0
    %1172 = vmatprep.subr.mxu0 0.0
    %1173 = vmatpush1.msra.mxu0 0.0
    %1174 = vmatprep.subr.mxu0 0.0
    %1175 = vmatpush1.msra.mxu0 0.0
    %1176 = vmatprep.subr.mxu0 0.0
    %1177 = vmatpush1.msra.mxu0 0.0
    %1178 = vmatprep.subr.mxu0 0.0
    %1179 = vmatpush1.msra.mxu0 0.0
    %1180 = vmatprep.subr.mxu0 0.0
    %1181 = vmatpush1.msra.mxu0 0.0
    %1182 = vmatprep.subr.mxu0 0.0
    %1183 = vmatpush1.msra.mxu0 0.0
    %1184 = vmatprep.subr.mxu0 0.0
    %1185 = vmatpush1.msra.mxu0 0.0
    %1186 = vmatprep.subr.mxu0 0.0
    %1187 = vmatpush1.msra.mxu0 0.0
    %1188 = vmatprep.subr.mxu0 0.0
    %1189 = vmatpush1.msra.mxu0 0.0
    %1190 = vmatprep.subr.mxu0 0.0
    %1191 = vmatpush1.msra.mxu0 0.0
    %1192 = vmatprep.subr.mxu0 0.0
    %1193 = vmatpush1.msra.mxu0 0.0
    %1194 = vmatprep.subr.mxu0 0.0
    %1195 = vmatpush1.msra.mxu0 0.0
    %1196 = vmatprep.subr.mxu0 0.0
    %1197 = vmatpush1.msra.mxu0 0.0
    %1198 = vmatprep.subr.mxu0 0.0
    %1199 = vmatpush1.msra.mxu0 0.0
    %1200 = vmatprep.subr.mxu0 0.0
    %1201 = vmatpush1.msra.mxu0 0.0
    %1202 = vmatprep.mubr.f32.mxu0 0.0
    %1203 = vmatmul.mubr.f32.gmra.mrb[0].mxu0 %v1132
    %v1204 = vpop.f32.mrb[0].mxu0
    %v1205 = vadd.f32 0.0, %v1204
    %v1206 = vpop.f32.mrb[0].mxu0
    %1207 = vmatprep.mubr.f32.mxu0 0.0
    %1208 = vmatmul.mubr.f32.gmra.mrb[0].mxu0 %v1134
    %v1209 = vpop.f32.mrb[0].mxu0
    %v1210 = vadd.f32 0.0, %v1209
    %v1211 = vpop.f32.mrb[0].mxu0
    %1212 = vmatprep.mubr.f32.mxu0 0.0
    %1213 = vmatmul.mubr.f32.gmra.mrb[0].mxu0 %v1136
    %v1214 = vpop.f32.mrb[0].mxu0
    %v1215 = vadd.f32 0.0, %v1214
    %v1216 = vpop.f32.mrb[0].mxu0
    %1217 = vdwg.mxu0
    %v1218 = vadd.f32 %v1122, %v1205
    %v1219 = vadd.f32 %v1123, %v1210
    %v1220 = vadd.f32 %v1124, %v1215
    %v1223 = vrot.slane %v624, 4
    %v1224 = vrot.slane %v629, 4
    %v1225 = vsel %vm106, %v1223, %v1224
    %v1226 = vrot.slane %v632, 4
    %v1227 = vsel %vm106, %v1224, %v1226
    %v1228 = vsel %vm240, %v1225, 0
    %v1230 = vsel %vm240, %v1227, 0
    %v1232 = vsel %vm240, %v1226, 0
    %1234 = vmatprep.subr.mxu0 0.0
    %1235 = vmatpush1.msra.mxu0 %v388
    %1236 = vmatprep.subr.mxu0 0.0
    %1237 = vmatpush1.msra.mxu0 %v389
    %1238 = vmatprep.subr.mxu0 0.0
    %1239 = vmatpush1.msra.mxu0 0.0
    %1240 = vmatprep.subr.mxu0 0.0
    %1241 = vmatpush1.msra.mxu0 0.0
    %1242 = vmatprep.subr.mxu0 0.0
    %1243 = vmatpush1.msra.mxu0 0.0
    %1244 = vmatprep.subr.mxu0 0.0
    %1245 = vmatpush1.msra.mxu0 0.0
    %1246 = vmatprep.subr.mxu0 0.0
    %1247 = vmatpush1.msra.mxu0 0.0
    %1248 = vmatprep.subr.mxu0 0.0
    %1249 = vmatpush1.msra.mxu0 0.0
    %1250 = vmatprep.subr.mxu0 0.0
    %1251 = vmatpush1.msra.mxu0 0.0
    %1252 = vmatprep.subr.mxu0 0.0
    %1253 = vmatpush1.msra.mxu0 0.0
    %1254 = vmatprep.subr.mxu0 0.0
    %1255 = vmatpush1.msra.mxu0 0.0
    %1256 = vmatprep.subr.mxu0 0.0
    %1257 = vmatpush1.msra.mxu0 0.0
    %1258 = vmatprep.subr.mxu0 0.0
    %1259 = vmatpush1.msra.mxu0 0.0
    %1260 = vmatprep.subr.mxu0 0.0
    %1261 = vmatpush1.msra.mxu0 0.0
    %1262 = vmatprep.subr.mxu0 0.0
    %1263 = vmatpush1.msra.mxu0 0.0
    %1264 = vmatprep.subr.mxu0 0.0
    %1265 = vmatpush1.msra.mxu0 0.0
    %1266 = vmatprep.subr.mxu0 0.0
    %1267 = vmatpush1.msra.mxu0 0.0
    %1268 = vmatprep.subr.mxu0 0.0
    %1269 = vmatpush1.msra.mxu0 0.0
    %1270 = vmatprep.subr.mxu0 0.0
    %1271 = vmatpush1.msra.mxu0 0.0
    %1272 = vmatprep.subr.mxu0 0.0
    %1273 = vmatpush1.msra.mxu0 0.0
    %1274 = vmatprep.subr.mxu0 0.0
    %1275 = vmatpush1.msra.mxu0 0.0
    %1276 = vmatprep.subr.mxu0 0.0
    %1277 = vmatpush1.msra.mxu0 0.0
    %1278 = vmatprep.subr.mxu0 0.0
    %1279 = vmatpush1.msra.mxu0 0.0
    %1280 = vmatprep.subr.mxu0 0.0
    %1281 = vmatpush1.msra.mxu0 0.0
    %1282 = vmatprep.subr.mxu0 0.0
    %1283 = vmatpush1.msra.mxu0 0.0
    %1284 = vmatprep.subr.mxu0 0.0
    %1285 = vmatpush1.msra.mxu0 0.0
    %1286 = vmatprep.subr.mxu0 0.0
    %1287 = vmatpush1.msra.mxu0 0.0
    %1288 = vmatprep.subr.mxu0 0.0
    %1289 = vmatpush1.msra.mxu0 0.0
    %1290 = vmatprep.subr.mxu0 0.0
    %1291 = vmatpush1.msra.mxu0 0.0
    %1292 = vmatprep.subr.mxu0 0.0
    %1293 = vmatpush1.msra.mxu0 0.0
    %1294 = vmatprep.subr.mxu0 0.0
    %1295 = vmatpush1.msra.mxu0 0.0
    %1296 = vmatprep.subr.mxu0 0.0
    %1297 = vmatpush1.msra.mxu0 0.0
    %1298 = vmatprep.mubr.f32.mxu0 0.0
    %1299 = vmatmul.mubr.f32.gmra.mrb[0].mxu0 %v1228
    %v1300 = vpop.f32.mrb[0].mxu0
    %v1301 = vadd.f32 0.0, %v1300
    %v1302 = vpop.f32.mrb[0].mxu0
    %1303 = vmatprep.mubr.f32.mxu0 0.0
    %1304 = vmatmul.mubr.f32.gmra.mrb[0].mxu0 %v1230
    %v1305 = vpop.f32.mrb[0].mxu0
    %v1306 = vadd.f32 0.0, %v1305
    %v1307 = vpop.f32.mrb[0].mxu0
    %1308 = vmatprep.mubr.f32.mxu0 0.0
    %1309 = vmatmul.mubr.f32.gmra.mrb[0].mxu0 %v1232
    %v1310 = vpop.f32.mrb[0].mxu0
    %v1311 = vadd.f32 0.0, %v1310
    %v1312 = vpop.f32.mrb[0].mxu0
    %1313 = vdwg.mxu0
    %v1314 = vadd.f32 %v1218, %v1301
    %v1315 = vadd.f32 %v1219, %v1306
    %v1316 = vadd.f32 %v1220, %v1311
    %v1319 = vrot.slane %v632, 6
    %v1320 = vrot.slane %v637, 6
    %v1321 = vsel %vm502, %v1319, %v1320
    %v1322 = vrot.slane %v640, 6
    %v1323 = vsel %vm502, %v1320, %v1322
    %v1324 = vsel %vm240, %v1321, 0
    %v1326 = vsel %vm240, %v1323, 0
    %v1328 = vsel %vm240, %v1322, 0
    %1330 = vmatprep.subr.mxu0 0.0
    %1331 = vmatpush1.msra.mxu0 %v390
    %1332 = vmatprep.subr.mxu0 0.0
    %1333 = vmatpush1.msra.mxu0 %v391
    %1334 = vmatprep.subr.mxu0 0.0
    %1335 = vmatpush1.msra.mxu0 0.0
    %1336 = vmatprep.subr.mxu0 0.0
    %1337 = vmatpush1.msra.mxu0 0.0
    %1338 = vmatprep.subr.mxu0 0.0
    %1339 = vmatpush1.msra.mxu0 0.0
    %1340 = vmatprep.subr.mxu0 0.0
    %1341 = vmatpush1.msra.mxu0 0.0
    %1342 = vmatprep.subr.mxu0 0.0
    %1343 = vmatpush1.msra.mxu0 0.0
    %1344 = vmatprep.subr.mxu0 0.0
    %1345 = vmatpush1.msra.mxu0 0.0
    %1346 = vmatprep.subr.mxu0 0.0
    %1347 = vmatpush1.msra.mxu0 0.0
    %1348 = vmatprep.subr.mxu0 0.0
    %1349 = vmatpush1.msra.mxu0 0.0
    %1350 = vmatprep.subr.mxu0 0.0
    %1351 = vmatpush1.msra.mxu0 0.0
    %1352 = vmatprep.subr.mxu0 0.0
    %1353 = vmatpush1.msra.mxu0 0.0
    %1354 = vmatprep.subr.mxu0 0.0
    %1355 = vmatpush1.msra.mxu0 0.0
    %1356 = vmatprep.subr.mxu0 0.0
    %1357 = vmatpush1.msra.mxu0 0.0
    %1358 = vmatprep.subr.mxu0 0.0
    %1359 = vmatpush1.msra.mxu0 0.0
    %1360 = vmatprep.subr.mxu0 0.0
    %1361 = vmatpush1.msra.mxu0 0.0
    %1362 = vmatprep.subr.mxu0 0.0
    %1363 = vmatpush1.msra.mxu0 0.0
    %1364 = vmatprep.subr.mxu0 0.0
    %1365 = vmatpush1.msra.mxu0 0.0
    %1366 = vmatprep.subr.mxu0 0.0
    %1367 = vmatpush1.msra.mxu0 0.0
    %1368 = vmatprep.subr.mxu0 0.0
    %1369 = vmatpush1.msra.mxu0 0.0
    %1370 = vmatprep.subr.mxu0 0.0
    %1371 = vmatpush1.msra.mxu0 0.0
    %1372 = vmatprep.subr.mxu0 0.0
    %1373 = vmatpush1.msra.mxu0 0.0
    %1374 = vmatprep.subr.mxu0 0.0
    %1375 = vmatpush1.msra.mxu0 0.0
    %1376 = vmatprep.subr.mxu0 0.0
    %1377 = vmatpush1.msra.mxu0 0.0
    %1378 = vmatprep.subr.mxu0 0.0
    %1379 = vmatpush1.msra.mxu0 0.0
    %1380 = vmatprep.subr.mxu0 0.0
    %1381 = vmatpush1.msra.mxu0 0.0
    %1382 = vmatprep.subr.mxu0 0.0
    %1383 = vmatpush1.msra.mxu0 0.0
    %1384 = vmatprep.subr.mxu0 0.0
    %1385 = vmatpush1.msra.mxu0 0.0
    %1386 = vmatprep.subr.mxu0 0.0
    %1387 = vmatpush1.msra.mxu0 0.0
    %1388 = vmatprep.subr.mxu0 0.0
    %1389 = vmatpush1.msra.mxu0 0.0
    %1390 = vmatprep.subr.mxu0 0.0
    %1391 = vmatpush1.msra.mxu0 0.0
    %1392 = vmatprep.subr.mxu0 0.0
    %1393 = vmatpush1.msra.mxu0 0.0
    %1394 = vmatprep.mubr.f32.mxu0 0.0
    %1395 = vmatmul.mubr.f32.gmra.mrb[0].mxu0 %v1324
    %v1396 = vpop.f32.mrb[0].mxu0
    %v1397 = vadd.f32 0.0, %v1396
    %v1398 = vpop.f32.mrb[0].mxu0
    %1399 = vmatprep.mubr.f32.mxu0 0.0
    %1400 = vmatmul.mubr.f32.gmra.mrb[0].mxu0 %v1326
    %v1401 = vpop.f32.mrb[0].mxu0
    %v1402 = vadd.f32 0.0, %v1401
    %v1403 = vpop.f32.mrb[0].mxu0
    %1404 = vmatprep.mubr.f32.mxu0 0.0
    %1405 = vmatmul.mubr.f32.gmra.mrb[0].mxu0 %v1328
    %v1406 = vpop.f32.mrb[0].mxu0
    %v1407 = vadd.f32 0.0, %v1406
    %v1408 = vpop.f32.mrb[0].mxu0
    %1409 = vdwg.mxu0
    %v1410 = vadd.f32 %v1314, %v1397
    %v1411 = vadd.f32 %v1315, %v1402
    %v1412 = vadd.f32 %v1316, %v1407
    %v1414 = vsel %vm240, %v645, 0
    %v1417 = vsel %vm240, %v648, 0
    %v1420 = vsel %vm240, %v653, 0
    %1422 = vmatprep.subr.mxu0 0.0
    %1423 = vmatpush1.msra.mxu0 %v392
    %1424 = vmatprep.subr.mxu0 0.0
    %1425 = vmatpush1.msra.mxu0 %v393
    %1426 = vmatprep.subr.mxu0 0.0
    %1427 = vmatpush1.msra.mxu0 0.0
    %1428 = vmatprep.subr.mxu0 0.0
    %1429 = vmatpush1.msra.mxu0 0.0
    %1430 = vmatprep.subr.mxu0 0.0
    %1431 = vmatpush1.msra.mxu0 0.0
    %1432 = vmatprep.subr.mxu0 0.0
    %1433 = vmatpush1.msra.mxu0 0.0
    %1434 = vmatprep.subr.mxu0 0.0
    %1435 = vmatpush1.msra.mxu0 0.0
    %1436 = vmatprep.subr.mxu0 0.0
    %1437 = vmatpush1.msra.mxu0 0.0
    %1438 = vmatprep.subr.mxu0 0.0
    %1439 = vmatpush1.msra.mxu0 0.0
    %1440 = vmatprep.subr.mxu0 0.0
    %1441 = vmatpush1.msra.mxu0 0.0
    %1442 = vmatprep.subr.mxu0 0.0
    %1443 = vmatpush1.msra.mxu0 0.0
    %1444 = vmatprep.subr.mxu0 0.0
    %1445 = vmatpush1.msra.mxu0 0.0
    %1446 = vmatprep.subr.mxu0 0.0
    %1447 = vmatpush1.msra.mxu0 0.0
    %1448 = vmatprep.subr.mxu0 0.0
    %1449 = vmatpush1.msra.mxu0 0.0
    %1450 = vmatprep.subr.mxu0 0.0
    %1451 = vmatpush1.msra.mxu0 0.0
    %1452 = vmatprep.subr.mxu0 0.0
    %1453 = vmatpush1.msra.mxu0 0.0
    %1454 = vmatprep.subr.mxu0 0.0
    %1455 = vmatpush1.msra.mxu0 0.0
    %1456 = vmatprep.subr.mxu0 0.0
    %1457 = vmatpush1.msra.mxu0 0.0
    %1458 = vmatprep.subr.mxu0 0.0
    %1459 = vmatpush1.msra.mxu0 0.0
    %1460 = vmatprep.subr.mxu0 0.0
    %1461 = vmatpush1.msra.mxu0 0.0
    %1462 = vmatprep.subr.mxu0 0.0
    %1463 = vmatpush1.msra.mxu0 0.0
    %1464 = vmatprep.subr.mxu0 0.0
    %1465 = vmatpush1.msra.mxu0 0.0
    %1466 = vmatprep.subr.mxu0 0.0
    %1467 = vmatpush1.msra.mxu0 0.0
    %1468 = vmatprep.subr.mxu0 0.0
    %1469 = vmatpush1.msra.mxu0 0.0
    %1470 = vmatprep.subr.mxu0 0.0
    %1471 = vmatpush1.msra.mxu0 0.0
    %1472 = vmatprep.subr.mxu0 0.0
    %1473 = vmatpush1.msra.mxu0 0.0
    %1474 = vmatprep.subr.mxu0 0.0
    %1475 = vmatpush1.msra.mxu0 0.0
    %1476 = vmatprep.subr.mxu0 0.0
    %1477 = vmatpush1.msra.mxu0 0.0
    %1478 = vmatprep.subr.mxu0 0.0
    %1479 = vmatpush1.msra.mxu0 0.0
    %1480 = vmatprep.subr.mxu0 0.0
    %1481 = vmatpush1.msra.mxu0 0.0
    %1482 = vmatprep.subr.mxu0 0.0
    %1483 = vmatpush1.msra.mxu0 0.0
    %1484 = vmatprep.subr.mxu0 0.0
    %1485 = vmatpush1.msra.mxu0 0.0
    %1486 = vmatprep.mubr.f32.mxu0 0.0
    %1487 = vmatmul.mubr.f32.gmra.mrb[0].mxu0 %v1414
    %v1488 = vpop.f32.mrb[0].mxu0
    %v1489 = vadd.f32 0.0, %v1488
    %v1490 = vpop.f32.mrb[0].mxu0
    %1491 = vmatprep.mubr.f32.mxu0 0.0
    %1492 = vmatmul.mubr.f32.gmra.mrb[0].mxu0 %v1417
    %v1493 = vpop.f32.mrb[0].mxu0
    %v1494 = vadd.f32 0.0, %v1493
    %v1495 = vpop.f32.mrb[0].mxu0
    %1496 = vmatprep.mubr.f32.mxu0 0.0
    %1497 = vmatmul.mubr.f32.gmra.mrb[0].mxu0 %v1420
    %v1498 = vpop.f32.mrb[0].mxu0
    %v1499 = vadd.f32 0.0, %v1498
    %v1500 = vpop.f32.mrb[0].mxu0
    %1501 = vdwg.mxu0
    %v1502 = vadd.f32 %v1410, %v1489
    %v1503 = vadd.f32 %v1411, %v1494
    %v1504 = vadd.f32 %v1412, %v1499
    %v1505 = vsel %vm240, %v1502, 0.0
    %v1506 = vsel %vm240, %v1503, 0.0
    %v1507 = vadd.f32 %v1505, %v1506
    %v1508 = vsel %vm264, %v1504, 0.0
    %v1509 = vadd.f32 %v1507, %v1508
    %v1510 = vrot.slane %v1509, 4
    %v1511 = vadd.f32 %v1509, %v1510
    %v1512 = vrot.slane %v1511, 2
    %v1513 = vadd.f32 %v1511, %v1512
    %v1514 = vrot.slane %v1513, 1
    %v1515 = vadd.f32 %v1513, %v1514
    %v1516 = vmul.f32 %v1515, 0.055555556
    %v1517 = vmul.f32 %v1502, %v1502
    %v1518 = vmul.f32 %v1503, %v1503
    %v1519 = vmul.f32 %v1504, %v1504
    %v1520 = vsel %vm240, %v1517, 0.0
    %v1521 = vsel %vm240, %v1518, 0.0
    %v1522 = vadd.f32 %v1520, %v1521
    %v1523 = vsel %vm264, %v1519, 0.0
    %v1524 = vadd.f32 %v1522, %v1523
    %v1525 = vrot.slane %v1524, 4
    %v1526 = vadd.f32 %v1524, %v1525
    %v1527 = vrot.slane %v1526, 2
    %v1528 = vadd.f32 %v1526, %v1527
    %v1529 = vrot.slane %v1528, 1
    %v1530 = vadd.f32 %v1528, %v1529
    %v1531 = vmul.f32 %v1530, 0.055555556
    %v1532 = vmul.f32 %v1516, %v1516
    %v1533 = vsub.f32 %v1531, %v1532
    %v1534 = vadd.f32 %v1533, 1e-05
    %v1535 = vrsqrt.pop %v1534
    %v1536 = vmul.f32 %v46, %v1535
    %v1537 = vmul.f32 %v1516, %v1536
    %v1539 = vrot.slane %v1537, 5
    %v1541 = vsub.f32 %v46, %v1539
    %v1542 = vlaneseq
    %v1543 = vshrl.u32 %v1542, 7
    %v1544 = vsub.s32 1, %v1543
    %v1545 = vrot.slane %v1536, %v1544
    %v1546 = vmul.f32 %v1502, %v1545
    %v1547 = vmul.f32 %v1503, %v1545
    %v1548 = vmul.f32 %v1504, %v1545
    %v1549 = vlaneseq
    %v1550 = vshrl.u32 %v1549, 7
    %v1551 = vsub.s32 4, %v1550
    %v1552 = vrot.slane %v1541, %v1551
    %v1553 = vadd.f32 %v1546, %v1552
    %v1554 = vadd.f32 %v1547, %v1552
    %v1555 = vadd.f32 %v1548, %v1552
    %v1556 = vmax.f32 %v1553, 0.0
    %v1557 = vmax.f32 %v1554, 0.0
    %v1558 = vmax.f32 %v1555, 0.0
    %v1559 = vld [vmem:[%s6] sm:$0xff]
    %v1560 = vld [vmem:[%s6 + $0x8] sm:$0xff]
    %v1561 = vld [vmem:[%s6 + $0x10] sm:$0xff]
    %v1562 = vld [vmem:[%s6 + $0x18] sm:$0xff]
    %v1563 = vld [vmem:[%s6 + $0x20] sm:$0xff]
    %v1564 = vld [vmem:[%s6 + $0x28] sm:$0xff]
    %v1565 = vld [vmem:[%s6 + $0x30] sm:$0xff]
    %v1566 = vld [vmem:[%s6 + $0x38] sm:$0xff]
    %v1567 = vld [vmem:[%s6 + $0x40] sm:$0xff]
    %v1568 = vld [vmem:[%s6 + $0x48] sm:$0xff]
    %v1569 = vld [vmem:[%s6 + $0x50] sm:$0xff]
    %v1570 = vld [vmem:[%s6 + $0x58] sm:$0xff]
    %v1571 = vld [vmem:[%s6 + $0x60] sm:$0xff]
    %v1572 = vld [vmem:[%s6 + $0x68] sm:$0xff]
    %v1573 = vld [vmem:[%s6 + $0x70] sm:$0xff]
    %v1574 = vld [vmem:[%s6 + $0x78] sm:$0xff]
    %v1575 = vld [vmem:[%s6 + $0x80] sm:$0xff]
    %v1576 = vld [vmem:[%s6 + $0x88] sm:$0xff]
    %v1577 = vld [vmem:[%s5] sm:$0xf]
    %v1578 = vld [vmem:[%s5 + $0x4] sm:$0xf]
    %v1579 = vld [vmem:[%s5 + $0x8] sm:$0x1]
    %v1583 = vunpack.c.l.b16 %v1577
    %v1584 = vunpack.c.l.b16 %v1578
    %v1585 = vunpack.c.l.b16 %v1579
    %v1586 = vpack.c.b16 %v1584, %v1583
    %v1587 = vpack.c.b16 %v1585, %v1585
    %vm1588 = vcmask 146432
    %v1590 = vsel %vm1588, %v1586, 0
    %v1593 = vsel %vm1588, %v1587, 0
    %v1596 = vsel %vm502, %v1558, 0
    %1598 = vmatprep.subr.mxu0 0.0
    %1599 = vmatpush1.msra.mxu0 %v1556
    %1600 = vmatprep.subr.mxu0 0.0
    %1601 = vmatpush1.msra.mxu0 %v1557
    %1602 = vmatprep.subr.mxu0 0.0
    %1603 = vmatpush1.msra.mxu0 %v1596
    %1604 = vmatprep.subr.mxu0 0.0
    %1605 = vmatpush1.msra.mxu0 0.0
    %1606 = vmatprep.subr.mxu0 0.0
    %1607 = vmatpush1.msra.mxu0 0.0
    %1608 = vmatprep.subr.mxu0 0.0
    %1609 = vmatpush1.msra.mxu0 0.0
    %1610 = vmatprep.subr.mxu0 0.0
    %1611 = vmatpush1.msra.mxu0 0.0
    %1612 = vmatprep.subr.mxu0 0.0
    %1613 = vmatpush1.msra.mxu0 0.0
    %1614 = vmatprep.subr.mxu0 0.0
    %1615 = vmatpush1.msra.mxu0 0.0
    %1616 = vmatprep.subr.mxu0 0.0
    %1617 = vmatpush1.msra.mxu0 0.0
    %1618 = vmatprep.subr.mxu0 0.0
    %1619 = vmatpush1.msra.mxu0 0.0
    %1620 = vmatprep.subr.mxu0 0.0
    %1621 = vmatpush1.msra.mxu0 0.0
    %1622 = vmatprep.subr.mxu0 0.0
    %1623 = vmatpush1.msra.mxu0 0.0
    %1624 = vmatprep.subr.mxu0 0.0
    %1625 = vmatpush1.msra.mxu0 0.0
    %1626 = vmatprep.subr.mxu0 0.0
    %1627 = vmatpush1.msra.mxu0 0.0
    %1628 = vmatprep.subr.mxu0 0.0
    %1629 = vmatpush1.msra.mxu0 0.0
    %1630 = vmatprep.subr.mxu0 0.0
    %1631 = vmatpush1.msra.mxu0 0.0
    %1632 = vmatprep.subr.mxu0 0.0
    %1633 = vmatpush1.msra.mxu0 0.0
    %1634 = vmatprep.subr.mxu0 0.0
    %1635 = vmatpush1.msra.mxu0 0.0
    %1636 = vmatprep.subr.mxu0 0.0
    %1637 = vmatpush1.msra.mxu0 0.0
    %1638 = vmatprep.subr.mxu0 0.0
    %1639 = vmatpush1.msra.mxu0 0.0
    %1640 = vmatprep.subr.mxu0 0.0
    %1641 = vmatpush1.msra.mxu0 0.0
    %1642 = vmatprep.subr.mxu0 0.0
    %1643 = vmatpush1.msra.mxu0 0.0
    %1644 = vmatprep.subr.mxu0 0.0
    %1645 = vmatpush1.msra.mxu0 0.0
    %1646 = vmatprep.subr.mxu0 0.0
    %1647 = vmatpush1.msra.mxu0 0.0
    %1648 = vmatprep.subr.mxu0 0.0
    %1649 = vmatpush1.msra.mxu0 0.0
    %1650 = vmatprep.subr.mxu0 0.0
    %1651 = vmatpush1.msra.mxu0 0.0
    %1652 = vmatprep.subr.mxu0 0.0
    %1653 = vmatpush1.msra.mxu0 0.0
    %1654 = vmatprep.subr.mxu0 0.0
    %1655 = vmatpush1.msra.mxu0 0.0
    %1656 = vmatprep.subr.mxu0 0.0
    %1657 = vmatpush1.msra.mxu0 0.0
    %1658 = vmatprep.subr.mxu0 0.0
    %1659 = vmatpush1.msra.mxu0 0.0
    %1660 = vmatprep.subr.mxu0 0.0
    %1661 = vmatpush1.msra.mxu0 0.0
    %1662 = vmatprep.mubr.bf16.mxu0 0
    %1663 = vmatmul.mubr.bf16.gmra.mrb[0].mxu0 %v1590
    %v1664 = vpop.f32.mrb[0].mxu0
    %v1665 = vadd.f32 0.0, %v1664
    %v1666 = vpop.f32.mrb[0].mxu0
    %v1667 = vpop.f32.mrb[0].mxu0
    %v1668 = vadd.f32 0.0, %v1667
    %v1669 = vpop.f32.mrb[0].mxu0
    %1670 = vmatprep.mubr.bf16.mxu0 0
    %1671 = vmatmul.mubr.bf16.gmra.mrb[0].mxu0 %v1593
    %v1672 = vpop.f32.mrb[0].mxu0
    %v1673 = vadd.f32 0.0, %v1672
    %v1674 = vpop.f32.mrb[0].mxu0
    %v1675 = vpop.f32.mrb[0].mxu0
    %v1676 = vpop.f32.mrb[0].mxu0
    %1677 = vdwg.mxu0
    %v1679 = vrot.slane %v1665, 2
    %v1680 = vsel %vm240, %v1679, 0
    %1682 = vmatprep.subr.mxu0 0.0
    %1683 = vmatpush1.msra.mxu0 %v1561
    %1684 = vmatprep.subr.mxu0 0.0
    %1685 = vmatpush1.msra.mxu0 %v1562
    %1686 = vmatprep.subr.mxu0 0.0
    %1687 = vmatpush1.msra.mxu0 0.0
    %1688 = vmatprep.subr.mxu0 0.0
    %1689 = vmatpush1.msra.mxu0 0.0
    %1690 = vmatprep.subr.mxu0 0.0
    %1691 = vmatpush1.msra.mxu0 0.0
    %1692 = vmatprep.subr.mxu0 0.0
    %1693 = vmatpush1.msra.mxu0 0.0
    %1694 = vmatprep.subr.mxu0 0.0
    %1695 = vmatpush1.msra.mxu0 0.0
    %1696 = vmatprep.subr.mxu0 0.0
    %1697 = vmatpush1.msra.mxu0 0.0
    %1698 = vmatprep.subr.mxu0 0.0
    %1699 = vmatpush1.msra.mxu0 0.0
    %1700 = vmatprep.subr.mxu0 0.0
    %1701 = vmatpush1.msra.mxu0 0.0
    %1702 = vmatprep.subr.mxu0 0.0
    %1703 = vmatpush1.msra.mxu0 0.0
    %1704 = vmatprep.subr.mxu0 0.0
    %1705 = vmatpush1.msra.mxu0 0.0
    %1706 = vmatprep.subr.mxu0 0.0
    %1707 = vmatpush1.msra.mxu0 0.0
    %1708 = vmatprep.subr.mxu0 0.0
    %1709 = vmatpush1.msra.mxu0 0.0
    %1710 = vmatprep.subr.mxu0 0.0
    %1711 = vmatpush1.msra.mxu0 0.0
    %1712 = vmatprep.subr.mxu0 0.0
    %1713 = vmatpush1.msra.mxu0 0.0
    %1714 = vmatprep.subr.mxu0 0.0
    %1715 = vmatpush1.msra.mxu0 0.0
    %1716 = vmatprep.subr.mxu0 0.0
    %1717 = vmatpush1.msra.mxu0 0.0
    %1718 = vmatprep.subr.mxu0 0.0
    %1719 = vmatpush1.msra.mxu0 0.0
    %1720 = vmatprep.subr.mxu0 0.0
    %1721 = vmatpush1.msra.mxu0 0.0
    %1722 = vmatprep.subr.mxu0 0.0
    %1723 = vmatpush1.msra.mxu0 0.0
    %1724 = vmatprep.subr.mxu0 0.0
    %1725 = vmatpush1.msra.mxu0 0.0
    %1726 = vmatprep.subr.mxu0 0.0
    %1727 = vmatpush1.msra.mxu0 0.0
    %1728 = vmatprep.subr.mxu0 0.0
    %1729 = vmatpush1.msra.mxu0 0.0
    %1730 = vmatprep.subr.mxu0 0.0
    %1731 = vmatpush1.msra.mxu0 0.0
    %1732 = vmatprep.subr.mxu0 0.0
    %1733 = vmatpush1.msra.mxu0 0.0
    %1734 = vmatprep.subr.mxu0 0.0
    %1735 = vmatpush1.msra.mxu0 0.0
    %1736 = vmatprep.subr.mxu0 0.0
    %1737 = vmatpush1.msra.mxu0 0.0
    %1738 = vmatprep.subr.mxu0 0.0
    %1739 = vmatpush1.msra.mxu0 0.0
    %1740 = vmatprep.subr.mxu0 0.0
    %1741 = vmatpush1.msra.mxu0 0.0
    %1742 = vmatprep.subr.mxu0 0.0
    %1743 = vmatpush1.msra.mxu0 0.0
    %1744 = vmatprep.subr.mxu0 0.0
    %1745 = vmatpush1.msra.mxu0 0.0
    %1746 = vmatprep.mubr.f32.mxu0 0.0
    %1747 = vmatmul.mubr.f32.gmra.mrb[0].mxu0 %v1680
    %v1748 = vpop.f32.mrb[0].mxu0
    %v1749 = vadd.f32 0.0, %v1748
    %v1750 = vpop.f32.mrb[0].mxu0
    %1751 = vdwg.mxu0
    %v1752 = vsel %vm240, %v1665, 0
    %1754 = vmatprep.subr.mxu0 0.0
    %1755 = vmatpush1.msra.mxu0 %v1559
    %1756 = vmatprep.subr.mxu0 0.0
    %1757 = vmatpush1.msra.mxu0 %v1560
    %1758 = vmatprep.subr.mxu0 0.0
    %1759 = vmatpush1.msra.mxu0 0.0
    %1760 = vmatprep.subr.mxu0 0.0
    %1761 = vmatpush1.msra.mxu0 0.0
    %1762 = vmatprep.subr.mxu0 0.0
    %1763 = vmatpush1.msra.mxu0 0.0
    %1764 = vmatprep.subr.mxu0 0.0
    %1765 = vmatpush1.msra.mxu0 0.0
    %1766 = vmatprep.subr.mxu0 0.0
    %1767 = vmatpush1.msra.mxu0 0.0
    %1768 = vmatprep.subr.mxu0 0.0
    %1769 = vmatpush1.msra.mxu0 0.0
    %1770 = vmatprep.subr.mxu0 0.0
    %1771 = vmatpush1.msra.mxu0 0.0
    %1772 = vmatprep.subr.mxu0 0.0
    %1773 = vmatpush1.msra.mxu0 0.0
    %1774 = vmatprep.subr.mxu0 0.0
    %1775 = vmatpush1.msra.mxu0 0.0
    %1776 = vmatprep.subr.mxu0 0.0
    %1777 = vmatpush1.msra.mxu0 0.0
    %1778 = vmatprep.subr.mxu0 0.0
    %1779 = vmatpush1.msra.mxu0 0.0
    %1780 = vmatprep.subr.mxu0 0.0
    %1781 = vmatpush1.msra.mxu0 0.0
    %1782 = vmatprep.subr.mxu0 0.0
    %1783 = vmatpush1.msra.mxu0 0.0
    %1784 = vmatprep.subr.mxu0 0.0
    %1785 = vmatpush1.msra.mxu0 0.0
    %1786 = vmatprep.subr.mxu0 0.0
    %1787 = vmatpush1.msra.mxu0 0.0
    %1788 = vmatprep.subr.mxu0 0.0
    %1789 = vmatpush1.msra.mxu0 0.0
    %1790 = vmatprep.subr.mxu0 0.0
    %1791 = vmatpush1.msra.mxu0 0.0
    %1792 = vmatprep.subr.mxu0 0.0
    %1793 = vmatpush1.msra.mxu0 0.0
    %1794 = vmatprep.subr.mxu0 0.0
    %1795 = vmatpush1.msra.mxu0 0.0
    %1796 = vmatprep.subr.mxu0 0.0
    %1797 = vmatpush1.msra.mxu0 0.0
    %1798 = vmatprep.subr.mxu0 0.0
    %1799 = vmatpush1.msra.mxu0 0.0
    %1800 = vmatprep.subr.mxu0 0.0
    %1801 = vmatpush1.msra.mxu0 0.0
    %1802 = vmatprep.subr.mxu0 0.0
    %1803 = vmatpush1.msra.mxu0 0.0
    %1804 = vmatprep.subr.mxu0 0.0
    %1805 = vmatpush1.msra.mxu0 0.0
    %1806 = vmatprep.subr.mxu0 0.0
    %1807 = vmatpush1.msra.mxu0 0.0
    %1808 = vmatprep.subr.mxu0 0.0
    %1809 = vmatpush1.msra.mxu0 0.0
    %1810 = vmatprep.subr.mxu0 0.0
    %1811 = vmatpush1.msra.mxu0 0.0
    %1812 = vmatprep.subr.mxu0 0.0
    %1813 = vmatpush1.msra.mxu0 0.0
    %1814 = vmatprep.subr.mxu0 0.0
    %1815 = vmatpush1.msra.mxu0 0.0
    %1816 = vmatprep.subr.mxu0 0.0
    %1817 = vmatpush1.msra.mxu0 0.0
    %1818 = vmatprep.mubr.f32.mxu0 0.0
    %1819 = vmatmul.mubr.f32.gmra.mrb[0].mxu0 %v1752
    %v1820 = vpop.f32.mrb[0].mxu0
    %v1821 = vadd.f32 %v1749, %v1820
    %v1822 = vpop.f32.mrb[0].mxu0
    %1823 = vdwg.mxu0
    %v1824 = vrot.slane %v1665, 4
    %v1825 = vsel %vm240, %v1824, 0
    %1827 = vmatprep.subr.mxu0 0.0
    %1828 = vmatpush1.msra.mxu0 %v1563
    %1829 = vmatprep.subr.mxu0 0.0
    %1830 = vmatpush1.msra.mxu0 %v1564
    %1831 = vmatprep.subr.mxu0 0.0
    %1832 = vmatpush1.msra.mxu0 0.0
    %1833 = vmatprep.subr.mxu0 0.0
    %1834 = vmatpush1.msra.mxu0 0.0
    %1835 = vmatprep.subr.mxu0 0.0
    %1836 = vmatpush1.msra.mxu0 0.0
    %1837 = vmatprep.subr.mxu0 0.0
    %1838 = vmatpush1.msra.mxu0 0.0
    %1839 = vmatprep.subr.mxu0 0.0
    %1840 = vmatpush1.msra.mxu0 0.0
    %1841 = vmatprep.subr.mxu0 0.0
    %1842 = vmatpush1.msra.mxu0 0.0
    %1843 = vmatprep.subr.mxu0 0.0
    %1844 = vmatpush1.msra.mxu0 0.0
    %1845 = vmatprep.subr.mxu0 0.0
    %1846 = vmatpush1.msra.mxu0 0.0
    %1847 = vmatprep.subr.mxu0 0.0
    %1848 = vmatpush1.msra.mxu0 0.0
    %1849 = vmatprep.subr.mxu0 0.0
    %1850 = vmatpush1.msra.mxu0 0.0
    %1851 = vmatprep.subr.mxu0 0.0
    %1852 = vmatpush1.msra.mxu0 0.0
    %1853 = vmatprep.subr.mxu0 0.0
    %1854 = vmatpush1.msra.mxu0 0.0
    %1855 = vmatprep.subr.mxu0 0.0
    %1856 = vmatpush1.msra.mxu0 0.0
    %1857 = vmatprep.subr.mxu0 0.0
    %1858 = vmatpush1.msra.mxu0 0.0
    %1859 = vmatprep.subr.mxu0 0.0
    %1860 = vmatpush1.msra.mxu0 0.0
    %1861 = vmatprep.subr.mxu0 0.0
    %1862 = vmatpush1.msra.mxu0 0.0
    %1863 = vmatprep.subr.mxu0 0.0
    %1864 = vmatpush1.msra.mxu0 0.0
    %1865 = vmatprep.subr.mxu0 0.0
    %1866 = vmatpush1.msra.mxu0 0.0
    %1867 = vmatprep.subr.mxu0 0.0
    %1868 = vmatpush1.msra.mxu0 0.0
    %1869 = vmatprep.subr.mxu0 0.0
    %1870 = vmatpush1.msra.mxu0 0.0
    %1871 = vmatprep.subr.mxu0 0.0
    %1872 = vmatpush1.msra.mxu0 0.0
    %1873 = vmatprep.subr.mxu0 0.0
    %1874 = vmatpush1.msra.mxu0 0.0
    %1875 = vmatprep.subr.mxu0 0.0
    %1876 = vmatpush1.msra.mxu0 0.0
    %1877 = vmatprep.subr.mxu0 0.0
    %1878 = vmatpush1.msra.mxu0 0.0
    %1879 = vmatprep.subr.mxu0 0.0
    %1880 = vmatpush1.msra.mxu0 0.0
    %1881 = vmatprep.subr.mxu0 0.0
    %1882 = vmatpush1.msra.mxu0 0.0
    %1883 = vmatprep.subr.mxu0 0.0
    %1884 = vmatpush1.msra.mxu0 0.0
    %1885 = vmatprep.subr.mxu0 0.0
    %1886 = vmatpush1.msra.mxu0 0.0
    %1887 = vmatprep.subr.mxu0 0.0
    %1888 = vmatpush1.msra.mxu0 0.0
    %1889 = vmatprep.subr.mxu0 0.0
    %1890 = vmatpush1.msra.mxu0 0.0
    %1891 = vmatprep.mubr.f32.mxu0 0.0
    %1892 = vmatmul.mubr.f32.gmra.mrb[0].mxu0 %v1825
    %v1893 = vpop.f32.mrb[0].mxu0
    %v1894 = vadd.f32 0.0, %v1893
    %v1895 = vpop.f32.mrb[0].mxu0
    %1896 = vdwg.mxu0
    %v1897 = vadd.f32 %v1821, %v1894
    %v1898 = vrot.slane %v1665, 6
    %v1899 = vsel %vm240, %v1898, 0
    %1901 = vmatprep.subr.mxu0 0.0
    %1902 = vmatpush1.msra.mxu0 %v1565
    %1903 = vmatprep.subr.mxu0 0.0
    %1904 = vmatpush1.msra.mxu0 %v1566
    %1905 = vmatprep.subr.mxu0 0.0
    %1906 = vmatpush1.msra.mxu0 0.0
    %1907 = vmatprep.subr.mxu0 0.0
    %1908 = vmatpush1.msra.mxu0 0.0
    %1909 = vmatprep.subr.mxu0 0.0
    %1910 = vmatpush1.msra.mxu0 0.0
    %1911 = vmatprep.subr.mxu0 0.0
    %1912 = vmatpush1.msra.mxu0 0.0
    %1913 = vmatprep.subr.mxu0 0.0
    %1914 = vmatpush1.msra.mxu0 0.0
    %1915 = vmatprep.subr.mxu0 0.0
    %1916 = vmatpush1.msra.mxu0 0.0
    %1917 = vmatprep.subr.mxu0 0.0
    %1918 = vmatpush1.msra.mxu0 0.0
    %1919 = vmatprep.subr.mxu0 0.0
    %1920 = vmatpush1.msra.mxu0 0.0
    %1921 = vmatprep.subr.mxu0 0.0
    %1922 = vmatpush1.msra.mxu0 0.0
    %1923 = vmatprep.subr.mxu0 0.0
    %1924 = vmatpush1.msra.mxu0 0.0
    %1925 = vmatprep.subr.mxu0 0.0
    %1926 = vmatpush1.msra.mxu0 0.0
    %1927 = vmatprep.subr.mxu0 0.0
    %1928 = vmatpush1.msra.mxu0 0.0
    %1929 = vmatprep.subr.mxu0 0.0
    %1930 = vmatpush1.msra.mxu0 0.0
    %1931 = vmatprep.subr.mxu0 0.0
    %1932 = vmatpush1.msra.mxu0 0.0
    %1933 = vmatprep.subr.mxu0 0.0
    %1934 = vmatpush1.msra.mxu0 0.0
    %1935 = vmatprep.subr.mxu0 0.0
    %1936 = vmatpush1.msra.mxu0 0.0
    %1937 = vmatprep.subr.mxu0 0.0
    %1938 = vmatpush1.msra.mxu0 0.0
    %1939 = vmatprep.subr.mxu0 0.0
    %1940 = vmatpush1.msra.mxu0 0.0
    %1941 = vmatprep.subr.mxu0 0.0
    %1942 = vmatpush1.msra.mxu0 0.0
    %1943 = vmatprep.subr.mxu0 0.0
    %1944 = vmatpush1.msra.mxu0 0.0
    %1945 = vmatprep.subr.mxu0 0.0
    %1946 = vmatpush1.msra.mxu0 0.0
    %1947 = vmatprep.subr.mxu0 0.0
    %1948 = vmatpush1.msra.mxu0 0.0
    %1949 = vmatprep.subr.mxu0 0.0
    %1950 = vmatpush1.msra.mxu0 0.0
    %1951 = vmatprep.subr.mxu0 0.0
    %1952 = vmatpush1.msra.mxu0 0.0
    %1953 = vmatprep.subr.mxu0 0.0
    %1954 = vmatpush1.msra.mxu0 0.0
    %1955 = vmatprep.subr.mxu0 0.0
    %1956 = vmatpush1.msra.mxu0 0.0
    %1957 = vmatprep.subr.mxu0 0.0
    %1958 = vmatpush1.msra.mxu0 0.0
    %1959 = vmatprep.subr.mxu0 0.0
    %1960 = vmatpush1.msra.mxu0 0.0
    %1961 = vmatprep.subr.mxu0 0.0
    %1962 = vmatpush1.msra.mxu0 0.0
    %1963 = vmatprep.subr.mxu0 0.0
    %1964 = vmatpush1.msra.mxu0 0.0
    %1965 = vmatprep.mubr.f32.mxu0 0.0
    %1966 = vmatmul.mubr.f32.gmra.mrb[0].mxu0 %v1899
    %v1967 = vpop.f32.mrb[0].mxu0
    %v1968 = vadd.f32 0.0, %v1967
    %v1969 = vpop.f32.mrb[0].mxu0
    %1970 = vdwg.mxu0
    %v1971 = vadd.f32 %v1897, %v1968
    %v1973 = vsel %vm240, %v1668, 0
    %1975 = vmatprep.subr.mxu0 0.0
    %1976 = vmatpush1.msra.mxu0 %v1567
    %1977 = vmatprep.subr.mxu0 0.0
    %1978 = vmatpush1.msra.mxu0 %v1568
    %1979 = vmatprep.subr.mxu0 0.0
    %1980 = vmatpush1.msra.mxu0 0.0
    %1981 = vmatprep.subr.mxu0 0.0
    %1982 = vmatpush1.msra.mxu0 0.0
    %1983 = vmatprep.subr.mxu0 0.0
    %1984 = vmatpush1.msra.mxu0 0.0
    %1985 = vmatprep.subr.mxu0 0.0
    %1986 = vmatpush1.msra.mxu0 0.0
    %1987 = vmatprep.subr.mxu0 0.0
    %1988 = vmatpush1.msra.mxu0 0.0
    %1989 = vmatprep.subr.mxu0 0.0
    %1990 = vmatpush1.msra.mxu0 0.0
    %1991 = vmatprep.subr.mxu0 0.0
    %1992 = vmatpush1.msra.mxu0 0.0
    %1993 = vmatprep.subr.mxu0 0.0
    %1994 = vmatpush1.msra.mxu0 0.0
    %1995 = vmatprep.subr.mxu0 0.0
    %1996 = vmatpush1.msra.mxu0 0.0
    %1997 = vmatprep.subr.mxu0 0.0
    %1998 = vmatpush1.msra.mxu0 0.0
    %1999 = vmatprep.subr.mxu0 0.0
    %2000 = vmatpush1.msra.mxu0 0.0
    %2001 = vmatprep.subr.mxu0 0.0
    %2002 = vmatpush1.msra.mxu0 0.0
    %2003 = vmatprep.subr.mxu0 0.0
    %2004 = vmatpush1.msra.mxu0 0.0
    %2005 = vmatprep.subr.mxu0 0.0
    %2006 = vmatpush1.msra.mxu0 0.0
    %2007 = vmatprep.subr.mxu0 0.0
    %2008 = vmatpush1.msra.mxu0 0.0
    %2009 = vmatprep.subr.mxu0 0.0
    %2010 = vmatpush1.msra.mxu0 0.0
    %2011 = vmatprep.subr.mxu0 0.0
    %2012 = vmatpush1.msra.mxu0 0.0
    %2013 = vmatprep.subr.mxu0 0.0
    %2014 = vmatpush1.msra.mxu0 0.0
    %2015 = vmatprep.subr.mxu0 0.0
    %2016 = vmatpush1.msra.mxu0 0.0
    %2017 = vmatprep.subr.mxu0 0.0
    %2018 = vmatpush1.msra.mxu0 0.0
    %2019 = vmatprep.subr.mxu0 0.0
    %2020 = vmatpush1.msra.mxu0 0.0
    %2021 = vmatprep.subr.mxu0 0.0
    %2022 = vmatpush1.msra.mxu0 0.0
    %2023 = vmatprep.subr.mxu0 0.0
    %2024 = vmatpush1.msra.mxu0 0.0
    %2025 = vmatprep.subr.mxu0 0.0
    %2026 = vmatpush1.msra.mxu0 0.0
    %2027 = vmatprep.subr.mxu0 0.0
    %2028 = vmatpush1.msra.mxu0 0.0
    %2029 = vmatprep.subr.mxu0 0.0
    %2030 = vmatpush1.msra.mxu0 0.0
    %2031 = vmatprep.subr.mxu0 0.0
    %2032 = vmatpush1.msra.mxu0 0.0
    %2033 = vmatprep.subr.mxu0 0.0
    %2034 = vmatpush1.msra.mxu0 0.0
    %2035 = vmatprep.subr.mxu0 0.0
    %2036 = vmatpush1.msra.mxu0 0.0
    %2037 = vmatprep.subr.mxu0 0.0
    %2038 = vmatpush1.msra.mxu0 0.0
    %2039 = vmatprep.mubr.f32.mxu0 0.0
    %2040 = vmatmul.mubr.f32.gmra.mrb[0].mxu0 %v1973
    %v2041 = vpop.f32.mrb[0].mxu0
    %v2042 = vadd.f32 0.0, %v2041
    %v2043 = vpop.f32.mrb[0].mxu0
    %2044 = vdwg.mxu0
    %v2045 = vadd.f32 %v1971, %v2042
    %v2046 = vrot.slane %v1668, 2
    %v2047 = vsel %vm240, %v2046, 0
    %2049 = vmatprep.subr.mxu0 0.0
    %2050 = vmatpush1.msra.mxu0 %v1569
    %2051 = vmatprep.subr.mxu0 0.0
    %2052 = vmatpush1.msra.mxu0 %v1570
    %2053 = vmatprep.subr.mxu0 0.0
    %2054 = vmatpush1.msra.mxu0 0.0
    %2055 = vmatprep.subr.mxu0 0.0
    %2056 = vmatpush1.msra.mxu0 0.0
    %2057 = vmatprep.subr.mxu0 0.0
    %2058 = vmatpush1.msra.mxu0 0.0
    %2059 = vmatprep.subr.mxu0 0.0
    %2060 = vmatpush1.msra.mxu0 0.0
    %2061 = vmatprep.subr.mxu0 0.0
    %2062 = vmatpush1.msra.mxu0 0.0
    %2063 = vmatprep.subr.mxu0 0.0
    %2064 = vmatpush1.msra.mxu0 0.0
    %2065 = vmatprep.subr.mxu0 0.0
    %2066 = vmatpush1.msra.mxu0 0.0
    %2067 = vmatprep.subr.mxu0 0.0
    %2068 = vmatpush1.msra.mxu0 0.0
    %2069 = vmatprep.subr.mxu0 0.0
    %2070 = vmatpush1.msra.mxu0 0.0
    %2071 = vmatprep.subr.mxu0 0.0
    %2072 = vmatpush1.msra.mxu0 0.0
    %2073 = vmatprep.subr.mxu0 0.0
    %2074 = vmatpush1.msra.mxu0 0.0
    %2075 = vmatprep.subr.mxu0 0.0
    %2076 = vmatpush1.msra.mxu0 0.0
    %2077 = vmatprep.subr.mxu0 0.0
    %2078 = vmatpush1.msra.mxu0 0.0
    %2079 = vmatprep.subr.mxu0 0.0
    %2080 = vmatpush1.msra.mxu0 0.0
    %2081 = vmatprep.subr.mxu0 0.0
    %2082 = vmatpush1.msra.mxu0 0.0
    %2083 = vmatprep.subr.mxu0 0.0
    %2084 = vmatpush1.msra.mxu0 0.0
    %2085 = vmatprep.subr.mxu0 0.0
    %2086 = vmatpush1.msra.mxu0 0.0
    %2087 = vmatprep.subr.mxu0 0.0
    %2088 = vmatpush1.msra.mxu0 0.0
    %2089 = vmatprep.subr.mxu0 0.0
    %2090 = vmatpush1.msra.mxu0 0.0
    %2091 = vmatprep.subr.mxu0 0.0
    %2092 = vmatpush1.msra.mxu0 0.0
    %2093 = vmatprep.subr.mxu0 0.0
    %2094 = vmatpush1.msra.mxu0 0.0
    %2095 = vmatprep.subr.mxu0 0.0
    %2096 = vmatpush1.msra.mxu0 0.0
    %2097 = vmatprep.subr.mxu0 0.0
    %2098 = vmatpush1.msra.mxu0 0.0
    %2099 = vmatprep.subr.mxu0 0.0
    %2100 = vmatpush1.msra.mxu0 0.0
    %2101 = vmatprep.subr.mxu0 0.0
    %2102 = vmatpush1.msra.mxu0 0.0
    %2103 = vmatprep.subr.mxu0 0.0
    %2104 = vmatpush1.msra.mxu0 0.0
    %2105 = vmatprep.subr.mxu0 0.0
    %2106 = vmatpush1.msra.mxu0 0.0
    %2107 = vmatprep.subr.mxu0 0.0
    %2108 = vmatpush1.msra.mxu0 0.0
    %2109 = vmatprep.subr.mxu0 0.0
    %2110 = vmatpush1.msra.mxu0 0.0
    %2111 = vmatprep.subr.mxu0 0.0
    %2112 = vmatpush1.msra.mxu0 0.0
    %2113 = vmatprep.mubr.f32.mxu0 0.0
    %2114 = vmatmul.mubr.f32.gmra.mrb[0].mxu0 %v2047
    %v2115 = vpop.f32.mrb[0].mxu0
    %v2116 = vadd.f32 0.0, %v2115
    %v2117 = vpop.f32.mrb[0].mxu0
    %2118 = vdwg.mxu0
    %v2119 = vadd.f32 %v2045, %v2116
    %v2120 = vrot.slane %v1668, 4
    %v2121 = vsel %vm240, %v2120, 0
    %2123 = vmatprep.subr.mxu0 0.0
    %2124 = vmatpush1.msra.mxu0 %v1571
    %2125 = vmatprep.subr.mxu0 0.0
    %2126 = vmatpush1.msra.mxu0 %v1572
    %2127 = vmatprep.subr.mxu0 0.0
    %2128 = vmatpush1.msra.mxu0 0.0
    %2129 = vmatprep.subr.mxu0 0.0
    %2130 = vmatpush1.msra.mxu0 0.0
    %2131 = vmatprep.subr.mxu0 0.0
    %2132 = vmatpush1.msra.mxu0 0.0
    %2133 = vmatprep.subr.mxu0 0.0
    %2134 = vmatpush1.msra.mxu0 0.0
    %2135 = vmatprep.subr.mxu0 0.0
    %2136 = vmatpush1.msra.mxu0 0.0
    %2137 = vmatprep.subr.mxu0 0.0
    %2138 = vmatpush1.msra.mxu0 0.0
    %2139 = vmatprep.subr.mxu0 0.0
    %2140 = vmatpush1.msra.mxu0 0.0
    %2141 = vmatprep.subr.mxu0 0.0
    %2142 = vmatpush1.msra.mxu0 0.0
    %2143 = vmatprep.subr.mxu0 0.0
    %2144 = vmatpush1.msra.mxu0 0.0
    %2145 = vmatprep.subr.mxu0 0.0
    %2146 = vmatpush1.msra.mxu0 0.0
    %2147 = vmatprep.subr.mxu0 0.0
    %2148 = vmatpush1.msra.mxu0 0.0
    %2149 = vmatprep.subr.mxu0 0.0
    %2150 = vmatpush1.msra.mxu0 0.0
    %2151 = vmatprep.subr.mxu0 0.0
    %2152 = vmatpush1.msra.mxu0 0.0
    %2153 = vmatprep.subr.mxu0 0.0
    %2154 = vmatpush1.msra.mxu0 0.0
    %2155 = vmatprep.subr.mxu0 0.0
    %2156 = vmatpush1.msra.mxu0 0.0
    %2157 = vmatprep.subr.mxu0 0.0
    %2158 = vmatpush1.msra.mxu0 0.0
    %2159 = vmatprep.subr.mxu0 0.0
    %2160 = vmatpush1.msra.mxu0 0.0
    %2161 = vmatprep.subr.mxu0 0.0
    %2162 = vmatpush1.msra.mxu0 0.0
    %2163 = vmatprep.subr.mxu0 0.0
    %2164 = vmatpush1.msra.mxu0 0.0
    %2165 = vmatprep.subr.mxu0 0.0
    %2166 = vmatpush1.msra.mxu0 0.0
    %2167 = vmatprep.subr.mxu0 0.0
    %2168 = vmatpush1.msra.mxu0 0.0
    %2169 = vmatprep.subr.mxu0 0.0
    %2170 = vmatpush1.msra.mxu0 0.0
    %2171 = vmatprep.subr.mxu0 0.0
    %2172 = vmatpush1.msra.mxu0 0.0
    %2173 = vmatprep.subr.mxu0 0.0
    %2174 = vmatpush1.msra.mxu0 0.0
    %2175 = vmatprep.subr.mxu0 0.0
    %2176 = vmatpush1.msra.mxu0 0.0
    %2177 = vmatprep.subr.mxu0 0.0
    %2178 = vmatpush1.msra.mxu0 0.0
    %2179 = vmatprep.subr.mxu0 0.0
    %2180 = vmatpush1.msra.mxu0 0.0
    %2181 = vmatprep.subr.mxu0 0.0
    %2182 = vmatpush1.msra.mxu0 0.0
    %2183 = vmatprep.subr.mxu0 0.0
    %2184 = vmatpush1.msra.mxu0 0.0
    %2185 = vmatprep.subr.mxu0 0.0
    %2186 = vmatpush1.msra.mxu0 0.0
    %2187 = vmatprep.mubr.f32.mxu0 0.0
    %2188 = vmatmul.mubr.f32.gmra.mrb[0].mxu0 %v2121
    %v2189 = vpop.f32.mrb[0].mxu0
    %v2190 = vadd.f32 0.0, %v2189
    %v2191 = vpop.f32.mrb[0].mxu0
    %2192 = vdwg.mxu0
    %v2193 = vadd.f32 %v2119, %v2190
    %v2194 = vrot.slane %v1668, 6
    %v2195 = vsel %vm240, %v2194, 0
    %2197 = vmatprep.subr.mxu0 0.0
    %2198 = vmatpush1.msra.mxu0 %v1573
    %2199 = vmatprep.subr.mxu0 0.0
    %2200 = vmatpush1.msra.mxu0 %v1574
    %2201 = vmatprep.subr.mxu0 0.0
    %2202 = vmatpush1.msra.mxu0 0.0
    %2203 = vmatprep.subr.mxu0 0.0
    %2204 = vmatpush1.msra.mxu0 0.0
    %2205 = vmatprep.subr.mxu0 0.0
    %2206 = vmatpush1.msra.mxu0 0.0
    %2207 = vmatprep.subr.mxu0 0.0
    %2208 = vmatpush1.msra.mxu0 0.0
    %2209 = vmatprep.subr.mxu0 0.0
    %2210 = vmatpush1.msra.mxu0 0.0
    %2211 = vmatprep.subr.mxu0 0.0
    %2212 = vmatpush1.msra.mxu0 0.0
    %2213 = vmatprep.subr.mxu0 0.0
    %2214 = vmatpush1.msra.mxu0 0.0
    %2215 = vmatprep.subr.mxu0 0.0
    %2216 = vmatpush1.msra.mxu0 0.0
    %2217 = vmatprep.subr.mxu0 0.0
    %2218 = vmatpush1.msra.mxu0 0.0
    %2219 = vmatprep.subr.mxu0 0.0
    %2220 = vmatpush1.msra.mxu0 0.0
    %2221 = vmatprep.subr.mxu0 0.0
    %2222 = vmatpush1.msra.mxu0 0.0
    %2223 = vmatprep.subr.mxu0 0.0
    %2224 = vmatpush1.msra.mxu0 0.0
    %2225 = vmatprep.subr.mxu0 0.0
    %2226 = vmatpush1.msra.mxu0 0.0
    %2227 = vmatprep.subr.mxu0 0.0
    %2228 = vmatpush1.msra.mxu0 0.0
    %2229 = vmatprep.subr.mxu0 0.0
    %2230 = vmatpush1.msra.mxu0 0.0
    %2231 = vmatprep.subr.mxu0 0.0
    %2232 = vmatpush1.msra.mxu0 0.0
    %2233 = vmatprep.subr.mxu0 0.0
    %2234 = vmatpush1.msra.mxu0 0.0
    %2235 = vmatprep.subr.mxu0 0.0
    %2236 = vmatpush1.msra.mxu0 0.0
    %2237 = vmatprep.subr.mxu0 0.0
    %2238 = vmatpush1.msra.mxu0 0.0
    %2239 = vmatprep.subr.mxu0 0.0
    %2240 = vmatpush1.msra.mxu0 0.0
    %2241 = vmatprep.subr.mxu0 0.0
    %2242 = vmatpush1.msra.mxu0 0.0
    %2243 = vmatprep.subr.mxu0 0.0
    %2244 = vmatpush1.msra.mxu0 0.0
    %2245 = vmatprep.subr.mxu0 0.0
    %2246 = vmatpush1.msra.mxu0 0.0
    %2247 = vmatprep.subr.mxu0 0.0
    %2248 = vmatpush1.msra.mxu0 0.0
    %2249 = vmatprep.subr.mxu0 0.0
    %2250 = vmatpush1.msra.mxu0 0.0
    %2251 = vmatprep.subr.mxu0 0.0
    %2252 = vmatpush1.msra.mxu0 0.0
    %2253 = vmatprep.subr.mxu0 0.0
    %2254 = vmatpush1.msra.mxu0 0.0
    %2255 = vmatprep.subr.mxu0 0.0
    %2256 = vmatpush1.msra.mxu0 0.0
    %2257 = vmatprep.subr.mxu0 0.0
    %2258 = vmatpush1.msra.mxu0 0.0
    %2259 = vmatprep.subr.mxu0 0.0
    %2260 = vmatpush1.msra.mxu0 0.0
    %2261 = vmatprep.mubr.f32.mxu0 0.0
    %2262 = vmatmul.mubr.f32.gmra.mrb[0].mxu0 %v2195
    %v2263 = vpop.f32.mrb[0].mxu0
    %v2264 = vadd.f32 0.0, %v2263
    %v2265 = vpop.f32.mrb[0].mxu0
    %2266 = vdwg.mxu0
    %v2267 = vadd.f32 %v2193, %v2264
    %v2269 = vsel %vm240, %v1673, 0
    %2271 = vmatprep.subr.mxu0 0.0
    %2272 = vmatpush1.msra.mxu0 %v1575
    %2273 = vmatprep.subr.mxu0 0.0
    %2274 = vmatpush1.msra.mxu0 %v1576
    %2275 = vmatprep.subr.mxu0 0.0
    %2276 = vmatpush1.msra.mxu0 0.0
    %2277 = vmatprep.subr.mxu0 0.0
    %2278 = vmatpush1.msra.mxu0 0.0
    %2279 = vmatprep.subr.mxu0 0.0
    %2280 = vmatpush1.msra.mxu0 0.0
    %2281 = vmatprep.subr.mxu0 0.0
    %2282 = vmatpush1.msra.mxu0 0.0
    %2283 = vmatprep.subr.mxu0 0.0
    %2284 = vmatpush1.msra.mxu0 0.0
    %2285 = vmatprep.subr.mxu0 0.0
    %2286 = vmatpush1.msra.mxu0 0.0
    %2287 = vmatprep.subr.mxu0 0.0
    %2288 = vmatpush1.msra.mxu0 0.0
    %2289 = vmatprep.subr.mxu0 0.0
    %2290 = vmatpush1.msra.mxu0 0.0
    %2291 = vmatprep.subr.mxu0 0.0
    %2292 = vmatpush1.msra.mxu0 0.0
    %2293 = vmatprep.subr.mxu0 0.0
    %2294 = vmatpush1.msra.mxu0 0.0
    %2295 = vmatprep.subr.mxu0 0.0
    %2296 = vmatpush1.msra.mxu0 0.0
    %2297 = vmatprep.subr.mxu0 0.0
    %2298 = vmatpush1.msra.mxu0 0.0
    %2299 = vmatprep.subr.mxu0 0.0
    %2300 = vmatpush1.msra.mxu0 0.0
    %2301 = vmatprep.subr.mxu0 0.0
    %2302 = vmatpush1.msra.mxu0 0.0
    %2303 = vmatprep.subr.mxu0 0.0
    %2304 = vmatpush1.msra.mxu0 0.0
    %2305 = vmatprep.subr.mxu0 0.0
    %2306 = vmatpush1.msra.mxu0 0.0
    %2307 = vmatprep.subr.mxu0 0.0
    %2308 = vmatpush1.msra.mxu0 0.0
    %2309 = vmatprep.subr.mxu0 0.0
    %2310 = vmatpush1.msra.mxu0 0.0
    %2311 = vmatprep.subr.mxu0 0.0
    %2312 = vmatpush1.msra.mxu0 0.0
    %2313 = vmatprep.subr.mxu0 0.0
    %2314 = vmatpush1.msra.mxu0 0.0
    %2315 = vmatprep.subr.mxu0 0.0
    %2316 = vmatpush1.msra.mxu0 0.0
    %2317 = vmatprep.subr.mxu0 0.0
    %2318 = vmatpush1.msra.mxu0 0.0
    %2319 = vmatprep.subr.mxu0 0.0
    %2320 = vmatpush1.msra.mxu0 0.0
    %2321 = vmatprep.subr.mxu0 0.0
    %2322 = vmatpush1.msra.mxu0 0.0
    %2323 = vmatprep.subr.mxu0 0.0
    %2324 = vmatpush1.msra.mxu0 0.0
    %2325 = vmatprep.subr.mxu0 0.0
    %2326 = vmatpush1.msra.mxu0 0.0
    %2327 = vmatprep.subr.mxu0 0.0
    %2328 = vmatpush1.msra.mxu0 0.0
    %2329 = vmatprep.subr.mxu0 0.0
    %2330 = vmatpush1.msra.mxu0 0.0
    %2331 = vmatprep.subr.mxu0 0.0
    %2332 = vmatpush1.msra.mxu0 0.0
    %2333 = vmatprep.subr.mxu0 0.0
    %2334 = vmatpush1.msra.mxu0 0.0
    %2335 = vmatprep.mubr.f32.mxu0 0.0
    %2336 = vmatmul.mubr.f32.gmra.mrb[0].mxu0 %v2269
    %v2337 = vpop.f32.mrb[0].mxu0
    %v2338 = vadd.f32 0.0, %v2337
    %v2339 = vpop.f32.mrb[0].mxu0
    %2340 = vdwg.mxu0
    %v2341 = vadd.f32 %v2267, %v2338
    %v2342 = vsel %vm264, %v2341, 0.0
    %v2343 = vrot.slane %v2342, 4
    %v2344 = vadd.f32 %v2342, %v2343
    %v2345 = vrot.slane %v2344, 2
    %v2346 = vadd.f32 %v2344, %v2345
    %v2347 = vrot.slane %v2346, 1
    %v2348 = vadd.f32 %v2346, %v2347
    %v2349 = vmul.f32 %v2348, 0.5
    %v2350 = vmul.f32 %v2341, %v2341
    %v2351 = vsel %vm264, %v2350, 0.0
    %v2352 = vrot.slane %v2351, 4
    %v2353 = vadd.f32 %v2351, %v2352
    %v2354 = vrot.slane %v2353, 2
    %v2355 = vadd.f32 %v2353, %v2354
    %v2356 = vrot.slane %v2355, 1
    %v2357 = vadd.f32 %v2355, %v2356
    %v2358 = vmul.f32 %v2357, 0.5
    %v2359 = vmul.f32 %v2349, %v2349
    %v2360 = vsub.f32 %v2358, %v2359
    %v2361 = vadd.f32 %v2360, 1e-05
    %v2362 = vrsqrt.pop %v2361
    %v2363 = vmul.f32 %v46, %v2362
    %v2364 = vmul.f32 %v2349, %v2363
    %v2366 = vrot.slane %v2364, 5
    %v2368 = vsub.f32 %v46, %v2366
    %v2369 = vlaneseq
    %v2370 = vshrl.u32 %v2369, 7
    %v2371 = vsub.s32 2, %v2370
    %v2372 = vrot.slane %v2363, %v2371
    %v2373 = vmul.f32 %v2341, %v2372
    %v2374 = vlaneseq
    %v2375 = vshrl.u32 %v2374, 7
    %v2376 = vsub.s32 5, %v2375
    %v2377 = vrot.slane %v2368, %v2376
    %v2378 = vadd.f32 %v2373, %v2377
    %v2379 = vmax.f32 %v2378, 0.0
    %v2380 = vld [vmem:[%s8] sm:$0xff]
    %v2381 = vld [vmem:[%s8 + $0x8] sm:$0xff]
    %v2382 = vld [vmem:[%s1] sm:$0x3]
    %v2383 = vld [vmem:[%s9] sm:$0xf]
    %v2386 = vunpack.c.l.s4 1983009808
    %v2387 = vunpack.c.0.s8 %v2386
    %v2388 = vlaneseq
    %v2389 = vshrl.u32 %v2388, 7
    %v2390 = vsub.s32 %v2387, %v2389
    %v2391 = vrot.slane %v2383, %v2390
    %v2392 = vcombine.high %v2391, %v2391
    %vm2393 = vcmask 31744
    %v2395 = vsel %vm2393, %v2382, 0
    %v2398 = vsel %vm502, %v2391, 0
    %v2401 = vsel %vm502, %v2392, 0
    %2403 = vmatprep.subr.bf16.mxu0 %v2401
    %2404 = vmatpush1.bf16.msra.mxu0 %v2398
    %2405 = vmatprep.subr.bf16.mxu0 0
    %2406 = vmatpush1.bf16.msra.mxu0 0
    %2407 = vmatprep.subr.bf16.mxu0 0
    %2408 = vmatpush1.bf16.msra.mxu0 0
    %2409 = vmatprep.subr.bf16.mxu0 0
    %2410 = vmatpush1.bf16.msra.mxu0 0
    %2411 = vmatprep.subr.bf16.mxu0 0
    %2412 = vmatpush1.bf16.msra.mxu0 0
    %2413 = vmatprep.subr.bf16.mxu0 0
    %2414 = vmatpush1.bf16.msra.mxu0 0
    %2415 = vmatprep.subr.bf16.mxu0 0
    %2416 = vmatpush1.bf16.msra.mxu0 0
    %2417 = vmatprep.subr.bf16.mxu0 0
    %2418 = vmatpush1.bf16.msra.mxu0 0
    %2419 = vmatprep.subr.bf16.mxu0 0
    %2420 = vmatpush1.bf16.msra.mxu0 0
    %2421 = vmatprep.subr.bf16.mxu0 0
    %2422 = vmatpush1.bf16.msra.mxu0 0
    %2423 = vmatprep.subr.bf16.mxu0 0
    %2424 = vmatpush1.bf16.msra.mxu0 0
    %2425 = vmatprep.subr.bf16.mxu0 0
    %2426 = vmatpush1.bf16.msra.mxu0 0
    %2427 = vmatprep.subr.bf16.mxu0 0
    %2428 = vmatpush1.bf16.msra.mxu0 0
    %2429 = vmatprep.subr.bf16.mxu0 0
    %2430 = vmatpush1.bf16.msra.mxu0 0
    %2431 = vmatprep.subr.bf16.mxu0 0
    %2432 = vmatpush1.bf16.msra.mxu0 0
    %2433 = vmatprep.subr.bf16.mxu0 0
    %2434 = vmatpush1.bf16.msra.mxu0 0
    %2435 = vmatprep.mubr.f32.mxu0 0.0
    %2436 = vmatmul.mubr.f32.gmra.mrb[0].mxu0 %v2395
    %v2437 = vpop.f32.mrb[0].mxu0
    %v2438 = vadd.f32 0.0, %v2437
    %v2439 = vpop.f32.mrb[0].mxu0
    %v2440 = vadd.f32 0.0, %v2439
    %2441 = vdwg.mxu0
    %v2444 = vunpack.c.l.b16 %v2380
    %v2445 = vunpack.c.h.b16 %v2380
    %v2446 = vunpack.c.l.b16 %v2381
    %v2447 = vunpack.c.h.b16 %v2381
    %v2448 = vpack.c.b16 %v2446, %v2444
    %v2449 = vpack.c.b16 %v2447, %v2445
    %v2453 = vsel %vm240, %v2379, 0
    %2455 = vmatprep.subr.bf16.mxu0 %v2449
    %2456 = vmatpush1.bf16.msra.mxu0 %v2448
    %2457 = vmatprep.subr.bf16.mxu0 0
    %2458 = vmatpush1.bf16.msra.mxu0 0
    %2459 = vmatprep.subr.bf16.mxu0 0
    %2460 = vmatpush1.bf16.msra.mxu0 0
    %2461 = vmatprep.subr.bf16.mxu0 0
    %2462 = vmatpush1.bf16.msra.mxu0 0
    %2463 = vmatprep.subr.bf16.mxu0 0
    %2464 = vmatpush1.bf16.msra.mxu0 0
    %2465 = vmatprep.subr.bf16.mxu0 0
    %2466 = vmatpush1.bf16.msra.mxu0 0
    %2467 = vmatprep.subr.bf16.mxu0 0
    %2468 = vmatpush1.bf16.msra.mxu0 0
    %2469 = vmatprep.subr.bf16.mxu0 0
    %2470 = vmatpush1.bf16.msra.mxu0 0
    %2471 = vmatprep.subr.bf16.mxu0 0
    %2472 = vmatpush1.bf16.msra.mxu0 0
    %2473 = vmatprep.subr.bf16.mxu0 0
    %2474 = vmatpush1.bf16.msra.mxu0 0
    %2475 = vmatprep.subr.bf16.mxu0 0
    %2476 = vmatpush1.bf16.msra.mxu0 0
    %2477 = vmatprep.subr.bf16.mxu0 0
    %2478 = vmatpush1.bf16.msra.mxu0 0
    %2479 = vmatprep.subr.bf16.mxu0 0
    %2480 = vmatpush1.bf16.msra.mxu0 0
    %2481 = vmatprep.subr.bf16.mxu0 0
    %2482 = vmatpush1.bf16.msra.mxu0 0
    %2483 = vmatprep.subr.bf16.mxu0 0
    %2484 = vmatpush1.bf16.msra.mxu0 0
    %2485 = vmatprep.subr.bf16.mxu0 0
    %2486 = vmatpush1.bf16.msra.mxu0 0
    %2487 = vmatprep.mubr.f32.mxu0 0.0
    %2488 = vmatmul.mubr.f32.gmra.mrb[0].mxu0 %v2453
    %v2489 = vpop.f32.mrb[0].mxu0
    %v2490 = vadd.f32 %v2438, %v2489
    %v2491 = vpop.f32.mrb[0].mxu0
    %v2492 = vadd.f32 %v2440, %v2491
    %2493 = vdwg.mxu0
    %v2495 = vlaneseq
    %v2496 = vshrl.u32 %v2495, 7
    %v2497 = vsub.s32 0, %v2496
    %v2498 = vrot.slane %v47, %v2497
    %v2499 = vlaneseq
    %v2500 = vshrl.u32 %v2499, 7
    %v2501 = vsub.s32 4, %v2500
    %v2502 = vrot.slane %v47, %v2501
    %v2505 = vlaneseq
    %v2506 = vshrl.u32 %v2505, 7
    %v2507 = vsub.s32 0, %v2506
    %v2508 = vrot.slane %v2498, %v2507
    %v2509 = vlaneseq
    %v2510 = vshrl.u32 %v2509, 7
    %v2511 = vsub.s32 0, %v2510
    %v2512 = vrot.slane %v2502, %v2511
    %v2513 = vadd.f32 %v2490, %v2508
    %v2514 = vadd.f32 %v2492, %v2512
    %v2515 = vmax.f32 %v2513, 0.0
    %v2516 = vmax.f32 %v2514, 0.0
    %v2517 = vld [vmem:[%s10] sm:$0xff]
    %v2518 = vld [vmem:[%s10 + $0x8] sm:$0xff]
    %v2519 = vld [vmem:[%s10 + $0x10] sm:$0xff]
    %v2520 = vld [vmem:[%s10 + $0x18] sm:$0xff]
    %v2521 = vld [vmem:[%s10 + $0x20] sm:$0xff]
    %v2522 = vld [vmem:[%s10 + $0x28] sm:$0xff]
    %v2523 = vld [vmem:[%s10 + $0x30] sm:$0xff]
    %v2524 = vld [vmem:[%s10 + $0x38] sm:$0xff]
    %v2525 = vld [vmem:[%s10 + $0x40] sm:$0xff]
    %v2526 = vld [vmem:[%s10 + $0x48] sm:$0xff]
    %v2527 = vld [vmem:[%s10 + $0x50] sm:$0xff]
    %v2528 = vld [vmem:[%s10 + $0x58] sm:$0xff]
    %v2529 = vld [vmem:[%s10 + $0x60] sm:$0xff]
    %v2530 = vld [vmem:[%s10 + $0x68] sm:$0xff]
    %v2531 = vld [vmem:[%s10 + $0x70] sm:$0xff]
    %v2532 = vld [vmem:[%s10 + $0x78] sm:$0xff]
    %v2533 = vld [vmem:[%s10 + $0x80] sm:$0xff]
    %v2534 = vld [vmem:[%s10 + $0x88] sm:$0xff]
    %v2535 = vld [vmem:[%s10 + $0x90] sm:$0xff]
    %v2536 = vld [vmem:[%s10 + $0x98] sm:$0xff]
    %v2537 = vld [vmem:[%s10 + $0xa0] sm:$0xff]
    %v2538 = vld [vmem:[%s10 + $0xa8] sm:$0xff]
    %v2539 = vld [vmem:[%s10 + $0xb0] sm:$0xff]
    %v2540 = vld [vmem:[%s10 + $0xb8] sm:$0xff]
    %v2541 = vld [vmem:[%s10 + $0xc0] sm:$0xff]
    %v2542 = vld [vmem:[%s10 + $0xc8] sm:$0xff]
    %v2543 = vld [vmem:[%s10 + $0xd0] sm:$0xff]
    %v2544 = vld [vmem:[%s10 + $0xd8] sm:$0xff]
    %v2545 = vld [vmem:[%s10 + $0xe0] sm:$0xff]
    %v2546 = vld [vmem:[%s10 + $0xe8] sm:$0xff]
    %v2547 = vld [vmem:[%s10 + $0xf0] sm:$0xff]
    %v2548 = vld [vmem:[%s10 + $0xf8] sm:$0xff]
    %v2549 = vlaneseq
    %v2550 = vshrl.u32 %v2549, 7
    %v2551 = vsub.s32 1, %v2550
    %v2552 = vrot.slane %v47, %v2551
    %v2553 = vlaneseq
    %v2554 = vshrl.u32 %v2553, 7
    %v2555 = vsub.s32 5, %v2554
    %v2556 = vrot.slane %v47, %v2555
    %v2559 = vlaneseq
    %v2560 = vshrl.u32 %v2559, 7
    %v2561 = vsub.s32 1, %v2560
    %v2562 = vrot.slane %v2552, %v2561
    %v2563 = vlaneseq
    %v2564 = vshrl.u32 %v2563, 7
    %v2565 = vsub.s32 1, %v2564
    %v2566 = vrot.slane %v2556, %v2565
    %v2599 = vunpack.c.l.b16 %v2517
    %v2600 = vunpack.c.h.b16 %v2517
    %v2601 = vunpack.c.l.b16 %v2518
    %v2602 = vunpack.c.h.b16 %v2518
    %v2603 = vunpack.c.l.b16 %v2519
    %v2604 = vunpack.c.h.b16 %v2519
    %v2605 = vunpack.c.l.b16 %v2520
    %v2606 = vunpack.c.h.b16 %v2520
    %v2607 = vunpack.c.l.b16 %v2521
    %v2608 = vunpack.c.h.b16 %v2521
    %v2609 = vunpack.c.l.b16 %v2522
    %v2610 = vunpack.c.h.b16 %v2522
    %v2611 = vunpack.c.l.b16 %v2523
    %v2612 = vunpack.c.h.b16 %v2523
    %v2613 = vunpack.c.l.b16 %v2524
    %v2614 = vunpack.c.h.b16 %v2524
    %v2615 = vunpack.c.l.b16 %v2525
    %v2616 = vunpack.c.h.b16 %v2525
    %v2617 = vunpack.c.l.b16 %v2526
    %v2618 = vunpack.c.h.b16 %v2526
    %v2619 = vunpack.c.l.b16 %v2527
    %v2620 = vunpack.c.h.b16 %v2527
    %v2621 = vunpack.c.l.b16 %v2528
    %v2622 = vunpack.c.h.b16 %v2528
    %v2623 = vunpack.c.l.b16 %v2529
    %v2624 = vunpack.c.h.b16 %v2529
    %v2625 = vunpack.c.l.b16 %v2530
    %v2626 = vunpack.c.h.b16 %v2530
    %v2627 = vunpack.c.l.b16 %v2531
    %v2628 = vunpack.c.h.b16 %v2531
    %v2629 = vunpack.c.l.b16 %v2532
    %v2630 = vunpack.c.h.b16 %v2532
    %v2631 = vunpack.c.l.b16 %v2533
    %v2632 = vunpack.c.h.b16 %v2533
    %v2633 = vunpack.c.l.b16 %v2534
    %v2634 = vunpack.c.h.b16 %v2534
    %v2635 = vunpack.c.l.b16 %v2535
    %v2636 = vunpack.c.h.b16 %v2535
    %v2637 = vunpack.c.l.b16 %v2536
    %v2638 = vunpack.c.h.b16 %v2536
    %v2639 = vunpack.c.l.b16 %v2537
    %v2640 = vunpack.c.h.b16 %v2537
    %v2641 = vunpack.c.l.b16 %v2538
    %v2642 = vunpack.c.h.b16 %v2538
    %v2643 = vunpack.c.l.b16 %v2539
    %v2644 = vunpack.c.h.b16 %v2539
    %v2645 = vunpack.c.l.b16 %v2540
    %v2646 = vunpack.c.h.b16 %v2540
    %v2647 = vunpack.c.l.b16 %v2541
    %v2648 = vunpack.c.h.b16 %v2541
    %v2649 = vunpack.c.l.b16 %v2542
    %v2650 = vunpack.c.h.b16 %v2542
    %v2651 = vunpack.c.l.b16 %v2543
    %v2652 = vunpack.c.h.b16 %v2543
    %v2653 = vunpack.c.l.b16 %v2544
    %v2654 = vunpack.c.h.b16 %v2544
    %v2655 = vunpack.c.l.b16 %v2545
    %v2656 = vunpack.c.h.b16 %v2545
    %v2657 = vunpack.c.l.b16 %v2546
    %v2658 = vunpack.c.h.b16 %v2546
    %v2659 = vunpack.c.l.b16 %v2547
    %v2660 = vunpack.c.h.b16 %v2547
    %v2661 = vunpack.c.l.b16 %v2548
    %v2662 = vunpack.c.h.b16 %v2548
    %v2663 = vpack.c.b16 %v2601, %v2599
    %v2664 = vpack.c.b16 %v2602, %v2600
    %v2665 = vpack.c.b16 %v2605, %v2603
    %v2666 = vpack.c.b16 %v2606, %v2604
    %v2667 = vpack.c.b16 %v2609, %v2607
    %v2668 = vpack.c.b16 %v2610, %v2608
    %v2669 = vpack.c.b16 %v2613, %v2611
    %v2670 = vpack.c.b16 %v2614, %v2612
    %v2671 = vpack.c.b16 %v2617, %v2615
    %v2672 = vpack.c.b16 %v2618, %v2616
    %v2673 = vpack.c.b16 %v2621, %v2619
    %v2674 = vpack.c.b16 %v2622, %v2620
    %v2675 = vpack.c.b16 %v2625, %v2623
    %v2676 = vpack.c.b16 %v2626, %v2624
    %v2677 = vpack.c.b16 %v2629, %v2627
    %v2678 = vpack.c.b16 %v2630, %v2628
    %v2679 = vpack.c.b16 %v2633, %v2631
    %v2680 = vpack.c.b16 %v2634, %v2632
    %v2681 = vpack.c.b16 %v2637, %v2635
    %v2682 = vpack.c.b16 %v2638, %v2636
    %v2683 = vpack.c.b16 %v2641, %v2639
    %v2684 = vpack.c.b16 %v2642, %v2640
    %v2685 = vpack.c.b16 %v2645, %v2643
    %v2686 = vpack.c.b16 %v2646, %v2644
    %v2687 = vpack.c.b16 %v2649, %v2647
    %v2688 = vpack.c.b16 %v2650, %v2648
    %v2689 = vpack.c.b16 %v2653, %v2651
    %v2690 = vpack.c.b16 %v2654, %v2652
    %v2691 = vpack.c.b16 %v2657, %v2655
    %v2692 = vpack.c.b16 %v2658, %v2656
    %v2693 = vpack.c.b16 %v2661, %v2659
    %v2694 = vpack.c.b16 %v2662, %v2660
    %2727 = vmatprep.subr.bf16.mxu0 %v2664
    %2728 = vmatpush1.bf16.msra.mxu0 %v2663
    %2729 = vmatprep.subr.bf16.mxu0 %v2666
    %2730 = vmatpush1.bf16.msra.mxu0 %v2665
    %2731 = vmatprep.subr.bf16.mxu0 %v2668
    %2732 = vmatpush1.bf16.msra.mxu0 %v2667
    %2733 = vmatprep.subr.bf16.mxu0 %v2670
    %2734 = vmatpush1.bf16.msra.mxu0 %v2669
    %2735 = vmatprep.subr.bf16.mxu0 %v2672
    %2736 = vmatpush1.bf16.msra.mxu0 %v2671
    %2737 = vmatprep.subr.bf16.mxu0 %v2674
    %2738 = vmatpush1.bf16.msra.mxu0 %v2673
    %2739 = vmatprep.subr.bf16.mxu0 %v2676
    %2740 = vmatpush1.bf16.msra.mxu0 %v2675
    %2741 = vmatprep.subr.bf16.mxu0 %v2678
    %2742 = vmatpush1.bf16.msra.mxu0 %v2677
    %2743 = vmatprep.subr.bf16.mxu0 %v2680
    %2744 = vmatpush1.bf16.msra.mxu0 %v2679
    %2745 = vmatprep.subr.bf16.mxu0 %v2682
    %2746 = vmatpush1.bf16.msra.mxu0 %v2681
    %2747 = vmatprep.subr.bf16.mxu0 %v2684
    %2748 = vmatpush1.bf16.msra.mxu0 %v2683
    %2749 = vmatprep.subr.bf16.mxu0 %v2686
    %2750 = vmatpush1.bf16.msra.mxu0 %v2685
    %2751 = vmatprep.subr.bf16.mxu0 %v2688
    %2752 = vmatpush1.bf16.msra.mxu0 %v2687
    %2753 = vmatprep.subr.bf16.mxu0 %v2690
    %2754 = vmatpush1.bf16.msra.mxu0 %v2689
    %2755 = vmatprep.subr.bf16.mxu0 %v2692
    %2756 = vmatpush1.bf16.msra.mxu0 %v2691
    %2757 = vmatprep.subr.bf16.mxu0 %v2694
    %2758 = vmatpush1.bf16.msra.mxu0 %v2693
    %2759 = vmatprep.mubr.f32.mxu0 %v2516
    %2760 = vmatmul.mubr.f32.gmra.mrb[0].mxu0 %v2515
    %v2761 = vpop.f32.mrb[0].mxu0
    %v2762 = vadd.f32 %v2562, %v2761
    %v2763 = vpop.f32.mrb[0].mxu0
    %v2764 = vadd.f32 %v2566, %v2763
    %2765 = vdwg.mxu0
    %v2766 = vmax.f32 %v2762, 0.0
    %v2767 = vmax.f32 %v2764, 0.0
    %v2768 = vld [vmem:[%s11] sm:$0xf]
    %v2769 = vld [vmem:[%s11 + $0x4] sm:$0xf]
    %v2770 = vld [vmem:[%s11 + $0x8] sm:$0xf]
    %v2771 = vld [vmem:[%s11 + $0xc] sm:$0xf]
    %v2772 = vld [vmem:[%s11 + $0x10] sm:$0xf]
    %v2773 = vld [vmem:[%s11 + $0x14] sm:$0xf]
    %v2774 = vld [vmem:[%s11 + $0x18] sm:$0xf]
    %v2775 = vld [vmem:[%s11 + $0x1c] sm:$0xf]
    %v2776 = vld [vmem:[%s11 + $0x20] sm:$0xf]
    %v2777 = vld [vmem:[%s11 + $0x24] sm:$0xf]
    %v2778 = vld [vmem:[%s11 + $0x28] sm:$0xf]
    %v2779 = vld [vmem:[%s11 + $0x2c] sm:$0xf]
    %v2780 = vld [vmem:[%s11 + $0x30] sm:$0xf]
    %v2781 = vld [vmem:[%s11 + $0x34] sm:$0xf]
    %v2782 = vld [vmem:[%s11 + $0x38] sm:$0xf]
    %v2783 = vld [vmem:[%s11 + $0x3c] sm:$0xf]
    %v2784 = vld [vmem:[%s11 + $0x40] sm:$0xf]
    %v2785 = vld [vmem:[%s11 + $0x44] sm:$0xf]
    %v2786 = vld [vmem:[%s11 + $0x48] sm:$0xf]
    %v2787 = vld [vmem:[%s11 + $0x4c] sm:$0xf]
    %v2788 = vld [vmem:[%s11 + $0x50] sm:$0xf]
    %v2789 = vld [vmem:[%s11 + $0x54] sm:$0xf]
    %v2790 = vld [vmem:[%s11 + $0x58] sm:$0xf]
    %v2791 = vld [vmem:[%s11 + $0x5c] sm:$0xf]
    %v2792 = vld [vmem:[%s11 + $0x60] sm:$0xf]
    %v2793 = vld [vmem:[%s11 + $0x64] sm:$0xf]
    %v2794 = vld [vmem:[%s11 + $0x68] sm:$0xf]
    %v2795 = vld [vmem:[%s11 + $0x6c] sm:$0xf]
    %v2796 = vld [vmem:[%s11 + $0x70] sm:$0xf]
    %v2797 = vld [vmem:[%s11 + $0x74] sm:$0xf]
    %v2798 = vld [vmem:[%s11 + $0x78] sm:$0xf]
    %v2799 = vld [vmem:[%s11 + $0x7c] sm:$0xf]
    %v2800 = vlaneseq
    %v2801 = vshrl.u32 %v2800, 7
    %v2802 = vsub.s32 2, %v2801
    %v2803 = vrot.slane %v47, %v2802
    %v2836 = vunpack.c.l.b16 %v2768
    %v2837 = vunpack.c.l.b16 %v2769
    %v2838 = vunpack.c.l.b16 %v2770
    %v2839 = vunpack.c.l.b16 %v2771
    %v2840 = vunpack.c.l.b16 %v2772
    %v2841 = vunpack.c.l.b16 %v2773
    %v2842 = vunpack.c.l.b16 %v2774
    %v2843 = vunpack.c.l.b16 %v2775
    %v2844 = vunpack.c.l.b16 %v2776
    %v2845 = vunpack.c.l.b16 %v2777
    %v2846 = vunpack.c.l.b16 %v2778
    %v2847 = vunpack.c.l.b16 %v2779
    %v2848 = vunpack.c.l.b16 %v2780
    %v2849 = vunpack.c.l.b16 %v2781
    %v2850 = vunpack.c.l.b16 %v2782
    %v2851 = vunpack.c.l.b16 %v2783
    %v2852 = vunpack.c.l.b16 %v2784
    %v2853 = vunpack.c.l.b16 %v2785
    %v2854 = vunpack.c.l.b16 %v2786
    %v2855 = vunpack.c.l.b16 %v2787
    %v2856 = vunpack.c.l.b16 %v2788
    %v2857 = vunpack.c.l.b16 %v2789
    %v2858 = vunpack.c.l.b16 %v2790
    %v2859 = vunpack.c.l.b16 %v2791
    %v2860 = vunpack.c.l.b16 %v2792
    %v2861 = vunpack.c.l.b16 %v2793
    %v2862 = vunpack.c.l.b16 %v2794
    %v2863 = vunpack.c.l.b16 %v2795
    %v2864 = vunpack.c.l.b16 %v2796
    %v2865 = vunpack.c.l.b16 %v2797
    %v2866 = vunpack.c.l.b16 %v2798
    %v2867 = vunpack.c.l.b16 %v2799
    %v2868 = vpack.c.b16 %v2837, %v2836
    %v2869 = vpack.c.b16 %v2839, %v2838
    %v2870 = vpack.c.b16 %v2841, %v2840
    %v2871 = vpack.c.b16 %v2843, %v2842
    %v2872 = vpack.c.b16 %v2845, %v2844
    %v2873 = vpack.c.b16 %v2847, %v2846
    %v2874 = vpack.c.b16 %v2849, %v2848
    %v2875 = vpack.c.b16 %v2851, %v2850
    %v2876 = vpack.c.b16 %v2853, %v2852
    %v2877 = vpack.c.b16 %v2855, %v2854
    %v2878 = vpack.c.b16 %v2857, %v2856
    %v2879 = vpack.c.b16 %v2859, %v2858
    %v2880 = vpack.c.b16 %v2861, %v2860
    %v2881 = vpack.c.b16 %v2863, %v2862
    %v2882 = vpack.c.b16 %v2865, %v2864
    %v2883 = vpack.c.b16 %v2867, %v2866
    %2900 = vmatprep.subr.bf16.mxu0 0
    %2901 = vmatpush1.bf16.msra.mxu0 %v2868
    %2902 = vmatprep.subr.bf16.mxu0 0
    %2903 = vmatpush1.bf16.msra.mxu0 %v2869
    %2904 = vmatprep.subr.bf16.mxu0 0
    %2905 = vmatpush1.bf16.msra.mxu0 %v2870
    %2906 = vmatprep.subr.bf16.mxu0 0
    %2907 = vmatpush1.bf16.msra.mxu0 %v2871
    %2908 = vmatprep.subr.bf16.mxu0 0
    %2909 = vmatpush1.bf16.msra.mxu0 %v2872
    %2910 = vmatprep.subr.bf16.mxu0 0
    %2911 = vmatpush1.bf16.msra.mxu0 %v2873
    %2912 = vmatprep.subr.bf16.mxu0 0
    %2913 = vmatpush1.bf16.msra.mxu0 %v2874
    %2914 = vmatprep.subr.bf16.mxu0 0
    %2915 = vmatpush1.bf16.msra.mxu0 %v2875
    %2916 = vmatprep.subr.bf16.mxu0 0
    %2917 = vmatpush1.bf16.msra.mxu0 %v2876
    %2918 = vmatprep.subr.bf16.mxu0 0
    %2919 = vmatpush1.bf16.msra.mxu0 %v2877
    %2920 = vmatprep.subr.bf16.mxu0 0
    %2921 = vmatpush1.bf16.msra.mxu0 %v2878
    %2922 = vmatprep.subr.bf16.mxu0 0
    %2923 = vmatpush1.bf16.msra.mxu0 %v2879
    %2924 = vmatprep.subr.bf16.mxu0 0
    %2925 = vmatpush1.bf16.msra.mxu0 %v2880
    %2926 = vmatprep.subr.bf16.mxu0 0
    %2927 = vmatpush1.bf16.msra.mxu0 %v2881
    %2928 = vmatprep.subr.bf16.mxu0 0
    %2929 = vmatpush1.bf16.msra.mxu0 %v2882
    %2930 = vmatprep.subr.bf16.mxu0 0
    %2931 = vmatpush1.bf16.msra.mxu0 %v2883
    %2932 = vmatprep.mubr.f32.mxu0 %v2767
    %2933 = vmatmul.mubr.f32.gmra.mrb[0].mxu0 %v2766
    %v2934 = vpop.f32.mrb[0].mxu0
    %v2935 = vadd.f32 %v2803, %v2934
    %v2936 = vpop.f32.mrb[0].mxu0
    %2937 = vdwg.mxu0
    %2938 = vst [vmem:[#allocation2] sm:$0x3] %v2935
    // Predicated region
    $region54: #{critic_cnn_forward.1} parent=1 // pred_check
      _
    $region55: #{critic_cnn_forward.1} parent=1 // pred_check_branch
      %2940 = sbr.rel (0) target = $region57
    $region56: #{critic_cnn_forward.1} parent=1 // pred_region
      %s2942 = ssub.s32 32, 32
      %2943 = vsyncadd [#allocation3], %s2942
      %s2945 = sshll.u32 [#allocation2], 4
      %s2946 = int_to_ptr.vmem [resolvable:$true] %s2945
      %2948 = dma.vmem_to_hbm [thread:$0]  %s2946, 32, %s13, [#allocation3]
    $region57: #{critic_cnn_forward.1} parent=1 // pred_fallthru
      _
    // Predicated region
    $region58: #{critic_cnn_forward.1} parent=1 // pred_check
      _
    $region59: #{critic_cnn_forward.1} parent=1 // pred_check_branch
      %2950 = sbr.rel (0) target = $region61
    $region60: #{critic_cnn_forward.1} parent=1 // pred_region
      %2951 = dma.done [#allocation3], 32
    $region61: #{critic_cnn_forward.1} parent=1 // pred_fallthru
      _
    %2952 = vsyncpa [#allocation3], 1

</llo_original>
